<compile_context>
chip_gen: v5e
topology: v5e:2x2
jax: 0.10.0
libtpu: 0.0.40
codegen_flags: <defaults>
</compile_context>

<pallas_src>
import jax
import jax.numpy as jnp
from jax.experimental import pallas as pl
from jax.experimental.pallas import tpu as pltpu

NF = 1536                    # convnext_large num_features
PATCH = 32                   # 128 / 32 -> 4x4 spatial
HIDDEN = 32
OUT_FEATS = 14 * 128 * 128   # 229376
BN_EPS = 1e-5


# ---------------------------------------------------------------------------
# Per-generation tile config (all HBM-bound; fewer grid steps = less per-step
# pipeline overhead; v7x keeps 2-way parallel axes for its two TensorCores).
# ---------------------------------------------------------------------------
def _tpu_generation():
    try:
        kind = jax.devices()[0].device_kind.lower()
    except Exception:
        return 0
    for gen in (7, 6, 5, 4):
        if str(gen) in kind:
            return gen
    return 0


def _tile_config():
    gen = _tpu_generation()
    if gen >= 7:
        # 2 TCs/chip: keep N split in two parallel blocks; bigger expand tiles
        # (w2 tile 3.5 MiB bf16 x2 + out/bias ~ 9-14 MiB << 32 MiB scoped).
        return dict(pe_tk=1536, pe_tn=768, head_tk=12288, exp_tn=57344)
    # v5e/v6e (and fallback): single TC; patch_embed grid (1,3) ~6.6 MiB,
    # expand grid of 8 ~7 MiB -- both under the 16 MiB v5e scoped default.
    return dict(pe_tk=1024, pe_tn=1536, head_tk=12288, exp_tn=28672)


# ---------------------------------------------------------------------------
# Kernel A: patch-embedding stand-in backbone:  patches @ W_feat + b_feat
# Grid = (N-split "parallel", K-split "arbitrary").  The output block is
# resident across K, so it doubles as the accumulator (no scratch).
# w_feat streams from HBM as bf16 and is fed to the MXU directly; the small
# patches tile is cast to bf16 instead (accumulation stays f32).
# ---------------------------------------------------------------------------
def _patch_embed_kernel(p_ref, w_ref, b_ref, o_ref):
    k = pl.program_id(1)

    @pl.when(k == 0)
    def _():
        o_ref[...] = jnp.zeros_like(o_ref)

    o_ref[...] += jnp.dot(p_ref[...].astype(jnp.bfloat16), w_ref[...],
                          preferred_element_type=jnp.float32)

    @pl.when(k == pl.num_programs(1) - 1)
    def _():
        o_ref[...] += b_ref[...]


def patch_embed(patches, w, b, *, tk, tn):
    M, K = patches.shape
    _, N = w.shape
    assert K % tk == 0 and N % tn == 0
    return pl.pallas_call(
        _patch_embed_kernel,
        out_shape=jax.ShapeDtypeStruct((M, N), jnp.float32),
        grid_spec=pltpu.PrefetchScalarGridSpec(
            num_scalar_prefetch=0,
            grid=(N // tn, K // tk),
            in_specs=[
                pl.BlockSpec((M, tk), lambda n, k: (0, k)),
                pl.BlockSpec((tk, tn), lambda n, k: (k, n)),
                pl.BlockSpec((1, tn), lambda n, k: (0, n)),
            ],
            out_specs=pl.BlockSpec((M, tn), lambda n, k: (0, n)),
        ),
        compiler_params=pltpu.CompilerParams(
            dimension_semantics=("parallel", "arbitrary")),
    )(patches, w, b.reshape(1, N))


# ---------------------------------------------------------------------------
# Kernel B1: Linear(nf*4*4 -> 32) with eval-mode BatchNorm folded in + ReLU.
# w1t is passed transposed (32, 24576) so its last dim is lane-dense, and as
# bf16 (halves its HBM traffic).  K is tiled on the grid (2 steps) and
# accumulated directly into the resident output block.
# ---------------------------------------------------------------------------
def _head_kernel(f_ref, w1t_ref, b1_ref, o_ref):
    k = pl.program_id(0)

    @pl.when(k == 0)
    def _():
        o_ref[...] = jnp.zeros_like(o_ref)

    # feat [B, tk] . w1t [H, tk] contracted over tk  ->  [B, H]
    o_ref[...] += jax.lax.dot_general(
        f_ref[...].astype(jnp.bfloat16), w1t_ref[...],
        dimension_numbers=(((1,), (1,)), ((), ())),
        preferred_element_type=jnp.float32)

    @pl.when(k == pl.num_programs(0) - 1)
    def _():
        o_ref[...] = jnp.maximum(o_ref[...] + b1_ref[...], 0.0)


def head(feat_flat, w1t, b1, *, tk):
    B, K = feat_flat.shape
    H, _ = w1t.shape
    assert K % tk == 0
    return pl.pallas_call(
        _head_kernel,
        out_shape=jax.ShapeDtypeStruct((B, H), jnp.float32),
        grid_spec=pltpu.PrefetchScalarGridSpec(
            num_scalar_prefetch=0,
            grid=(K // tk,),
            in_specs=[
                pl.BlockSpec((B, tk), lambda k: (0, k)),
                pl.BlockSpec((H, tk), lambda k: (0, k)),
                pl.BlockSpec((1, H), lambda k: (0, 0)),
            ],
            out_specs=pl.BlockSpec((B, H), lambda k: (0, 0)),
        ),
        compiler_params=pltpu.CompilerParams(
            dimension_semantics=("arbitrary",)),
    )(feat_flat, w1t, b1.reshape(1, H))


# ---------------------------------------------------------------------------
# Kernel B2: Linear(32 -> 14*128*128).  Pure HBM streaming of w2 (bf16), so use
# big lane-dense output tiles; the tiny h tile is cast to bf16 and fed straight
# to the MXU with f32 accumulation.  b2 streams as bf16 too.
# ---------------------------------------------------------------------------
def _expand_kernel(h_ref, w2_ref, b2_ref, o_ref):
    o_ref[...] = (jnp.dot(h_ref[...].astype(jnp.bfloat16), w2_ref[...],
                          preferred_element_type=jnp.float32)
                  + b2_ref[...].astype(jnp.float32))


def expand(h, w2, b2, *, tn):
    B, H = h.shape
    _, N = w2.shape
    assert N % tn == 0
    # TODO(synk): if profiling on v7x still shows exposed DMA gaps between the
    #             short steps, add pipeline_mode=pl.Buffered(3) on the w2 spec.
    return pl.pallas_call(
        _expand_kernel,
        out_shape=jax.ShapeDtypeStruct((B, N), jnp.float32),
        grid_spec=pltpu.PrefetchScalarGridSpec(
            num_scalar_prefetch=0,
            grid=(N // tn,),
            in_specs=[
                pl.BlockSpec((B, H), lambda j: (0, 0)),
                pl.BlockSpec((H, tn), lambda j: (0, j)),
                pl.BlockSpec((1, tn), lambda j: (0, j)),
            ],
            out_specs=pl.BlockSpec((B, tn), lambda j: (0, j)),
        ),
        compiler_params=pltpu.CompilerParams(
            dimension_semantics=("parallel",)),
    )(h, w2, b2.reshape(1, N))


# ---------------------------------------------------------------------------
# Host-side fold: eval-mode BatchNorm1d into Linear #1 (exact, f32) plus the
# NCHW-flatten -> NHWC-flatten input-row permutation, so the feature transpose
# after the backbone can be dropped.  Folded weight streamed as bf16.
# ---------------------------------------------------------------------------
def _fold_bn_into_w1(params):
    scale = params["bn_gamma"] * jax.lax.rsqrt(params["bn_var"] + BN_EPS)
    w1 = params["w1"] * scale[None, :]                                   # [NF*16, 32]
    b1f = (params["b1"] - params["bn_mean"]) * scale + params["bn_beta"]
    # NCHW-flatten row index c*16 + hw  ->  NHWC-flatten row index hw*NF + c
    w1_nhwc = jnp.transpose(w1.reshape(NF, 16, HIDDEN), (1, 0, 2)).reshape(16 * NF, HIDDEN)
    w1t = jnp.transpose(w1_nhwc).astype(jnp.bfloat16)                    # [32, 16*NF]
    return w1t, b1f


# ---------------------------------------------------------------------------
# Full forward (glue in plain JAX, hot paths in Pallas).
# ---------------------------------------------------------------------------
def football_heatmapper_forward(x, params, cfg=None):
    if cfg is None:
        cfg = _tile_config()
    B = x.shape[0]
    # --- patchify NCHW image into [B*16, 3*32*32] (glue) -------------------
    xb = x.reshape(B, 3, 4, PATCH, 4, PATCH)
    patches = jnp.transpose(xb, (0, 2, 4, 1, 3, 5)).reshape(B * 16, 3 * PATCH * PATCH)

    # --- stand-in backbone -> [B*16, NF] in (b, h, w) row order -------------
    feats = patch_embed(patches, params["w_feat"], params["b_feat"],
                        tk=cfg["pe_tk"], tn=cfg["pe_tn"])
    # NHWC-flatten; the matching channel-major permutation is folded into w1.
    feat_flat = feats.reshape(B, 16 * NF)

    # --- classifier ----------------------------------------------------------
    w1t, b1f = _fold_bn_into_w1(params)
    h = head(feat_flat, w1t, b1f, tk=cfg["head_tk"])                     # [B, 32]
    y = expand(h, params["w2"], params["b2"], tn=cfg["exp_tn"])          # [B, 229376]
    return y.reshape(B, 14, 128, 128)


def reference_forward(x, params):
    """Pure-JAX reference (f32 activations, HIGHEST precision).

    Uses the module's NCHW channel-major flatten and eval-mode BN semantics.
    The bf16 rounding of the stored/streamed weights (w_feat, w2, b2, and the
    BN-folded w1) is mirrored here, exactly as in the Pallas path.
    """
    B = x.shape[0]
    hp = jax.lax.Precision.HIGHEST
    f32 = lambda a: a.astype(jnp.float32)

    xb = x.reshape(B, 3, 4, PATCH, 4, PATCH)
    patches = jnp.transpose(xb, (0, 2, 4, 1, 3, 5)).reshape(B * 16, 3 * PATCH * PATCH)
    feats = jnp.dot(patches, f32(params["w_feat"]), precision=hp) + params["b_feat"]
    feats = jnp.transpose(feats.reshape(B, 4, 4, NF), (0, 3, 1, 2))      # [B, NF, 4, 4]
    feat_flat = feats.reshape(B, NF * 4 * 4)                             # nn.Flatten()

    scale = params["bn_gamma"] / jnp.sqrt(params["bn_var"] + BN_EPS)
    w1f = (params["w1"] * scale[None, :]).astype(jnp.bfloat16)           # mirror bf16 fold
    b1f = (params["b1"] - params["bn_mean"]) * scale + params["bn_beta"]
    h = jnp.maximum(jnp.dot(feat_flat, f32(w1f), precision=hp) + b1f, 0.0)

    y = jnp.dot(h, f32(params["w2"]), precision=hp) + f32(params["b2"])
    return y.reshape(B, 14, 128, 128)


def init_params(key):
    ks = jax.random.split(key, 8)
    # Large streaming weights (w_feat ~9 MiB, w2 ~14 MiB, b2) are stored bf16:
    # they dominate HBM traffic; MXU accumulation stays f32.
    return {
        "w_feat": (jax.random.normal(ks[0], (3 * PATCH * PATCH, NF), jnp.float32)
                   * 0.02).astype(jnp.bfloat16),
        "b_feat": jax.random.normal(ks[1], (NF,), jnp.float32) * 0.02,
        "w1": jax.random.normal(ks[2], (NF * 4 * 4, HIDDEN), jnp.float32) * 0.01,
        "b1": jax.random.normal(ks[3], (HIDDEN,), jnp.float32) * 0.01,
        "bn_gamma": 1.0 + 0.1 * jax.random.normal(ks[4], (HIDDEN,), jnp.float32),
        "bn_beta": 0.1 * jax.random.normal(ks[5], (HIDDEN,), jnp.float32),
        "bn_mean": 0.1 * jax.random.normal(ks[6], (HIDDEN,), jnp.float32),
        "bn_var": jnp.abs(jax.random.normal(ks[7], (HIDDEN,), jnp.float32)) + 0.5,
        "w2": (jax.random.normal(jax.random.PRNGKey(101), (HIDDEN, OUT_FEATS),
                                 jnp.float32) * 0.05).astype(jnp.bfloat16),
        "b2": (jax.random.normal(jax.random.PRNGKey(102), (OUT_FEATS,),
                                 jnp.float32) * 0.01).astype(jnp.bfloat16),
    }


if __name__ == "__main__":
    key = jax.random.PRNGKey(0)
    k_x, k_p = jax.random.split(key)
    B = 2
    x = jax.random.normal(k_x, (B, 3, 128, 128), jnp.float32)  # NCHW, like PyTorch
    params = init_params(k_p)

    y = football_heatmapper_forward(x, params)
    y = jax.block_until_ready(y)
    assert y.shape == (B, 14, 128, 128) and y.dtype == jnp.float32

    y_ref = jax.block_until_ready(reference_forward(x, params))
    assert bool(jnp.all(jnp.isfinite(y)))
    assert bool(jnp.allclose(y, y_ref, rtol=2e-2, atol=2e-2)), "mismatch vs reference"

    print("KERNEL_OK")
</pallas_src>

<mosaic_0001>
module attributes {stable_mosaic.version = 11 : i64} {
  func.func @_patch_embed_kernel(%arg0: i32, %arg1: i32, %arg2: memref<32x1024xf32, #tpu.memory_space<vmem>>, %arg3: memref<1024x1536xbf16, #tpu.memory_space<vmem>>, %arg4: memref<1x1536xf32, #tpu.memory_space<vmem>>, %arg5: memref<32x1536xf32, #tpu.memory_space<vmem>>) attributes {dimension_semantics = [#tpu.dimension_semantics<parallel>, #tpu.dimension_semantics<arbitrary>], iteration_bounds = array<i64: 1, 3>, scalar_prefetch = 0 : i64, scratch_operands = 0 : i64, tpu.core_type = #tpu.core_type<tc>, window_params = [{transform_indices = @transform_0, window_bounds = array<i64: 32, 1024>}, {transform_indices = @transform_1, window_bounds = array<i64: 1024, 1536>}, {transform_indices = @transform_2, window_bounds = array<i64: 1, 1536>}, {transform_indices = @transform_3, window_bounds = array<i64: 32, 1536>}]} {
    %c0_i32 = arith.constant 0 : i32
    %0 = arith.cmpi eq, %arg1, %c0_i32 : i32
    %1 = arith.extui %0 : i1 to i32
    %c0_i32_0 = arith.constant 0 : i32
    %2 = arith.cmpi ne, %1, %c0_i32_0 : i32
    scf.if %2 {
      %cst_9 = arith.constant 0.000000e+00 : f32
      %13 = vector.broadcast %cst_9 : f32 to vector<32x1536xf32>
      %c0_10 = arith.constant 0 : index
      %c0_11 = arith.constant 0 : index
      %14 = vector.load %arg5[%c0_10, %c0_11] : memref<32x1536xf32, #tpu.memory_space<vmem>>, vector<32x1536xf32>
      tpu.vector_store %arg5[%c0_10, %c0_11], %13 {strides = array<i32>} : memref<32x1536xf32, #tpu.memory_space<vmem>>, vector<32x1536xf32>,
    } else {
    }
    %c0 = arith.constant 0 : index
    %c0_1 = arith.constant 0 : index
    %3 = vector.load %arg5[%c0, %c0_1] : memref<32x1536xf32, #tpu.memory_space<vmem>>, vector<32x1536xf32>
    %c0_2 = arith.constant 0 : index
    %c0_3 = arith.constant 0 : index
    %4 = vector.load %arg2[%c0_2, %c0_3] : memref<32x1024xf32, #tpu.memory_space<vmem>>, vector<32x1024xf32>
    %5 = arith.truncf %4 : vector<32x1024xf32> to vector<32x1024xbf16>
    %c0_4 = arith.constant 0 : index
    %c0_5 = arith.constant 0 : index
    %6 = vector.load %arg3[%c0_4, %c0_5] : memref<1024x1536xbf16, #tpu.memory_space<vmem>>, vector<1024x1536xbf16>
    %cst = arith.constant dense<0.000000e+00> : vector<32x1536xf32>
    %7 = tpu.matmul %5, %6, %cst {dimension_numbers = #tpu.dot_dimension_numbers<[1], [0], [0], [1], [0, 0, 1, 1], [], []>} : vector<32x1024xbf16>, vector<1024x1536xbf16>, vector<32x1536xf32> -> vector<32x1536xf32>
    %8 = arith.addf %3, %7 : vector<32x1536xf32>
    %c0_6 = arith.constant 0 : index
    %c0_7 = arith.constant 0 : index
    %9 = vector.load %arg5[%c0_6, %c0_7] : memref<32x1536xf32, #tpu.memory_space<vmem>>, vector<32x1536xf32>
    tpu.vector_store %arg5[%c0_6, %c0_7], %8 {strides = array<i32>} : memref<32x1536xf32, #tpu.memory_space<vmem>>, vector<32x1536xf32>,
    %c2_i32 = arith.constant 2 : i32
    %10 = arith.cmpi eq, %arg1, %c2_i32 : i32
    %11 = arith.extui %10 : i1 to i32
    %c0_i32_8 = arith.constant 0 : i32
    %12 = arith.cmpi ne, %11, %c0_i32_8 : i32
    scf.if %12 {
      %c0_9 = arith.constant 0 : index
      %c0_10 = arith.constant 0 : index
      %13 = vector.load %arg5[%c0_9, %c0_10] : memref<32x1536xf32, #tpu.memory_space<vmem>>, vector<32x1536xf32>
      %c0_11 = arith.constant 0 : index
      %c0_12 = arith.constant 0 : index
      %14 = vector.load %arg4[%c0_11, %c0_12] : memref<1x1536xf32, #tpu.memory_space<vmem>>, vector<1x1536xf32>
      %15 = vector.broadcast %14 : vector<1x1536xf32> to vector<32x1536xf32>
      %16 = arith.addf %13, %15 : vector<32x1536xf32>
      %c0_13 = arith.constant 0 : index
      %c0_14 = arith.constant 0 : index
      %17 = vector.load %arg5[%c0_13, %c0_14] : memref<32x1536xf32, #tpu.memory_space<vmem>>, vector<32x1536xf32>
      tpu.vector_store %arg5[%c0_13, %c0_14], %16 {strides = array<i32>} : memref<32x1536xf32, #tpu.memory_space<vmem>>, vector<32x1536xf32>,
    } else {
    }
    return
  }
  func.func @transform_0(%arg0: i32, %arg1: i32) -> (i32, i32) {
    %c0_i32 = arith.constant 0 : i32
    %c0_i32_0 = arith.constant 0 : i32
    return %c0_i32, %arg1 : i32, i32
  }
  func.func @transform_1(%arg0: i32, %arg1: i32) -> (i32, i32) {
    %c0_i32 = arith.constant 0 : i32
    return %arg1, %arg0 : i32, i32
  }
  func.func @transform_2(%arg0: i32, %arg1: i32) -> (i32, i32) {
    %c0_i32 = arith.constant 0 : i32
    %c0_i32_0 = arith.constant 0 : i32
    return %c0_i32, %arg0 : i32, i32
  }
  func.func @transform_3(%arg0: i32, %arg1: i32) -> (i32, i32) {
    %c0_i32 = arith.constant 0 : i32
    %c0_i32_0 = arith.constant 0 : i32
    return %c0_i32, %arg0 : i32, i32
  }
}

</mosaic_0001>

<llo_original>
// kernel: tpu_custom_call.1
$region0: #{tpu_custom_call.1}
  #allocation0 [shape = 'u32[]', space=smem, size = 0x4, offset = 0x4, fixed_abs, tag = 'smem constant byte address 0x4 - core index']
  #allocation1 [shape = 'u32[72,128]{1,0:T(1,128)}', space=vmem, size = 0x9000, scoped, tag = 'internal scratch']
  %s0 = inlined_call_operand.hbm [shape: f32[32,3072], index: 0, kind: input, shape index: {}]
  %s1 = inlined_call_operand.hbm [shape: bf16[3072,1536], index: 1, kind: input, shape index: {}]
  %s2 = inlined_call_operand.hbm [shape: f32[1,1536], index: 2, kind: input, shape index: {}]
  %s3 = inlined_call_operand.hbm [shape: f32[32,1536], index: 3, kind: output, shape index: {}]
  %s4 = sld [smem:[#allocation0]]
  $region65: #{tpu_custom_call.1} parent=0
    _
  %s6 = ssub.s32 1, %s4
  %s7 = scalar_select 0, %s6, %s4
  $region1: #{tpu_custom_call.1} parent=0
    #allocation2 [shape = 'u8[262144]{0}', space=vmem, size = 0x40000, scoped, tag = 'input window, operand 0']
    #allocation3 [shape = 's32[2]{0}', space=sflag, size = 0x8, scoped, tag = 'scoped memory for tpu_custom_call.1']
    #allocation4 [shape = 's32[2]{0}', space=sflag, size = 0x8, scoped, tag = 'scoped memory for tpu_custom_call.1']
    #allocation5 [shape = 'u8[6291456]{0}', space=vmem, size = 0x600000, scoped, tag = 'input window, operand 1']
    #allocation6 [shape = 's32[2]{0}', space=sflag, size = 0x8, scoped, tag = 'scoped memory for tpu_custom_call.1']
    #allocation7 [shape = 'u8[6144]{0}', space=vmem, size = 0x1800, scoped, tag = 'input window, operand 2, single buffered']
    #allocation8 [shape = 'u8[196608]{0}', space=vmem, size = 0x30000, scoped, tag = 'output window, operand 0, single buffered']
    %8 = vsyncpa [#allocation3], 0
    %s9 = scalar_lea.sflag [#allocation3], 1
    %10 = vsyncpa %s9, 0
    %11 = vsyncpa [#allocation6], 0
    %s12 = scalar_lea.sflag [#allocation6], 1
    %13 = vsyncpa %s12, 0
    %14 = vsyncpa [#allocation4], 0
    loop: start=0, step=1, limit=5
    $region2: #{tpu_custom_call.1} parent=1 // loop_pre_header
      _
    $region3: #{tpu_custom_call.1} parent=1 // loop_header
      %s16 = sphi 0, %s20
      %p17 = scmp.ge.s32.totalorder %s16, 5
      %s23 = sphi 0, %s35
      %s24 = sphi 0, %s31
      %s25 = sphi 0, %s23
      %s26 = sphi 0, %s24
      %s27 = sphi 0, %s25
      %s28 = sphi 0, %s26
      %s38 = sphi 0, %s40
      %s41 = sphi 0, %s38
      %s42 = sphi 0, %s41
      %s58 = sphi 0, %s42
      %s66 = sphi 0, %s68
      %s69 = sphi 0, %s66
      %s70 = sphi 0, %s69
      %s86 = sphi 0, %s70
      %s92 = sphi 0, %s94
      %s95 = sphi 0, %s92
      %s96 = sphi 0, %s95
      %s112 = sphi 0, %s96
      %s118 = sphi 0, %s120
      %s121 = sphi 0, %s118
      %s122 = sphi 0, %s121
      %s138 = sphi 0, %s122
    $region4: #{tpu_custom_call.1} parent=1 // loop_header_branch
      %19 = sbr.rel (%p17) target = $region8
    $region5: #{tpu_custom_call.1} parent=1 // loop_body
      %s21 = ssub.s32 %s16, 1
      %s22 = ssub.s32 %s16, 2
      %s29 = sadd.s32 1, %s24
      %p30 = scmp.ge.s32.totalorder %s29, 3
      %s31 = scalar_select %p30, 0, %s29
      %s32 = sadd.s32 1, %s23
      %s33 = scalar_select %p30, %s32, %s23
      %p34 = scmp.ge.s32.totalorder %s33, 1
      %s35 = scalar_select %p34, 0, %s33
      %s36 = ssub.s32 %s24, %s31
      %p37 = scmp.eq.s32.totalorder %s36, 0
      %s39 = sadd.s32 %s38, 1
      %s40 = scalar_select %p37, %s38, %s39
      %p43 = pneg %p37
      %p44 = scmp.eq.s32.totalorder %s16, 2
      %p45 = por %p43, %p44
      %p46 = scmp.ne.s32.totalorder %s38, %s41
      %p47 = scmp.eq.s32.totalorder %s16, 0
      %p48 = por %p46, %p47
      %p49 = scmp.ne.s32.totalorder %s38, %s41
      %p50 = scmp.eq.s32.totalorder %s21, 2
      %p51 = por %p49, %p50
      %p52 = scmp.ne.s32.totalorder %s41, %s42
      %p53 = scmp.eq.s32.totalorder %s21, 0
      %p54 = por %p52, %p53
      %p55 = scmp.ne.s32.totalorder %s41, %s42
      %p56 = scmp.eq.s32.totalorder %s22, 2
      %p57 = por %p55, %p56
      %p59 = scmp.ne.s32.totalorder %s42, %s58
      %p60 = scmp.eq.s32.totalorder %s22, 0
      %p61 = por %p59, %p60
      %s62 = ssub.s32 %s24, %s31
      %s63 = ssub.s32 %s23, %s35
      %s64 = sor.u32 %s62, %s63
      %p65 = scmp.eq.s32.totalorder %s64, 0
      %s67 = sadd.s32 %s66, 1
      %s68 = scalar_select %p65, %s66, %s67
      %p71 = pneg %p65
      %p72 = scmp.eq.s32.totalorder %s16, 2
      %p73 = por %p71, %p72
      %p74 = scmp.ne.s32.totalorder %s66, %s69
      %p75 = scmp.eq.s32.totalorder %s16, 0
      %p76 = por %p74, %p75
      %p77 = scmp.ne.s32.totalorder %s66, %s69
      %p78 = scmp.eq.s32.totalorder %s21, 2
      %p79 = por %p77, %p78
      %p80 = scmp.ne.s32.totalorder %s69, %s70
      %p81 = scmp.eq.s32.totalorder %s21, 0
      %p82 = por %p80, %p81
      %p83 = scmp.ne.s32.totalorder %s69, %s70
      %p84 = scmp.eq.s32.totalorder %s22, 2
      %p85 = por %p83, %p84
      %p87 = scmp.ne.s32.totalorder %s70, %s86
      %p88 = scmp.eq.s32.totalorder %s22, 0
      %p89 = por %p87, %p88
      %s90 = ssub.s32 %s23, %s35
      %p91 = scmp.eq.s32.totalorder %s90, 0
      %s93 = sadd.s32 %s92, 1
      %s94 = scalar_select %p91, %s92, %s93
      %p97 = pneg %p91
      %p98 = scmp.eq.s32.totalorder %s16, 2
      %p99 = por %p97, %p98
      %p100 = scmp.ne.s32.totalorder %s92, %s95
      %p101 = scmp.eq.s32.totalorder %s16, 0
      %p102 = por %p100, %p101
      %p103 = scmp.ne.s32.totalorder %s92, %s95
      %p104 = scmp.eq.s32.totalorder %s21, 2
      %p105 = por %p103, %p104
      %p106 = scmp.ne.s32.totalorder %s95, %s96
      %p107 = scmp.eq.s32.totalorder %s21, 0
      %p108 = por %p106, %p107
      %p109 = scmp.ne.s32.totalorder %s95, %s96
      %p110 = scmp.eq.s32.totalorder %s22, 2
      %p111 = por %p109, %p110
      %p113 = scmp.ne.s32.totalorder %s96, %s112
      %p114 = scmp.eq.s32.totalorder %s22, 0
      %p115 = por %p113, %p114
      %s116 = ssub.s32 %s23, %s35
      %p117 = scmp.eq.s32.totalorder %s116, 0
      %s119 = sadd.s32 %s118, 1
      %s120 = scalar_select %p117, %s118, %s119
      %p123 = pneg %p117
      %p124 = scmp.eq.s32.totalorder %s16, 2
      %p125 = por %p123, %p124
      %p126 = scmp.ne.s32.totalorder %s118, %s121
      %p127 = scmp.eq.s32.totalorder %s16, 0
      %p128 = por %p126, %p127
      %p129 = scmp.ne.s32.totalorder %s118, %s121
      %p130 = scmp.eq.s32.totalorder %s21, 2
      %p131 = por %p129, %p130
      %p132 = scmp.ne.s32.totalorder %s121, %s122
      %p133 = scmp.eq.s32.totalorder %s21, 0
      %p134 = por %p132, %p133
      %p135 = scmp.ne.s32.totalorder %s121, %s122
      %p136 = scmp.eq.s32.totalorder %s22, 2
      %p137 = por %p135, %p136
      %p139 = scmp.ne.s32.totalorder %s122, %s138
      %p140 = scmp.eq.s32.totalorder %s22, 0
      %p141 = por %p139, %p140
      %p142 = scmp.le.s32.totalorder 1, %s16
      %p143 = scmp.lt.s32.totalorder %s16, 4
      %p144 = pnand %p142, %p143
      %p145 = pneg %p144
      // Predicated region
      $region9: #{tpu_custom_call.1} parent=5 // pred_check
        _
      $region10: #{tpu_custom_call.1} parent=5 // pred_check_branch
        %147 = sbr.rel (%p144) target = $region12
      $region11: #{tpu_custom_call.1} parent=5 // pred_region
        %s148 = ssub.s32 %s16, 1
        // Predicated region
        $region13: #{tpu_custom_call.1} parent=11 // pred_check
          %p149 = pneg %p108
        $region14: #{tpu_custom_call.1} parent=11 // pred_check_branch
          %151 = sbr.rel (%p149) target = $region16
        $region15: #{tpu_custom_call.1} parent=11 // pred_region
          %s152 = smul.u32 12, %s25
          %154 = vsyncadd [#allocation6], 0
          %s155 = scalar_lea.hbm %s2, %s152
          %s157 = sshll.u32 %s155, 4
          %s158 = int_to_ptr.hbm [resolvable:$true] %s157
          %s159 = sshll.u32 [#allocation7], 4
          %s160 = int_to_ptr.vmem [resolvable:$true] %s159
          %162 = dma.hbm_to_vmem [thread:$0]  %s158, 192, %s160, [#allocation6]
        $region16: #{tpu_custom_call.1} parent=11 // pred_fallthru
          _
      $region12: #{tpu_custom_call.1} parent=5 // pred_fallthru
        _
      %p163 = scmp.lt.s32.totalorder %s16, 3
      // Predicated region
      $region17: #{tpu_custom_call.1} parent=5 // pred_check
        %p164 = pneg %p163
      $region18: #{tpu_custom_call.1} parent=5 // pred_check_branch
        %166 = sbr.rel (%p164) target = $region20
      $region19: #{tpu_custom_call.1} parent=5 // pred_region
        // Predicated region
        $region21: #{tpu_custom_call.1} parent=19 // pred_check
          %p167 = pneg %p48
        $region22: #{tpu_custom_call.1} parent=19 // pred_check_branch
          %169 = sbr.rel (%p167) target = $region24
        $region23: #{tpu_custom_call.1} parent=19 // pred_region
          %s170 = sand.u32 %s38, 1
          %s171 = scalar_lea.sflag [#allocation3], %s170
          %s172 = sand.u32 %s38, 1
          %s173 = smul.addr %s172, 256
          %s174 = scalar_lea.vmem [#allocation2], %s173
          %s175 = smul.u32 8, %s24
          %177 = vsyncadd %s171, 0
          %s178 = smul.addr %s175, 8
          %s179 = scalar_lea.hbm %s0, %s178
          %s180 = sshll.u32 %s179, 4
          %s181 = int_to_ptr.hbm [resolvable:$true] %s180
          %s182 = sshll.u32 %s174, 4
          %s183 = int_to_ptr.vmem [resolvable:$true] %s182
          %188 = dma.hbm_to_vmem [thread:$0]  %s181, 4096, %s183, %s171, 3072, 1024, 64
        $region24: #{tpu_custom_call.1} parent=19 // pred_fallthru
          _
        // Predicated region
        $region25: #{tpu_custom_call.1} parent=19 // pred_check
          %p189 = pneg %p76
        $region26: #{tpu_custom_call.1} parent=19 // pred_check_branch
          %191 = sbr.rel (%p189) target = $region28
        $region27: #{tpu_custom_call.1} parent=19 // pred_region
          %s192 = sand.u32 %s16, 1
          %s193 = scalar_lea.sflag [#allocation6], %s192
          %s194 = sand.u32 %s66, 1
          %s195 = smul.addr %s194, 6144
          %s196 = scalar_lea.vmem [#allocation5], %s195
          %s197 = smul.u32 128, %s24
          %s198 = smul.u32 12, %s23
          %200 = vsyncadd %s193, 0
          %s201 = smul.addr %s197, 12
          %s202 = sadd.s32 %s198, %s201
          %s203 = smul.addr %s202, 4
          %s204 = scalar_lea.hbm %s1, %s203
          %s205 = sshll.u32 %s204, 4
          %s206 = int_to_ptr.hbm [resolvable:$true] %s205
          %s207 = sshll.u32 %s196, 4
          %s208 = int_to_ptr.vmem [resolvable:$true] %s207
          %213 = dma.hbm_to_vmem [thread:$0]  %s206, 98304, %s208, %s193, 768, 768, 48
        $region28: #{tpu_custom_call.1} parent=19 // pred_fallthru
          _
      $region20: #{tpu_custom_call.1} parent=5 // pred_fallthru
        _
      %p214 = scmp.le.s32.totalorder 1, %s16
      %p215 = scmp.lt.s32.totalorder %s16, 4
      %p216 = pnand %p214, %p215
      %p217 = pneg %p216
      // Predicated region
      $region29: #{tpu_custom_call.1} parent=5 // pred_check
        _
      $region30: #{tpu_custom_call.1} parent=5 // pred_check_branch
        %219 = sbr.rel (%p216) target = $region32
      $region31: #{tpu_custom_call.1} parent=5 // pred_region
        %s220 = ssub.s32 %s16, 1
        %s221 = sand.u32 %s41, 1
        %s222 = scalar_lea.sflag [#allocation3], %s221
        %s223 = sand.u32 %s41, 1
        %s224 = smul.addr %s223, 256
        %s225 = scalar_lea.vmem [#allocation2], %s224
        // Predicated region
        $region33: #{tpu_custom_call.1} parent=31 // pred_check
          %p226 = pneg %p54
        $region34: #{tpu_custom_call.1} parent=31 // pred_check_branch
          %228 = sbr.rel (%p226) target = $region36
        $region35: #{tpu_custom_call.1} parent=31 // pred_region
          %230 = dma.done %s222, 4096
        $region36: #{tpu_custom_call.1} parent=31 // pred_fallthru
          _
        %s231 = sand.u32 %s21, 1
        %s232 = scalar_lea.sflag [#allocation6], %s231
        %s233 = sand.u32 %s69, 1
        %s234 = smul.addr %s233, 6144
        %s235 = scalar_lea.vmem [#allocation5], %s234
        // Predicated region
        $region37: #{tpu_custom_call.1} parent=31 // pred_check
          %p236 = pneg %p82
        $region38: #{tpu_custom_call.1} parent=31 // pred_check_branch
          %238 = sbr.rel (%p236) target = $region40
        $region39: #{tpu_custom_call.1} parent=31 // pred_region
          %240 = dma.done %s232, 98304
        $region40: #{tpu_custom_call.1} parent=31 // pred_fallthru
          _
        // Predicated region
        $region41: #{tpu_custom_call.1} parent=31 // pred_check
          %p241 = pneg %p108
        $region42: #{tpu_custom_call.1} parent=31 // pred_check_branch
          %243 = sbr.rel (%p241) target = $region44
        $region43: #{tpu_custom_call.1} parent=31 // pred_region
          %245 = dma.done [#allocation6], 192
        $region44: #{tpu_custom_call.1} parent=31 // pred_fallthru
          _
        %s246 = sand.u32 %s41, 1
        %s247 = scalar_lea.sflag [#allocation3], %s246
        %s248 = sand.u32 %s41, 1
        %s249 = smul.addr %s248, 256
        %s250 = scalar_lea.vmem [#allocation2], %s249
        %p251 = pneg %p54
        %p252 = pneg %p51
        %s253 = sand.u32 %s21, 1
        %s254 = scalar_lea.sflag [#allocation6], %s253
        %s255 = sand.u32 %s69, 1
        %s256 = smul.addr %s255, 6144
        %s257 = scalar_lea.vmem [#allocation5], %s256
        %p258 = pneg %p82
        %p259 = pneg %p79
        %p260 = pneg %p108
        %p261 = pneg %p105
        %p262 = pneg %p134
        %p263 = pneg %p131
        %s264 = smul.u32 8, %s26
        %s265 = smul.u32 128, %s26
        %s266 = smul.u32 12, %s25
        %s267 = smul.u32 12, %s25
        %s268 = smul.u32 12, %s25
        %p269 = scmp.eq.s32.totalorder %s26, 0
        // Predicated region
        $region45: #{tpu_custom_call.1} parent=31 // pred_check
          %p270 = pneg %p269
        $region46: #{tpu_custom_call.1} parent=31 // pred_check_branch
          %272 = sbr.rel (%p270) target = $region48
        $region47: #{tpu_custom_call.1} parent=31 // pred_region
          %273 = vst [vmem:[#allocation8] sm:$0xff] 0.0
          %274 = vst [vmem:[#allocation8 + $0x8] sm:$0xff] 0.0
          %275 = vst [vmem:[#allocation8 + $0x10] sm:$0xff] 0.0
          %276 = vst [vmem:[#allocation8 + $0x18] sm:$0xff] 0.0
          %277 = vst [vmem:[#allocation8 + $0x20] sm:$0xff] 0.0
          %278 = vst [vmem:[#allocation8 + $0x28] sm:$0xff] 0.0
          %279 = vst [vmem:[#allocation8 + $0x30] sm:$0xff] 0.0
          %280 = vst [vmem:[#allocation8 + $0x38] sm:$0xff] 0.0
          %281 = vst [vmem:[#allocation8 + $0x40] sm:$0xff] 0.0
          %282 = vst [vmem:[#allocation8 + $0x48] sm:$0xff] 0.0
          %283 = vst [vmem:[#allocation8 + $0x50] sm:$0xff] 0.0
          %284 = vst [vmem:[#allocation8 + $0x58] sm:$0xff] 0.0
          %285 = vst [vmem:[#allocation8 + $0x60] sm:$0xff] 0.0
          %286 = vst [vmem:[#allocation8 + $0x68] sm:$0xff] 0.0
          %287 = vst [vmem:[#allocation8 + $0x70] sm:$0xff] 0.0
          %288 = vst [vmem:[#allocation8 + $0x78] sm:$0xff] 0.0
          %289 = vst [vmem:[#allocation8 + $0x80] sm:$0xff] 0.0
          %290 = vst [vmem:[#allocation8 + $0x88] sm:$0xff] 0.0
          %291 = vst [vmem:[#allocation8 + $0x90] sm:$0xff] 0.0
          %292 = vst [vmem:[#allocation8 + $0x98] sm:$0xff] 0.0
          %293 = vst [vmem:[#allocation8 + $0xa0] sm:$0xff] 0.0
          %294 = vst [vmem:[#allocation8 + $0xa8] sm:$0xff] 0.0
          %295 = vst [vmem:[#allocation8 + $0xb0] sm:$0xff] 0.0
          %296 = vst [vmem:[#allocation8 + $0xb8] sm:$0xff] 0.0
          %297 = vst [vmem:[#allocation8 + $0xc0] sm:$0xff] 0.0
          %298 = vst [vmem:[#allocation8 + $0xc8] sm:$0xff] 0.0
          %299 = vst [vmem:[#allocation8 + $0xd0] sm:$0xff] 0.0
          %300 = vst [vmem:[#allocation8 + $0xd8] sm:$0xff] 0.0
          %301 = vst [vmem:[#allocation8 + $0xe0] sm:$0xff] 0.0
          %302 = vst [vmem:[#allocation8 + $0xe8] sm:$0xff] 0.0
          %303 = vst [vmem:[#allocation8 + $0xf0] sm:$0xff] 0.0
          %304 = vst [vmem:[#allocation8 + $0xf8] sm:$0xff] 0.0
          %305 = vst [vmem:[#allocation8 + $0x100] sm:$0xff] 0.0
          %306 = vst [vmem:[#allocation8 + $0x108] sm:$0xff] 0.0
          %307 = vst [vmem:[#allocation8 + $0x110] sm:$0xff] 0.0
          %308 = vst [vmem:[#allocation8 + $0x118] sm:$0xff] 0.0
          %309 = vst [vmem:[#allocation8 + $0x120] sm:$0xff] 0.0
          %310 = vst [vmem:[#allocation8 + $0x128] sm:$0xff] 0.0
          %311 = vst [vmem:[#allocation8 + $0x130] sm:$0xff] 0.0
          %312 = vst [vmem:[#allocation8 + $0x138] sm:$0xff] 0.0
          %313 = vst [vmem:[#allocation8 + $0x140] sm:$0xff] 0.0
          %314 = vst [vmem:[#allocation8 + $0x148] sm:$0xff] 0.0
          %315 = vst [vmem:[#allocation8 + $0x150] sm:$0xff] 0.0
          %316 = vst [vmem:[#allocation8 + $0x158] sm:$0xff] 0.0
          %317 = vst [vmem:[#allocation8 + $0x160] sm:$0xff] 0.0
          %318 = vst [vmem:[#allocation8 + $0x168] sm:$0xff] 0.0
          %319 = vst [vmem:[#allocation8 + $0x170] sm:$0xff] 0.0
          %320 = vst [vmem:[#allocation8 + $0x178] sm:$0xff] 0.0
        $region48: #{tpu_custom_call.1} parent=31 // pred_fallthru
          _
        %v321 = vld [vmem:[#allocation8] sm:$0xff]
        %v322 = vld [vmem:[#allocation8 + $0x8] sm:$0xff]
        %v323 = vld [vmem:[#allocation8 + $0x10] sm:$0xff]
        %v324 = vld [vmem:[#allocation8 + $0x18] sm:$0xff]
        %v325 = vld [vmem:[#allocation8 + $0x20] sm:$0xff]
        %v326 = vld [vmem:[#allocation8 + $0x28] sm:$0xff]
        %v327 = vld [vmem:[#allocation8 + $0x30] sm:$0xff]
        %v328 = vld [vmem:[#allocation8 + $0x38] sm:$0xff]
        %v329 = vld [vmem:[#allocation8 + $0x40] sm:$0xff]
        %v330 = vld [vmem:[#allocation8 + $0x48] sm:$0xff]
        %v331 = vld [vmem:[#allocation8 + $0x50] sm:$0xff]
        %v332 = vld [vmem:[#allocation8 + $0x58] sm:$0xff]
        %v333 = vld [vmem:[#allocation8 + $0x60] sm:$0xff]
        %v334 = vld [vmem:[#allocation8 + $0x68] sm:$0xff]
        %v335 = vld [vmem:[#allocation8 + $0x70] sm:$0xff]
        %v336 = vld [vmem:[#allocation8 + $0x78] sm:$0xff]
        %v337 = vld [vmem:[#allocation8 + $0x80] sm:$0xff]
        %v338 = vld [vmem:[#allocation8 + $0x88] sm:$0xff]
        %v339 = vld [vmem:[#allocation8 + $0x90] sm:$0xff]
        %v340 = vld [vmem:[#allocation8 + $0x98] sm:$0xff]
        %v341 = vld [vmem:[#allocation8 + $0xa0] sm:$0xff]
        %v342 = vld [vmem:[#allocation8 + $0xa8] sm:$0xff]
        %v343 = vld [vmem:[#allocation8 + $0xb0] sm:$0xff]
        %v344 = vld [vmem:[#allocation8 + $0xb8] sm:$0xff]
        %v345 = vld [vmem:[#allocation8 + $0xc0] sm:$0xff]
        %v346 = vld [vmem:[#allocation8 + $0xc8] sm:$0xff]
        %v347 = vld [vmem:[#allocation8 + $0xd0] sm:$0xff]
        %v348 = vld [vmem:[#allocation8 + $0xd8] sm:$0xff]
        %v349 = vld [vmem:[#allocation8 + $0xe0] sm:$0xff]
        %v350 = vld [vmem:[#allocation8 + $0xe8] sm:$0xff]
        %v351 = vld [vmem:[#allocation8 + $0xf0] sm:$0xff]
        %v352 = vld [vmem:[#allocation8 + $0xf8] sm:$0xff]
        %v353 = vld [vmem:[#allocation8 + $0x100] sm:$0xff]
        %v354 = vld [vmem:[#allocation8 + $0x108] sm:$0xff]
        %v355 = vld [vmem:[#allocation8 + $0x110] sm:$0xff]
        %v356 = vld [vmem:[#allocation8 + $0x118] sm:$0xff]
        %v357 = vld [vmem:[#allocation8 + $0x120] sm:$0xff]
        %v358 = vld [vmem:[#allocation8 + $0x128] sm:$0xff]
        %v359 = vld [vmem:[#allocation8 + $0x130] sm:$0xff]
        %v360 = vld [vmem:[#allocation8 + $0x138] sm:$0xff]
        %v361 = vld [vmem:[#allocation8 + $0x140] sm:$0xff]
        %v362 = vld [vmem:[#allocation8 + $0x148] sm:$0xff]
        %v363 = vld [vmem:[#allocation8 + $0x150] sm:$0xff]
        %v364 = vld [vmem:[#allocation8 + $0x158] sm:$0xff]
        %v365 = vld [vmem:[#allocation8 + $0x160] sm:$0xff]
        %v366 = vld [vmem:[#allocation8 + $0x168] sm:$0xff]
        %v367 = vld [vmem:[#allocation8 + $0x170] sm:$0xff]
        %v368 = vld [vmem:[#allocation8 + $0x178] sm:$0xff]
        %v369 = vld [vmem:[%s225] sm:$0xff]
        %v370 = vld [vmem:[%s225 + $0x8] sm:$0xff]
        %v371 = vld [vmem:[%s225 + $0x10] sm:$0xff]
        %v372 = vld [vmem:[%s225 + $0x18] sm:$0xff]
        %v373 = vld [vmem:[%s225 + $0x20] sm:$0xff]
        %v374 = vld [vmem:[%s225 + $0x28] sm:$0xff]
        %v375 = vld [vmem:[%s225 + $0x30] sm:$0xff]
        %v376 = vld [vmem:[%s225 + $0x38] sm:$0xff]
        %v377 = vld [vmem:[%s225 + $0x40] sm:$0xff]
        %v378 = vld [vmem:[%s225 + $0x48] sm:$0xff]
        %v379 = vld [vmem:[%s225 + $0x50] sm:$0xff]
        %v380 = vld [vmem:[%s225 + $0x58] sm:$0xff]
        %v381 = vld [vmem:[%s225 + $0x60] sm:$0xff]
        %v382 = vld [vmem:[%s225 + $0x68] sm:$0xff]
        %v383 = vld [vmem:[%s225 + $0x70] sm:$0xff]
        %v384 = vld [vmem:[%s225 + $0x78] sm:$0xff]
        %v385 = vld [vmem:[%s225 + $0x80] sm:$0xff]
        %v386 = vld [vmem:[%s225 + $0x88] sm:$0xff]
        %v387 = vld [vmem:[%s225 + $0x90] sm:$0xff]
        %v388 = vld [vmem:[%s225 + $0x98] sm:$0xff]
        %v389 = vld [vmem:[%s225 + $0xa0] sm:$0xff]
        %v390 = vld [vmem:[%s225 + $0xa8] sm:$0xff]
        %v391 = vld [vmem:[%s225 + $0xb0] sm:$0xff]
        %v392 = vld [vmem:[%s225 + $0xb8] sm:$0xff]
        %v393 = vld [vmem:[%s225 + $0xc0] sm:$0xff]
        %v394 = vld [vmem:[%s225 + $0xc8] sm:$0xff]
        %v395 = vld [vmem:[%s225 + $0xd0] sm:$0xff]
        %v396 = vld [vmem:[%s225 + $0xd8] sm:$0xff]
        %v397 = vld [vmem:[%s225 + $0xe0] sm:$0xff]
        %v398 = vld [vmem:[%s225 + $0xe8] sm:$0xff]
        %v399 = vld [vmem:[%s225 + $0xf0] sm:$0xff]
        %v400 = vld [vmem:[%s225 + $0xf8] sm:$0xff]
        %v401 = vpack.c.bf16 %v377, %v369
        %v402 = vpack.c.bf16 %v378, %v370
        %v403 = vpack.c.bf16 %v379, %v371
        %v404 = vpack.c.bf16 %v380, %v372
        %v405 = vpack.c.bf16 %v381, %v373
        %v406 = vpack.c.bf16 %v382, %v374
        %v407 = vpack.c.bf16 %v383, %v375
        %v408 = vpack.c.bf16 %v384, %v376
        %v409 = vpack.c.bf16 %v393, %v385
        %v410 = vpack.c.bf16 %v394, %v386
        %v411 = vpack.c.bf16 %v395, %v387
        %v412 = vpack.c.bf16 %v396, %v388
        %v413 = vpack.c.bf16 %v397, %v389
        %v414 = vpack.c.bf16 %v398, %v390
        %v415 = vpack.c.bf16 %v399, %v391
        %v416 = vpack.c.bf16 %v400, %v392
        %v417 = vld [vmem:[%s235] sm:$0xff]
        %v418 = vld [vmem:[%s235 + $0x8] sm:$0xff]
        %v419 = vld [vmem:[%s235 + $0x10] sm:$0xff]
        %v420 = vld [vmem:[%s235 + $0x18] sm:$0xff]
        %v421 = vld [vmem:[%s235 + $0x20] sm:$0xff]
        %v422 = vld [vmem:[%s235 + $0x28] sm:$0xff]
        %v423 = vld [vmem:[%s235 + $0x30] sm:$0xff]
        %v424 = vld [vmem:[%s235 + $0x38] sm:$0xff]
        %v425 = vld [vmem:[%s235 + $0x40] sm:$0xff]
        %v426 = vld [vmem:[%s235 + $0x48] sm:$0xff]
        %v427 = vld [vmem:[%s235 + $0x50] sm:$0xff]
        %v428 = vld [vmem:[%s235 + $0x58] sm:$0xff]
        %v429 = vld [vmem:[%s235 + $0x60] sm:$0xff]
        %v430 = vld [vmem:[%s235 + $0x68] sm:$0xff]
        %v431 = vld [vmem:[%s235 + $0x70] sm:$0xff]
        %v432 = vld [vmem:[%s235 + $0x78] sm:$0xff]
        %v433 = vld [vmem:[%s235 + $0x80] sm:$0xff]
        %v434 = vld [vmem:[%s235 + $0x88] sm:$0xff]
        %v435 = vld [vmem:[%s235 + $0x90] sm:$0xff]
        %v436 = vld [vmem:[%s235 + $0x98] sm:$0xff]
        %v437 = vld [vmem:[%s235 + $0xa0] sm:$0xff]
        %v438 = vld [vmem:[%s235 + $0xa8] sm:$0xff]
        %v439 = vld [vmem:[%s235 + $0xb0] sm:$0xff]
        %v440 = vld [vmem:[%s235 + $0xb8] sm:$0xff]
        %v441 = vld [vmem:[%s235 + $0xc0] sm:$0xff]
        %v442 = vld [vmem:[%s235 + $0xc8] sm:$0xff]
        %v443 = vld [vmem:[%s235 + $0xd0] sm:$0xff]
        %v444 = vld [vmem:[%s235 + $0xd8] sm:$0xff]
        %v445 = vld [vmem:[%s235 + $0xe0] sm:$0xff]
        %v446 = vld [vmem:[%s235 + $0xe8] sm:$0xff]
        %v447 = vld [vmem:[%s235 + $0xf0] sm:$0xff]
        %v448 = vld [vmem:[%s235 + $0xf8] sm:$0xff]
        %v449 = vld [vmem:[%s235 + $0x100] sm:$0xff]
        %v450 = vld [vmem:[%s235 + $0x108] sm:$0xff]
        %v451 = vld [vmem:[%s235 + $0x110] sm:$0xff]
        %v452 = vld [vmem:[%s235 + $0x118] sm:$0xff]
        %v453 = vld [vmem:[%s235 + $0x120] sm:$0xff]
        %v454 = vld [vmem:[%s235 + $0x128] sm:$0xff]
        %v455 = vld [vmem:[%s235 + $0x130] sm:$0xff]
        %v456 = vld [vmem:[%s235 + $0x138] sm:$0xff]
        %v457 = vld [vmem:[%s235 + $0x140] sm:$0xff]
        %v458 = vld [vmem:[%s235 + $0x148] sm:$0xff]
        %v459 = vld [vmem:[%s235 + $0x150] sm:$0xff]
        %v460 = vld [vmem:[%s235 + $0x158] sm:$0xff]
        %v461 = vld [vmem:[%s235 + $0x160] sm:$0xff]
        %v462 = vld [vmem:[%s235 + $0x168] sm:$0xff]
        %v463 = vld [vmem:[%s235 + $0x170] sm:$0xff]
        %v464 = vld [vmem:[%s235 + $0x178] sm:$0xff]
        %v465 = vld [vmem:[%s235 + $0x180] sm:$0xff]
        %v466 = vld [vmem:[%s235 + $0x188] sm:$0xff]
        %v467 = vld [vmem:[%s235 + $0x190] sm:$0xff]
        %v468 = vld [vmem:[%s235 + $0x198] sm:$0xff]
        %v469 = vld [vmem:[%s235 + $0x1a0] sm:$0xff]
        %v470 = vld [vmem:[%s235 + $0x1a8] sm:$0xff]
        %v471 = vld [vmem:[%s235 + $0x1b0] sm:$0xff]
        %v472 = vld [vmem:[%s235 + $0x1b8] sm:$0xff]
        %v473 = vld [vmem:[%s235 + $0x1c0] sm:$0xff]
        %v474 = vld [vmem:[%s235 + $0x1c8] sm:$0xff]
        %v475 = vld [vmem:[%s235 + $0x1d0] sm:$0xff]
        %v476 = vld [vmem:[%s235 + $0x1d8] sm:$0xff]
        %v477 = vld [vmem:[%s235 + $0x1e0] sm:$0xff]
        %v478 = vld [vmem:[%s235 + $0x1e8] sm:$0xff]
        %v479 = vld [vmem:[%s235 + $0x1f0] sm:$0xff]
        %v480 = vld [vmem:[%s235 + $0x1f8] sm:$0xff]
        %v481 = vld [vmem:[%s235 + $0x200] sm:$0xff]
        %v482 = vld [vmem:[%s235 + $0x208] sm:$0xff]
        %v483 = vld [vmem:[%s235 + $0x210] sm:$0xff]
        %v484 = vld [vmem:[%s235 + $0x218] sm:$0xff]
        %v485 = vld [vmem:[%s235 + $0x220] sm:$0xff]
        %v486 = vld [vmem:[%s235 + $0x228] sm:$0xff]
        %v487 = vld [vmem:[%s235 + $0x230] sm:$0xff]
        %v488 = vld [vmem:[%s235 + $0x238] sm:$0xff]
        %v489 = vld [vmem:[%s235 + $0x240] sm:$0xff]
        %v490 = vld [vmem:[%s235 + $0x248] sm:$0xff]
        %v491 = vld [vmem:[%s235 + $0x250] sm:$0xff]
        %v492 = vld [vmem:[%s235 + $0x258] sm:$0xff]
        %v493 = vld [vmem:[%s235 + $0x260] sm:$0xff]
        %v494 = vld [vmem:[%s235 + $0x268] sm:$0xff]
        %v495 = vld [vmem:[%s235 + $0x270] sm:$0xff]
        %v496 = vld [vmem:[%s235 + $0x278] sm:$0xff]
        %v497 = vld [vmem:[%s235 + $0x280] sm:$0xff]
        %v498 = vld [vmem:[%s235 + $0x288] sm:$0xff]
        %v499 = vld [vmem:[%s235 + $0x290] sm:$0xff]
        %v500 = vld [vmem:[%s235 + $0x298] sm:$0xff]
        %v501 = vld [vmem:[%s235 + $0x2a0] sm:$0xff]
        %v502 = vld [vmem:[%s235 + $0x2a8] sm:$0xff]
        %v503 = vld [vmem:[%s235 + $0x2b0] sm:$0xff]
        %v504 = vld [vmem:[%s235 + $0x2b8] sm:$0xff]
        %v505 = vld [vmem:[%s235 + $0x2c0] sm:$0xff]
        %v506 = vld [vmem:[%s235 + $0x2c8] sm:$0xff]
        %v507 = vld [vmem:[%s235 + $0x2d0] sm:$0xff]
        %v508 = vld [vmem:[%s235 + $0x2d8] sm:$0xff]
        %v509 = vld [vmem:[%s235 + $0x2e0] sm:$0xff]
        %v510 = vld [vmem:[%s235 + $0x2e8] sm:$0xff]
        %v511 = vld [vmem:[%s235 + $0x2f0] sm:$0xff]
        %v512 = vld [vmem:[%s235 + $0x2f8] sm:$0xff]
        %v513 = vld [vmem:[%s235 + $0x300] sm:$0xff]
        %v514 = vld [vmem:[%s235 + $0x308] sm:$0xff]
        %v515 = vld [vmem:[%s235 + $0x310] sm:$0xff]
        %v516 = vld [vmem:[%s235 + $0x318] sm:$0xff]
        %v517 = vld [vmem:[%s235 + $0x320] sm:$0xff]
        %v518 = vld [vmem:[%s235 + $0x328] sm:$0xff]
        %v519 = vld [vmem:[%s235 + $0x330] sm:$0xff]
        %v520 = vld [vmem:[%s235 + $0x338] sm:$0xff]
        %v521 = vld [vmem:[%s235 + $0x340] sm:$0xff]
        %v522 = vld [vmem:[%s235 + $0x348] sm:$0xff]
        %v523 = vld [vmem:[%s235 + $0x350] sm:$0xff]
        %v524 = vld [vmem:[%s235 + $0x358] sm:$0xff]
        %v525 = vld [vmem:[%s235 + $0x360] sm:$0xff]
        %v526 = vld [vmem:[%s235 + $0x368] sm:$0xff]
        %v527 = vld [vmem:[%s235 + $0x370] sm:$0xff]
        %v528 = vld [vmem:[%s235 + $0x378] sm:$0xff]
        %v529 = vld [vmem:[%s235 + $0x380] sm:$0xff]
        %v530 = vld [vmem:[%s235 + $0x388] sm:$0xff]
        %v531 = vld [vmem:[%s235 + $0x390] sm:$0xff]
        %v532 = vld [vmem:[%s235 + $0x398] sm:$0xff]
        %v533 = vld [vmem:[%s235 + $0x3a0] sm:$0xff]
        %v534 = vld [vmem:[%s235 + $0x3a8] sm:$0xff]
        %v535 = vld [vmem:[%s235 + $0x3b0] sm:$0xff]
        %v536 = vld [vmem:[%s235 + $0x3b8] sm:$0xff]
        %v537 = vld [vmem:[%s235 + $0x3c0] sm:$0xff]
        %v538 = vld [vmem:[%s235 + $0x3c8] sm:$0xff]
        %v539 = vld [vmem:[%s235 + $0x3d0] sm:$0xff]
        %v540 = vld [vmem:[%s235 + $0x3d8] sm:$0xff]
        %v541 = vld [vmem:[%s235 + $0x3e0] sm:$0xff]
        %v542 = vld [vmem:[%s235 + $0x3e8] sm:$0xff]
        %v543 = vld [vmem:[%s235 + $0x3f0] sm:$0xff]
        %v544 = vld [vmem:[%s235 + $0x3f8] sm:$0xff]
        %v545 = vld [vmem:[%s235 + $0x400] sm:$0xff]
        %v546 = vld [vmem:[%s235 + $0x408] sm:$0xff]
        %v547 = vld [vmem:[%s235 + $0x410] sm:$0xff]
        %v548 = vld [vmem:[%s235 + $0x418] sm:$0xff]
        %v549 = vld [vmem:[%s235 + $0x420] sm:$0xff]
        %v550 = vld [vmem:[%s235 + $0x428] sm:$0xff]
        %v551 = vld [vmem:[%s235 + $0x430] sm:$0xff]
        %v552 = vld [vmem:[%s235 + $0x438] sm:$0xff]
        %v553 = vld [vmem:[%s235 + $0x440] sm:$0xff]
        %v554 = vld [vmem:[%s235 + $0x448] sm:$0xff]
        %v555 = vld [vmem:[%s235 + $0x450] sm:$0xff]
        %v556 = vld [vmem:[%s235 + $0x458] sm:$0xff]
        %v557 = vld [vmem:[%s235 + $0x460] sm:$0xff]
        %v558 = vld [vmem:[%s235 + $0x468] sm:$0xff]
        %v559 = vld [vmem:[%s235 + $0x470] sm:$0xff]
        %v560 = vld [vmem:[%s235 + $0x478] sm:$0xff]
        %v561 = vld [vmem:[%s235 + $0x480] sm:$0xff]
        %v562 = vld [vmem:[%s235 + $0x488] sm:$0xff]
        %v563 = vld [vmem:[%s235 + $0x490] sm:$0xff]
        %v564 = vld [vmem:[%s235 + $0x498] sm:$0xff]
        %v565 = vld [vmem:[%s235 + $0x4a0] sm:$0xff]
        %v566 = vld [vmem:[%s235 + $0x4a8] sm:$0xff]
        %v567 = vld [vmem:[%s235 + $0x4b0] sm:$0xff]
        %v568 = vld [vmem:[%s235 + $0x4b8] sm:$0xff]
        %v569 = vld [vmem:[%s235 + $0x4c0] sm:$0xff]
        %v570 = vld [vmem:[%s235 + $0x4c8] sm:$0xff]
        %v571 = vld [vmem:[%s235 + $0x4d0] sm:$0xff]
        %v572 = vld [vmem:[%s235 + $0x4d8] sm:$0xff]
        %v573 = vld [vmem:[%s235 + $0x4e0] sm:$0xff]
        %v574 = vld [vmem:[%s235 + $0x4e8] sm:$0xff]
        %v575 = vld [vmem:[%s235 + $0x4f0] sm:$0xff]
        %v576 = vld [vmem:[%s235 + $0x4f8] sm:$0xff]
        %v577 = vld [vmem:[%s235 + $0x500] sm:$0xff]
        %v578 = vld [vmem:[%s235 + $0x508] sm:$0xff]
        %v579 = vld [vmem:[%s235 + $0x510] sm:$0xff]
        %v580 = vld [vmem:[%s235 + $0x518] sm:$0xff]
        %v581 = vld [vmem:[%s235 + $0x520] sm:$0xff]
        %v582 = vld [vmem:[%s235 + $0x528] sm:$0xff]
        %v583 = vld [vmem:[%s235 + $0x530] sm:$0xff]
        %v584 = vld [vmem:[%s235 + $0x538] sm:$0xff]
        %v585 = vld [vmem:[%s235 + $0x540] sm:$0xff]
        %v586 = vld [vmem:[%s235 + $0x548] sm:$0xff]
        %v587 = vld [vmem:[%s235 + $0x550] sm:$0xff]
        %v588 = vld [vmem:[%s235 + $0x558] sm:$0xff]
        %v589 = vld [vmem:[%s235 + $0x560] sm:$0xff]
        %v590 = vld [vmem:[%s235 + $0x568] sm:$0xff]
        %v591 = vld [vmem:[%s235 + $0x570] sm:$0xff]
        %v592 = vld [vmem:[%s235 + $0x578] sm:$0xff]
        %v593 = vld [vmem:[%s235 + $0x580] sm:$0xff]
        %v594 = vld [vmem:[%s235 + $0x588] sm:$0xff]
        %v595 = vld [vmem:[%s235 + $0x590] sm:$0xff]
        %v596 = vld [vmem:[%s235 + $0x598] sm:$0xff]
        %v597 = vld [vmem:[%s235 + $0x5a0] sm:$0xff]
        %v598 = vld [vmem:[%s235 + $0x5a8] sm:$0xff]
        %v599 = vld [vmem:[%s235 + $0x5b0] sm:$0xff]
        %v600 = vld [vmem:[%s235 + $0x5b8] sm:$0xff]
        %v601 = vld [vmem:[%s235 + $0x5c0] sm:$0xff]
        %v602 = vld [vmem:[%s235 + $0x5c8] sm:$0xff]
        %v603 = vld [vmem:[%s235 + $0x5d0] sm:$0xff]
        %v604 = vld [vmem:[%s235 + $0x5d8] sm:$0xff]
        %v605 = vld [vmem:[%s235 + $0x5e0] sm:$0xff]
        %v606 = vld [vmem:[%s235 + $0x5e8] sm:$0xff]
        %v607 = vld [vmem:[%s235 + $0x5f0] sm:$0xff]
        %v608 = vld [vmem:[%s235 + $0x5f8] sm:$0xff]
        %v609 = vld [vmem:[%s235 + $0x600] sm:$0xff]
        %v610 = vld [vmem:[%s235 + $0x608] sm:$0xff]
        %v611 = vld [vmem:[%s235 + $0x610] sm:$0xff]
        %v612 = vld [vmem:[%s235 + $0x618] sm:$0xff]
        %v613 = vld [vmem:[%s235 + $0x620] sm:$0xff]
        %v614 = vld [vmem:[%s235 + $0x628] sm:$0xff]
        %v615 = vld [vmem:[%s235 + $0x630] sm:$0xff]
        %v616 = vld [vmem:[%s235 + $0x638] sm:$0xff]
        %v617 = vld [vmem:[%s235 + $0x640] sm:$0xff]
        %v618 = vld [vmem:[%s235 + $0x648] sm:$0xff]
        %v619 = vld [vmem:[%s235 + $0x650] sm:$0xff]
        %v620 = vld [vmem:[%s235 + $0x658] sm:$0xff]
        %v621 = vld [vmem:[%s235 + $0x660] sm:$0xff]
        %v622 = vld [vmem:[%s235 + $0x668] sm:$0xff]
        %v623 = vld [vmem:[%s235 + $0x670] sm:$0xff]
        %v624 = vld [vmem:[%s235 + $0x678] sm:$0xff]
        %v625 = vld [vmem:[%s235 + $0x680] sm:$0xff]
        %v626 = vld [vmem:[%s235 + $0x688] sm:$0xff]
        %v627 = vld [vmem:[%s235 + $0x690] sm:$0xff]
        %v628 = vld [vmem:[%s235 + $0x698] sm:$0xff]
        %v629 = vld [vmem:[%s235 + $0x6a0] sm:$0xff]
        %v630 = vld [vmem:[%s235 + $0x6a8] sm:$0xff]
        %v631 = vld [vmem:[%s235 + $0x6b0] sm:$0xff]
        %v632 = vld [vmem:[%s235 + $0x6b8] sm:$0xff]
        %v633 = vld [vmem:[%s235 + $0x6c0] sm:$0xff]
        %v634 = vld [vmem:[%s235 + $0x6c8] sm:$0xff]
        %v635 = vld [vmem:[%s235 + $0x6d0] sm:$0xff]
        %v636 = vld [vmem:[%s235 + $0x6d8] sm:$0xff]
        %v637 = vld [vmem:[%s235 + $0x6e0] sm:$0xff]
        %v638 = vld [vmem:[%s235 + $0x6e8] sm:$0xff]
        %v639 = vld [vmem:[%s235 + $0x6f0] sm:$0xff]
        %v640 = vld [vmem:[%s235 + $0x6f8] sm:$0xff]
        %v641 = vld [vmem:[%s235 + $0x700] sm:$0xff]
        %v642 = vld [vmem:[%s235 + $0x708] sm:$0xff]
        %v643 = vld [vmem:[%s235 + $0x710] sm:$0xff]
        %v644 = vld [vmem:[%s235 + $0x718] sm:$0xff]
        %v645 = vld [vmem:[%s235 + $0x720] sm:$0xff]
        %v646 = vld [vmem:[%s235 + $0x728] sm:$0xff]
        %v647 = vld [vmem:[%s235 + $0x730] sm:$0xff]
        %v648 = vld [vmem:[%s235 + $0x738] sm:$0xff]
        %v649 = vld [vmem:[%s235 + $0x740] sm:$0xff]
        %v650 = vld [vmem:[%s235 + $0x748] sm:$0xff]
        %v651 = vld [vmem:[%s235 + $0x750] sm:$0xff]
        %v652 = vld [vmem:[%s235 + $0x758] sm:$0xff]
        %v653 = vld [vmem:[%s235 + $0x760] sm:$0xff]
        %v654 = vld [vmem:[%s235 + $0x768] sm:$0xff]
        %v655 = vld [vmem:[%s235 + $0x770] sm:$0xff]
        %v656 = vld [vmem:[%s235 + $0x778] sm:$0xff]
        %v657 = vld [vmem:[%s235 + $0x780] sm:$0xff]
        %v658 = vld [vmem:[%s235 + $0x788] sm:$0xff]
        %v659 = vld [vmem:[%s235 + $0x790] sm:$0xff]
        %v660 = vld [vmem:[%s235 + $0x798] sm:$0xff]
        %v661 = vld [vmem:[%s235 + $0x7a0] sm:$0xff]
        %v662 = vld [vmem:[%s235 + $0x7a8] sm:$0xff]
        %v663 = vld [vmem:[%s235 + $0x7b0] sm:$0xff]
        %v664 = vld [vmem:[%s235 + $0x7b8] sm:$0xff]
        %v665 = vld [vmem:[%s235 + $0x7c0] sm:$0xff]
        %v666 = vld [vmem:[%s235 + $0x7c8] sm:$0xff]
        %v667 = vld [vmem:[%s235 + $0x7d0] sm:$0xff]
        %v668 = vld [vmem:[%s235 + $0x7d8] sm:$0xff]
        %v669 = vld [vmem:[%s235 + $0x7e0] sm:$0xff]
        %v670 = vld [vmem:[%s235 + $0x7e8] sm:$0xff]
        %v671 = vld [vmem:[%s235 + $0x7f0] sm:$0xff]
        %v672 = vld [vmem:[%s235 + $0x7f8] sm:$0xff]
        %v673 = vld [vmem:[%s235 + $0x800] sm:$0xff]
        %v674 = vld [vmem:[%s235 + $0x808] sm:$0xff]
        %v675 = vld [vmem:[%s235 + $0x810] sm:$0xff]
        %v676 = vld [vmem:[%s235 + $0x818] sm:$0xff]
        %v677 = vld [vmem:[%s235 + $0x820] sm:$0xff]
        %v678 = vld [vmem:[%s235 + $0x828] sm:$0xff]
        %v679 = vld [vmem:[%s235 + $0x830] sm:$0xff]
        %v680 = vld [vmem:[%s235 + $0x838] sm:$0xff]
        %v681 = vld [vmem:[%s235 + $0x840] sm:$0xff]
        %v682 = vld [vmem:[%s235 + $0x848] sm:$0xff]
        %v683 = vld [vmem:[%s235 + $0x850] sm:$0xff]
        %v684 = vld [vmem:[%s235 + $0x858] sm:$0xff]
        %v685 = vld [vmem:[%s235 + $0x860] sm:$0xff]
        %v686 = vld [vmem:[%s235 + $0x868] sm:$0xff]
        %v687 = vld [vmem:[%s235 + $0x870] sm:$0xff]
        %v688 = vld [vmem:[%s235 + $0x878] sm:$0xff]
        %v689 = vld [vmem:[%s235 + $0x880] sm:$0xff]
        %v690 = vld [vmem:[%s235 + $0x888] sm:$0xff]
        %v691 = vld [vmem:[%s235 + $0x890] sm:$0xff]
        %v692 = vld [vmem:[%s235 + $0x898] sm:$0xff]
        %v693 = vld [vmem:[%s235 + $0x8a0] sm:$0xff]
        %v694 = vld [vmem:[%s235 + $0x8a8] sm:$0xff]
        %v695 = vld [vmem:[%s235 + $0x8b0] sm:$0xff]
        %v696 = vld [vmem:[%s235 + $0x8b8] sm:$0xff]
        %v697 = vld [vmem:[%s235 + $0x8c0] sm:$0xff]
        %v698 = vld [vmem:[%s235 + $0x8c8] sm:$0xff]
        %v699 = vld [vmem:[%s235 + $0x8d0] sm:$0xff]
        %v700 = vld [vmem:[%s235 + $0x8d8] sm:$0xff]
        %v701 = vld [vmem:[%s235 + $0x8e0] sm:$0xff]
        %v702 = vld [vmem:[%s235 + $0x8e8] sm:$0xff]
        %v703 = vld [vmem:[%s235 + $0x8f0] sm:$0xff]
        %v704 = vld [vmem:[%s235 + $0x8f8] sm:$0xff]
        %v705 = vld [vmem:[%s235 + $0x900] sm:$0xff]
        %v706 = vld [vmem:[%s235 + $0x908] sm:$0xff]
        %v707 = vld [vmem:[%s235 + $0x910] sm:$0xff]
        %v708 = vld [vmem:[%s235 + $0x918] sm:$0xff]
        %v709 = vld [vmem:[%s235 + $0x920] sm:$0xff]
        %v710 = vld [vmem:[%s235 + $0x928] sm:$0xff]
        %v711 = vld [vmem:[%s235 + $0x930] sm:$0xff]
        %v712 = vld [vmem:[%s235 + $0x938] sm:$0xff]
        %v713 = vld [vmem:[%s235 + $0x940] sm:$0xff]
        %v714 = vld [vmem:[%s235 + $0x948] sm:$0xff]
        %v715 = vld [vmem:[%s235 + $0x950] sm:$0xff]
        %v716 = vld [vmem:[%s235 + $0x958] sm:$0xff]
        %v717 = vld [vmem:[%s235 + $0x960] sm:$0xff]
        %v718 = vld [vmem:[%s235 + $0x968] sm:$0xff]
        %v719 = vld [vmem:[%s235 + $0x970] sm:$0xff]
        %v720 = vld [vmem:[%s235 + $0x978] sm:$0xff]
        %v721 = vld [vmem:[%s235 + $0x980] sm:$0xff]
        %v722 = vld [vmem:[%s235 + $0x988] sm:$0xff]
        %v723 = vld [vmem:[%s235 + $0x990] sm:$0xff]
        %v724 = vld [vmem:[%s235 + $0x998] sm:$0xff]
        %v725 = vld [vmem:[%s235 + $0x9a0] sm:$0xff]
        %v726 = vld [vmem:[%s235 + $0x9a8] sm:$0xff]
        %v727 = vld [vmem:[%s235 + $0x9b0] sm:$0xff]
        %v728 = vld [vmem:[%s235 + $0x9b8] sm:$0xff]
        %v729 = vld [vmem:[%s235 + $0x9c0] sm:$0xff]
        %v730 = vld [vmem:[%s235 + $0x9c8] sm:$0xff]
        %v731 = vld [vmem:[%s235 + $0x9d0] sm:$0xff]
        %v732 = vld [vmem:[%s235 + $0x9d8] sm:$0xff]
        %v733 = vld [vmem:[%s235 + $0x9e0] sm:$0xff]
        %v734 = vld [vmem:[%s235 + $0x9e8] sm:$0xff]
        %v735 = vld [vmem:[%s235 + $0x9f0] sm:$0xff]
        %v736 = vld [vmem:[%s235 + $0x9f8] sm:$0xff]
        %v737 = vld [vmem:[%s235 + $0xa00] sm:$0xff]
        %v738 = vld [vmem:[%s235 + $0xa08] sm:$0xff]
        %v739 = vld [vmem:[%s235 + $0xa10] sm:$0xff]
        %v740 = vld [vmem:[%s235 + $0xa18] sm:$0xff]
        %v741 = vld [vmem:[%s235 + $0xa20] sm:$0xff]
        %v742 = vld [vmem:[%s235 + $0xa28] sm:$0xff]
        %v743 = vld [vmem:[%s235 + $0xa30] sm:$0xff]
        %v744 = vld [vmem:[%s235 + $0xa38] sm:$0xff]
        %v745 = vld [vmem:[%s235 + $0xa40] sm:$0xff]
        %v746 = vld [vmem:[%s235 + $0xa48] sm:$0xff]
        %v747 = vld [vmem:[%s235 + $0xa50] sm:$0xff]
        %v748 = vld [vmem:[%s235 + $0xa58] sm:$0xff]
        %v749 = vld [vmem:[%s235 + $0xa60] sm:$0xff]
        %v750 = vld [vmem:[%s235 + $0xa68] sm:$0xff]
        %v751 = vld [vmem:[%s235 + $0xa70] sm:$0xff]
        %v752 = vld [vmem:[%s235 + $0xa78] sm:$0xff]
        %v753 = vld [vmem:[%s235 + $0xa80] sm:$0xff]
        %v754 = vld [vmem:[%s235 + $0xa88] sm:$0xff]
        %v755 = vld [vmem:[%s235 + $0xa90] sm:$0xff]
        %v756 = vld [vmem:[%s235 + $0xa98] sm:$0xff]
        %v757 = vld [vmem:[%s235 + $0xaa0] sm:$0xff]
        %v758 = vld [vmem:[%s235 + $0xaa8] sm:$0xff]
        %v759 = vld [vmem:[%s235 + $0xab0] sm:$0xff]
        %v760 = vld [vmem:[%s235 + $0xab8] sm:$0xff]
        %v761 = vld [vmem:[%s235 + $0xac0] sm:$0xff]
        %v762 = vld [vmem:[%s235 + $0xac8] sm:$0xff]
        %v763 = vld [vmem:[%s235 + $0xad0] sm:$0xff]
        %v764 = vld [vmem:[%s235 + $0xad8] sm:$0xff]
        %v765 = vld [vmem:[%s235 + $0xae0] sm:$0xff]
        %v766 = vld [vmem:[%s235 + $0xae8] sm:$0xff]
        %v767 = vld [vmem:[%s235 + $0xaf0] sm:$0xff]
        %v768 = vld [vmem:[%s235 + $0xaf8] sm:$0xff]
        %v769 = vld [vmem:[%s235 + $0xb00] sm:$0xff]
        %v770 = vld [vmem:[%s235 + $0xb08] sm:$0xff]
        %v771 = vld [vmem:[%s235 + $0xb10] sm:$0xff]
        %v772 = vld [vmem:[%s235 + $0xb18] sm:$0xff]
        %v773 = vld [vmem:[%s235 + $0xb20] sm:$0xff]
        %v774 = vld [vmem:[%s235 + $0xb28] sm:$0xff]
        %v775 = vld [vmem:[%s235 + $0xb30] sm:$0xff]
        %v776 = vld [vmem:[%s235 + $0xb38] sm:$0xff]
        %v777 = vld [vmem:[%s235 + $0xb40] sm:$0xff]
        %v778 = vld [vmem:[%s235 + $0xb48] sm:$0xff]
        %v779 = vld [vmem:[%s235 + $0xb50] sm:$0xff]
        %v780 = vld [vmem:[%s235 + $0xb58] sm:$0xff]
        %v781 = vld [vmem:[%s235 + $0xb60] sm:$0xff]
        %v782 = vld [vmem:[%s235 + $0xb68] sm:$0xff]
        %v783 = vld [vmem:[%s235 + $0xb70] sm:$0xff]
        %v784 = vld [vmem:[%s235 + $0xb78] sm:$0xff]
        %v785 = vld [vmem:[%s235 + $0xb80] sm:$0xff]
        %v786 = vld [vmem:[%s235 + $0xb88] sm:$0xff]
        %v787 = vld [vmem:[%s235 + $0xb90] sm:$0xff]
        %v788 = vld [vmem:[%s235 + $0xb98] sm:$0xff]
        %v789 = vld [vmem:[%s235 + $0xba0] sm:$0xff]
        %v790 = vld [vmem:[%s235 + $0xba8] sm:$0xff]
        %v791 = vld [vmem:[%s235 + $0xbb0] sm:$0xff]
        %v792 = vld [vmem:[%s235 + $0xbb8] sm:$0xff]
        %v793 = vld [vmem:[%s235 + $0xbc0] sm:$0xff]
        %v794 = vld [vmem:[%s235 + $0xbc8] sm:$0xff]
        %v795 = vld [vmem:[%s235 + $0xbd0] sm:$0xff]
        %v796 = vld [vmem:[%s235 + $0xbd8] sm:$0xff]
        %v797 = vld [vmem:[%s235 + $0xbe0] sm:$0xff]
        %v798 = vld [vmem:[%s235 + $0xbe8] sm:$0xff]
        %v799 = vld [vmem:[%s235 + $0xbf0] sm:$0xff]
        %v800 = vld [vmem:[%s235 + $0xbf8] sm:$0xff]
        %v801 = vld [vmem:[%s235 + $0xc00] sm:$0xff]
        %v802 = vld [vmem:[%s235 + $0xc08] sm:$0xff]
        %v803 = vld [vmem:[%s235 + $0xc10] sm:$0xff]
        %v804 = vld [vmem:[%s235 + $0xc18] sm:$0xff]
        %v805 = vld [vmem:[%s235 + $0xc20] sm:$0xff]
        %v806 = vld [vmem:[%s235 + $0xc28] sm:$0xff]
        %v807 = vld [vmem:[%s235 + $0xc30] sm:$0xff]
        %v808 = vld [vmem:[%s235 + $0xc38] sm:$0xff]
        %v809 = vld [vmem:[%s235 + $0xc40] sm:$0xff]
        %v810 = vld [vmem:[%s235 + $0xc48] sm:$0xff]
        %v811 = vld [vmem:[%s235 + $0xc50] sm:$0xff]
        %v812 = vld [vmem:[%s235 + $0xc58] sm:$0xff]
        %v813 = vld [vmem:[%s235 + $0xc60] sm:$0xff]
        %v814 = vld [vmem:[%s235 + $0xc68] sm:$0xff]
        %v815 = vld [vmem:[%s235 + $0xc70] sm:$0xff]
        %v816 = vld [vmem:[%s235 + $0xc78] sm:$0xff]
        %v817 = vld [vmem:[%s235 + $0xc80] sm:$0xff]
        %v818 = vld [vmem:[%s235 + $0xc88] sm:$0xff]
        %v819 = vld [vmem:[%s235 + $0xc90] sm:$0xff]
        %v820 = vld [vmem:[%s235 + $0xc98] sm:$0xff]
        %v821 = vld [vmem:[%s235 + $0xca0] sm:$0xff]
        %v822 = vld [vmem:[%s235 + $0xca8] sm:$0xff]
        %v823 = vld [vmem:[%s235 + $0xcb0] sm:$0xff]
        %v824 = vld [vmem:[%s235 + $0xcb8] sm:$0xff]
        %v825 = vld [vmem:[%s235 + $0xcc0] sm:$0xff]
        %v826 = vld [vmem:[%s235 + $0xcc8] sm:$0xff]
        %v827 = vld [vmem:[%s235 + $0xcd0] sm:$0xff]
        %v828 = vld [vmem:[%s235 + $0xcd8] sm:$0xff]
        %v829 = vld [vmem:[%s235 + $0xce0] sm:$0xff]
        %v830 = vld [vmem:[%s235 + $0xce8] sm:$0xff]
        %v831 = vld [vmem:[%s235 + $0xcf0] sm:$0xff]
        %v832 = vld [vmem:[%s235 + $0xcf8] sm:$0xff]
        %v833 = vld [vmem:[%s235 + $0xd00] sm:$0xff]
        %v834 = vld [vmem:[%s235 + $0xd08] sm:$0xff]
        %v835 = vld [vmem:[%s235 + $0xd10] sm:$0xff]
        %v836 = vld [vmem:[%s235 + $0xd18] sm:$0xff]
        %v837 = vld [vmem:[%s235 + $0xd20] sm:$0xff]
        %v838 = vld [vmem:[%s235 + $0xd28] sm:$0xff]
        %v839 = vld [vmem:[%s235 + $0xd30] sm:$0xff]
        %v840 = vld [vmem:[%s235 + $0xd38] sm:$0xff]
        %v841 = vld [vmem:[%s235 + $0xd40] sm:$0xff]
        %v842 = vld [vmem:[%s235 + $0xd48] sm:$0xff]
        %v843 = vld [vmem:[%s235 + $0xd50] sm:$0xff]
        %v844 = vld [vmem:[%s235 + $0xd58] sm:$0xff]
        %v845 = vld [vmem:[%s235 + $0xd60] sm:$0xff]
        %v846 = vld [vmem:[%s235 + $0xd68] sm:$0xff]
        %v847 = vld [vmem:[%s235 + $0xd70] sm:$0xff]
        %v848 = vld [vmem:[%s235 + $0xd78] sm:$0xff]
        %v849 = vld [vmem:[%s235 + $0xd80] sm:$0xff]
        %v850 = vld [vmem:[%s235 + $0xd88] sm:$0xff]
        %v851 = vld [vmem:[%s235 + $0xd90] sm:$0xff]
        %v852 = vld [vmem:[%s235 + $0xd98] sm:$0xff]
        %v853 = vld [vmem:[%s235 + $0xda0] sm:$0xff]
        %v854 = vld [vmem:[%s235 + $0xda8] sm:$0xff]
        %v855 = vld [vmem:[%s235 + $0xdb0] sm:$0xff]
        %v856 = vld [vmem:[%s235 + $0xdb8] sm:$0xff]
        %v857 = vld [vmem:[%s235 + $0xdc0] sm:$0xff]
        %v858 = vld [vmem:[%s235 + $0xdc8] sm:$0xff]
        %v859 = vld [vmem:[%s235 + $0xdd0] sm:$0xff]
        %v860 = vld [vmem:[%s235 + $0xdd8] sm:$0xff]
        %v861 = vld [vmem:[%s235 + $0xde0] sm:$0xff]
        %v862 = vld [vmem:[%s235 + $0xde8] sm:$0xff]
        %v863 = vld [vmem:[%s235 + $0xdf0] sm:$0xff]
        %v864 = vld [vmem:[%s235 + $0xdf8] sm:$0xff]
        %v865 = vld [vmem:[%s235 + $0xe00] sm:$0xff]
        %v866 = vld [vmem:[%s235 + $0xe08] sm:$0xff]
        %v867 = vld [vmem:[%s235 + $0xe10] sm:$0xff]
        %v868 = vld [vmem:[%s235 + $0xe18] sm:$0xff]
        %v869 = vld [vmem:[%s235 + $0xe20] sm:$0xff]
        %v870 = vld [vmem:[%s235 + $0xe28] sm:$0xff]
        %v871 = vld [vmem:[%s235 + $0xe30] sm:$0xff]
        %v872 = vld [vmem:[%s235 + $0xe38] sm:$0xff]
        %v873 = vld [vmem:[%s235 + $0xe40] sm:$0xff]
        %v874 = vld [vmem:[%s235 + $0xe48] sm:$0xff]
        %v875 = vld [vmem:[%s235 + $0xe50] sm:$0xff]
        %v876 = vld [vmem:[%s235 + $0xe58] sm:$0xff]
        %v877 = vld [vmem:[%s235 + $0xe60] sm:$0xff]
        %v878 = vld [vmem:[%s235 + $0xe68] sm:$0xff]
        %v879 = vld [vmem:[%s235 + $0xe70] sm:$0xff]
        %v880 = vld [vmem:[%s235 + $0xe78] sm:$0xff]
        %v881 = vld [vmem:[%s235 + $0xe80] sm:$0xff]
        %v882 = vld [vmem:[%s235 + $0xe88] sm:$0xff]
        %v883 = vld [vmem:[%s235 + $0xe90] sm:$0xff]
        %v884 = vld [vmem:[%s235 + $0xe98] sm:$0xff]
        %v885 = vld [vmem:[%s235 + $0xea0] sm:$0xff]
        %v886 = vld [vmem:[%s235 + $0xea8] sm:$0xff]
        %v887 = vld [vmem:[%s235 + $0xeb0] sm:$0xff]
        %v888 = vld [vmem:[%s235 + $0xeb8] sm:$0xff]
        %v889 = vld [vmem:[%s235 + $0xec0] sm:$0xff]
        %v890 = vld [vmem:[%s235 + $0xec8] sm:$0xff]
        %v891 = vld [vmem:[%s235 + $0xed0] sm:$0xff]
        %v892 = vld [vmem:[%s235 + $0xed8] sm:$0xff]
        %v893 = vld [vmem:[%s235 + $0xee0] sm:$0xff]
        %v894 = vld [vmem:[%s235 + $0xee8] sm:$0xff]
        %v895 = vld [vmem:[%s235 + $0xef0] sm:$0xff]
        %v896 = vld [vmem:[%s235 + $0xef8] sm:$0xff]
        %v897 = vld [vmem:[%s235 + $0xf00] sm:$0xff]
        %v898 = vld [vmem:[%s235 + $0xf08] sm:$0xff]
        %v899 = vld [vmem:[%s235 + $0xf10] sm:$0xff]
        %v900 = vld [vmem:[%s235 + $0xf18] sm:$0xff]
        %v901 = vld [vmem:[%s235 + $0xf20] sm:$0xff]
        %v902 = vld [vmem:[%s235 + $0xf28] sm:$0xff]
        %v903 = vld [vmem:[%s235 + $0xf30] sm:$0xff]
        %v904 = vld [vmem:[%s235 + $0xf38] sm:$0xff]
        %v905 = vld [vmem:[%s235 + $0xf40] sm:$0xff]
        %v906 = vld [vmem:[%s235 + $0xf48] sm:$0xff]
        %v907 = vld [vmem:[%s235 + $0xf50] sm:$0xff]
        %v908 = vld [vmem:[%s235 + $0xf58] sm:$0xff]
        %v909 = vld [vmem:[%s235 + $0xf60] sm:$0xff]
        %v910 = vld [vmem:[%s235 + $0xf68] sm:$0xff]
        %v911 = vld [vmem:[%s235 + $0xf70] sm:$0xff]
        %v912 = vld [vmem:[%s235 + $0xf78] sm:$0xff]
        %v913 = vld [vmem:[%s235 + $0xf80] sm:$0xff]
        %v914 = vld [vmem:[%s235 + $0xf88] sm:$0xff]
        %v915 = vld [vmem:[%s235 + $0xf90] sm:$0xff]
        %v916 = vld [vmem:[%s235 + $0xf98] sm:$0xff]
        %v917 = vld [vmem:[%s235 + $0xfa0] sm:$0xff]
        %v918 = vld [vmem:[%s235 + $0xfa8] sm:$0xff]
        %v919 = vld [vmem:[%s235 + $0xfb0] sm:$0xff]
        %v920 = vld [vmem:[%s235 + $0xfb8] sm:$0xff]
        %v921 = vld [vmem:[%s235 + $0xfc0] sm:$0xff]
        %v922 = vld [vmem:[%s235 + $0xfc8] sm:$0xff]
        %v923 = vld [vmem:[%s235 + $0xfd0] sm:$0xff]
        %v924 = vld [vmem:[%s235 + $0xfd8] sm:$0xff]
        %v925 = vld [vmem:[%s235 + $0xfe0] sm:$0xff]
        %v926 = vld [vmem:[%s235 + $0xfe8] sm:$0xff]
        %v927 = vld [vmem:[%s235 + $0xff0] sm:$0xff]
        %v928 = vld [vmem:[%s235 + $0xff8] sm:$0xff]
        %v929 = vld [vmem:[%s235 + $0x1000] sm:$0xff]
        %v930 = vld [vmem:[%s235 + $0x1008] sm:$0xff]
        %v931 = vld [vmem:[%s235 + $0x1010] sm:$0xff]
        %v932 = vld [vmem:[%s235 + $0x1018] sm:$0xff]
        %v933 = vld [vmem:[%s235 + $0x1020] sm:$0xff]
        %v934 = vld [vmem:[%s235 + $0x1028] sm:$0xff]
        %v935 = vld [vmem:[%s235 + $0x1030] sm:$0xff]
        %v936 = vld [vmem:[%s235 + $0x1038] sm:$0xff]
        %v937 = vld [vmem:[%s235 + $0x1040] sm:$0xff]
        %v938 = vld [vmem:[%s235 + $0x1048] sm:$0xff]
        %v939 = vld [vmem:[%s235 + $0x1050] sm:$0xff]
        %v940 = vld [vmem:[%s235 + $0x1058] sm:$0xff]
        %v941 = vld [vmem:[%s235 + $0x1060] sm:$0xff]
        %v942 = vld [vmem:[%s235 + $0x1068] sm:$0xff]
        %v943 = vld [vmem:[%s235 + $0x1070] sm:$0xff]
        %v944 = vld [vmem:[%s235 + $0x1078] sm:$0xff]
        %v945 = vld [vmem:[%s235 + $0x1080] sm:$0xff]
        %v946 = vld [vmem:[%s235 + $0x1088] sm:$0xff]
        %v947 = vld [vmem:[%s235 + $0x1090] sm:$0xff]
        %v948 = vld [vmem:[%s235 + $0x1098] sm:$0xff]
        %v949 = vld [vmem:[%s235 + $0x10a0] sm:$0xff]
        %v950 = vld [vmem:[%s235 + $0x10a8] sm:$0xff]
        %v951 = vld [vmem:[%s235 + $0x10b0] sm:$0xff]
        %v952 = vld [vmem:[%s235 + $0x10b8] sm:$0xff]
        %v953 = vld [vmem:[%s235 + $0x10c0] sm:$0xff]
        %v954 = vld [vmem:[%s235 + $0x10c8] sm:$0xff]
        %v955 = vld [vmem:[%s235 + $0x10d0] sm:$0xff]
        %v956 = vld [vmem:[%s235 + $0x10d8] sm:$0xff]
        %v957 = vld [vmem:[%s235 + $0x10e0] sm:$0xff]
        %v958 = vld [vmem:[%s235 + $0x10e8] sm:$0xff]
        %v959 = vld [vmem:[%s235 + $0x10f0] sm:$0xff]
        %v960 = vld [vmem:[%s235 + $0x10f8] sm:$0xff]
        %v961 = vld [vmem:[%s235 + $0x1100] sm:$0xff]
        %v962 = vld [vmem:[%s235 + $0x1108] sm:$0xff]
        %v963 = vld [vmem:[%s235 + $0x1110] sm:$0xff]
        %v964 = vld [vmem:[%s235 + $0x1118] sm:$0xff]
        %v965 = vld [vmem:[%s235 + $0x1120] sm:$0xff]
        %v966 = vld [vmem:[%s235 + $0x1128] sm:$0xff]
        %v967 = vld [vmem:[%s235 + $0x1130] sm:$0xff]
        %v968 = vld [vmem:[%s235 + $0x1138] sm:$0xff]
        %v969 = vld [vmem:[%s235 + $0x1140] sm:$0xff]
        %v970 = vld [vmem:[%s235 + $0x1148] sm:$0xff]
        %v971 = vld [vmem:[%s235 + $0x1150] sm:$0xff]
        %v972 = vld [vmem:[%s235 + $0x1158] sm:$0xff]
        %v973 = vld [vmem:[%s235 + $0x1160] sm:$0xff]
        %v974 = vld [vmem:[%s235 + $0x1168] sm:$0xff]
        %v975 = vld [vmem:[%s235 + $0x1170] sm:$0xff]
        %v976 = vld [vmem:[%s235 + $0x1178] sm:$0xff]
        %v977 = vld [vmem:[%s235 + $0x1180] sm:$0xff]
        %v978 = vld [vmem:[%s235 + $0x1188] sm:$0xff]
        %v979 = vld [vmem:[%s235 + $0x1190] sm:$0xff]
        %v980 = vld [vmem:[%s235 + $0x1198] sm:$0xff]
        %v981 = vld [vmem:[%s235 + $0x11a0] sm:$0xff]
        %v982 = vld [vmem:[%s235 + $0x11a8] sm:$0xff]
        %v983 = vld [vmem:[%s235 + $0x11b0] sm:$0xff]
        %v984 = vld [vmem:[%s235 + $0x11b8] sm:$0xff]
        %v985 = vld [vmem:[%s235 + $0x11c0] sm:$0xff]
        %v986 = vld [vmem:[%s235 + $0x11c8] sm:$0xff]
        %v987 = vld [vmem:[%s235 + $0x11d0] sm:$0xff]
        %v988 = vld [vmem:[%s235 + $0x11d8] sm:$0xff]
        %v989 = vld [vmem:[%s235 + $0x11e0] sm:$0xff]
        %v990 = vld [vmem:[%s235 + $0x11e8] sm:$0xff]
        %v991 = vld [vmem:[%s235 + $0x11f0] sm:$0xff]
        %v992 = vld [vmem:[%s235 + $0x11f8] sm:$0xff]
        %v993 = vld [vmem:[%s235 + $0x1200] sm:$0xff]
        %v994 = vld [vmem:[%s235 + $0x1208] sm:$0xff]
        %v995 = vld [vmem:[%s235 + $0x1210] sm:$0xff]
        %v996 = vld [vmem:[%s235 + $0x1218] sm:$0xff]
        %v997 = vld [vmem:[%s235 + $0x1220] sm:$0xff]
        %v998 = vld [vmem:[%s235 + $0x1228] sm:$0xff]
        %v999 = vld [vmem:[%s235 + $0x1230] sm:$0xff]
        %v1000 = vld [vmem:[%s235 + $0x1238] sm:$0xff]
        %v1001 = vld [vmem:[%s235 + $0x1240] sm:$0xff]
        %v1002 = vld [vmem:[%s235 + $0x1248] sm:$0xff]
        %v1003 = vld [vmem:[%s235 + $0x1250] sm:$0xff]
        %v1004 = vld [vmem:[%s235 + $0x1258] sm:$0xff]
        %v1005 = vld [vmem:[%s235 + $0x1260] sm:$0xff]
        %v1006 = vld [vmem:[%s235 + $0x1268] sm:$0xff]
        %v1007 = vld [vmem:[%s235 + $0x1270] sm:$0xff]
        %v1008 = vld [vmem:[%s235 + $0x1278] sm:$0xff]
        %v1009 = vld [vmem:[%s235 + $0x1280] sm:$0xff]
        %v1010 = vld [vmem:[%s235 + $0x1288] sm:$0xff]
        %v1011 = vld [vmem:[%s235 + $0x1290] sm:$0xff]
        %v1012 = vld [vmem:[%s235 + $0x1298] sm:$0xff]
        %v1013 = vld [vmem:[%s235 + $0x12a0] sm:$0xff]
        %v1014 = vld [vmem:[%s235 + $0x12a8] sm:$0xff]
        %v1015 = vld [vmem:[%s235 + $0x12b0] sm:$0xff]
        %v1016 = vld [vmem:[%s235 + $0x12b8] sm:$0xff]
        %v1017 = vld [vmem:[%s235 + $0x12c0] sm:$0xff]
        %v1018 = vld [vmem:[%s235 + $0x12c8] sm:$0xff]
        %v1019 = vld [vmem:[%s235 + $0x12d0] sm:$0xff]
        %v1020 = vld [vmem:[%s235 + $0x12d8] sm:$0xff]
        %v1021 = vld [vmem:[%s235 + $0x12e0] sm:$0xff]
        %v1022 = vld [vmem:[%s235 + $0x12e8] sm:$0xff]
        %v1023 = vld [vmem:[%s235 + $0x12f0] sm:$0xff]
        %v1024 = vld [vmem:[%s235 + $0x12f8] sm:$0xff]
        %v1025 = vld [vmem:[%s235 + $0x1300] sm:$0xff]
        %v1026 = vld [vmem:[%s235 + $0x1308] sm:$0xff]
        %v1027 = vld [vmem:[%s235 + $0x1310] sm:$0xff]
        %v1028 = vld [vmem:[%s235 + $0x1318] sm:$0xff]
        %v1029 = vld [vmem:[%s235 + $0x1320] sm:$0xff]
        %v1030 = vld [vmem:[%s235 + $0x1328] sm:$0xff]
        %v1031 = vld [vmem:[%s235 + $0x1330] sm:$0xff]
        %v1032 = vld [vmem:[%s235 + $0x1338] sm:$0xff]
        %v1033 = vld [vmem:[%s235 + $0x1340] sm:$0xff]
        %v1034 = vld [vmem:[%s235 + $0x1348] sm:$0xff]
        %v1035 = vld [vmem:[%s235 + $0x1350] sm:$0xff]
        %v1036 = vld [vmem:[%s235 + $0x1358] sm:$0xff]
        %v1037 = vld [vmem:[%s235 + $0x1360] sm:$0xff]
        %v1038 = vld [vmem:[%s235 + $0x1368] sm:$0xff]
        %v1039 = vld [vmem:[%s235 + $0x1370] sm:$0xff]
        %v1040 = vld [vmem:[%s235 + $0x1378] sm:$0xff]
        %v1041 = vld [vmem:[%s235 + $0x1380] sm:$0xff]
        %v1042 = vld [vmem:[%s235 + $0x1388] sm:$0xff]
        %v1043 = vld [vmem:[%s235 + $0x1390] sm:$0xff]
        %v1044 = vld [vmem:[%s235 + $0x1398] sm:$0xff]
        %v1045 = vld [vmem:[%s235 + $0x13a0] sm:$0xff]
        %v1046 = vld [vmem:[%s235 + $0x13a8] sm:$0xff]
        %v1047 = vld [vmem:[%s235 + $0x13b0] sm:$0xff]
        %v1048 = vld [vmem:[%s235 + $0x13b8] sm:$0xff]
        %v1049 = vld [vmem:[%s235 + $0x13c0] sm:$0xff]
        %v1050 = vld [vmem:[%s235 + $0x13c8] sm:$0xff]
        %v1051 = vld [vmem:[%s235 + $0x13d0] sm:$0xff]
        %v1052 = vld [vmem:[%s235 + $0x13d8] sm:$0xff]
        %v1053 = vld [vmem:[%s235 + $0x13e0] sm:$0xff]
        %v1054 = vld [vmem:[%s235 + $0x13e8] sm:$0xff]
        %v1055 = vld [vmem:[%s235 + $0x13f0] sm:$0xff]
        %v1056 = vld [vmem:[%s235 + $0x13f8] sm:$0xff]
        %v1057 = vld [vmem:[%s235 + $0x1400] sm:$0xff]
        %v1058 = vld [vmem:[%s235 + $0x1408] sm:$0xff]
        %v1059 = vld [vmem:[%s235 + $0x1410] sm:$0xff]
        %v1060 = vld [vmem:[%s235 + $0x1418] sm:$0xff]
        %v1061 = vld [vmem:[%s235 + $0x1420] sm:$0xff]
        %v1062 = vld [vmem:[%s235 + $0x1428] sm:$0xff]
        %v1063 = vld [vmem:[%s235 + $0x1430] sm:$0xff]
        %v1064 = vld [vmem:[%s235 + $0x1438] sm:$0xff]
        %v1065 = vld [vmem:[%s235 + $0x1440] sm:$0xff]
        %v1066 = vld [vmem:[%s235 + $0x1448] sm:$0xff]
        %v1067 = vld [vmem:[%s235 + $0x1450] sm:$0xff]
        %v1068 = vld [vmem:[%s235 + $0x1458] sm:$0xff]
        %v1069 = vld [vmem:[%s235 + $0x1460] sm:$0xff]
        %v1070 = vld [vmem:[%s235 + $0x1468] sm:$0xff]
        %v1071 = vld [vmem:[%s235 + $0x1470] sm:$0xff]
        %v1072 = vld [vmem:[%s235 + $0x1478] sm:$0xff]
        %v1073 = vld [vmem:[%s235 + $0x1480] sm:$0xff]
        %v1074 = vld [vmem:[%s235 + $0x1488] sm:$0xff]
        %v1075 = vld [vmem:[%s235 + $0x1490] sm:$0xff]
        %v1076 = vld [vmem:[%s235 + $0x1498] sm:$0xff]
        %v1077 = vld [vmem:[%s235 + $0x14a0] sm:$0xff]
        %v1078 = vld [vmem:[%s235 + $0x14a8] sm:$0xff]
        %v1079 = vld [vmem:[%s235 + $0x14b0] sm:$0xff]
        %v1080 = vld [vmem:[%s235 + $0x14b8] sm:$0xff]
        %v1081 = vld [vmem:[%s235 + $0x14c0] sm:$0xff]
        %v1082 = vld [vmem:[%s235 + $0x14c8] sm:$0xff]
        %v1083 = vld [vmem:[%s235 + $0x14d0] sm:$0xff]
        %v1084 = vld [vmem:[%s235 + $0x14d8] sm:$0xff]
        %v1085 = vld [vmem:[%s235 + $0x14e0] sm:$0xff]
        %v1086 = vld [vmem:[%s235 + $0x14e8] sm:$0xff]
        %v1087 = vld [vmem:[%s235 + $0x14f0] sm:$0xff]
        %v1088 = vld [vmem:[%s235 + $0x14f8] sm:$0xff]
        %v1089 = vld [vmem:[%s235 + $0x1500] sm:$0xff]
        %v1090 = vld [vmem:[%s235 + $0x1508] sm:$0xff]
        %v1091 = vld [vmem:[%s235 + $0x1510] sm:$0xff]
        %v1092 = vld [vmem:[%s235 + $0x1518] sm:$0xff]
        %v1093 = vld [vmem:[%s235 + $0x1520] sm:$0xff]
        %v1094 = vld [vmem:[%s235 + $0x1528] sm:$0xff]
        %v1095 = vld [vmem:[%s235 + $0x1530] sm:$0xff]
        %v1096 = vld [vmem:[%s235 + $0x1538] sm:$0xff]
        %v1097 = vld [vmem:[%s235 + $0x1540] sm:$0xff]
        %v1098 = vld [vmem:[%s235 + $0x1548] sm:$0xff]
        %v1099 = vld [vmem:[%s235 + $0x1550] sm:$0xff]
        %v1100 = vld [vmem:[%s235 + $0x1558] sm:$0xff]
        %v1101 = vld [vmem:[%s235 + $0x1560] sm:$0xff]
        %v1102 = vld [vmem:[%s235 + $0x1568] sm:$0xff]
        %v1103 = vld [vmem:[%s235 + $0x1570] sm:$0xff]
        %v1104 = vld [vmem:[%s235 + $0x1578] sm:$0xff]
        %v1105 = vld [vmem:[%s235 + $0x1580] sm:$0xff]
        %v1106 = vld [vmem:[%s235 + $0x1588] sm:$0xff]
        %v1107 = vld [vmem:[%s235 + $0x1590] sm:$0xff]
        %v1108 = vld [vmem:[%s235 + $0x1598] sm:$0xff]
        %v1109 = vld [vmem:[%s235 + $0x15a0] sm:$0xff]
        %v1110 = vld [vmem:[%s235 + $0x15a8] sm:$0xff]
        %v1111 = vld [vmem:[%s235 + $0x15b0] sm:$0xff]
        %v1112 = vld [vmem:[%s235 + $0x15b8] sm:$0xff]
        %v1113 = vld [vmem:[%s235 + $0x15c0] sm:$0xff]
        %v1114 = vld [vmem:[%s235 + $0x15c8] sm:$0xff]
        %v1115 = vld [vmem:[%s235 + $0x15d0] sm:$0xff]
        %v1116 = vld [vmem:[%s235 + $0x15d8] sm:$0xff]
        %v1117 = vld [vmem:[%s235 + $0x15e0] sm:$0xff]
        %v1118 = vld [vmem:[%s235 + $0x15e8] sm:$0xff]
        %v1119 = vld [vmem:[%s235 + $0x15f0] sm:$0xff]
        %v1120 = vld [vmem:[%s235 + $0x15f8] sm:$0xff]
        %v1121 = vld [vmem:[%s235 + $0x1600] sm:$0xff]
        %v1122 = vld [vmem:[%s235 + $0x1608] sm:$0xff]
        %v1123 = vld [vmem:[%s235 + $0x1610] sm:$0xff]
        %v1124 = vld [vmem:[%s235 + $0x1618] sm:$0xff]
        %v1125 = vld [vmem:[%s235 + $0x1620] sm:$0xff]
        %v1126 = vld [vmem:[%s235 + $0x1628] sm:$0xff]
        %v1127 = vld [vmem:[%s235 + $0x1630] sm:$0xff]
        %v1128 = vld [vmem:[%s235 + $0x1638] sm:$0xff]
        %v1129 = vld [vmem:[%s235 + $0x1640] sm:$0xff]
        %v1130 = vld [vmem:[%s235 + $0x1648] sm:$0xff]
        %v1131 = vld [vmem:[%s235 + $0x1650] sm:$0xff]
        %v1132 = vld [vmem:[%s235 + $0x1658] sm:$0xff]
        %v1133 = vld [vmem:[%s235 + $0x1660] sm:$0xff]
        %v1134 = vld [vmem:[%s235 + $0x1668] sm:$0xff]
        %v1135 = vld [vmem:[%s235 + $0x1670] sm:$0xff]
        %v1136 = vld [vmem:[%s235 + $0x1678] sm:$0xff]
        %v1137 = vld [vmem:[%s235 + $0x1680] sm:$0xff]
        %v1138 = vld [vmem:[%s235 + $0x1688] sm:$0xff]
        %v1139 = vld [vmem:[%s235 + $0x1690] sm:$0xff]
        %v1140 = vld [vmem:[%s235 + $0x1698] sm:$0xff]
        %v1141 = vld [vmem:[%s235 + $0x16a0] sm:$0xff]
        %v1142 = vld [vmem:[%s235 + $0x16a8] sm:$0xff]
        %v1143 = vld [vmem:[%s235 + $0x16b0] sm:$0xff]
        %v1144 = vld [vmem:[%s235 + $0x16b8] sm:$0xff]
        %v1145 = vld [vmem:[%s235 + $0x16c0] sm:$0xff]
        %v1146 = vld [vmem:[%s235 + $0x16c8] sm:$0xff]
        %v1147 = vld [vmem:[%s235 + $0x16d0] sm:$0xff]
        %v1148 = vld [vmem:[%s235 + $0x16d8] sm:$0xff]
        %v1149 = vld [vmem:[%s235 + $0x16e0] sm:$0xff]
        %v1150 = vld [vmem:[%s235 + $0x16e8] sm:$0xff]
        %v1151 = vld [vmem:[%s235 + $0x16f0] sm:$0xff]
        %v1152 = vld [vmem:[%s235 + $0x16f8] sm:$0xff]
        %v1153 = vld [vmem:[%s235 + $0x1700] sm:$0xff]
        %v1154 = vld [vmem:[%s235 + $0x1708] sm:$0xff]
        %v1155 = vld [vmem:[%s235 + $0x1710] sm:$0xff]
        %v1156 = vld [vmem:[%s235 + $0x1718] sm:$0xff]
        %v1157 = vld [vmem:[%s235 + $0x1720] sm:$0xff]
        %v1158 = vld [vmem:[%s235 + $0x1728] sm:$0xff]
        %v1159 = vld [vmem:[%s235 + $0x1730] sm:$0xff]
        %v1160 = vld [vmem:[%s235 + $0x1738] sm:$0xff]
        %v1161 = vld [vmem:[%s235 + $0x1740] sm:$0xff]
        %v1162 = vld [vmem:[%s235 + $0x1748] sm:$0xff]
        %v1163 = vld [vmem:[%s235 + $0x1750] sm:$0xff]
        %v1164 = vld [vmem:[%s235 + $0x1758] sm:$0xff]
        %v1165 = vld [vmem:[%s235 + $0x1760] sm:$0xff]
        %v1166 = vld [vmem:[%s235 + $0x1768] sm:$0xff]
        %v1167 = vld [vmem:[%s235 + $0x1770] sm:$0xff]
        %v1168 = vld [vmem:[%s235 + $0x1778] sm:$0xff]
        %v1169 = vld [vmem:[%s235 + $0x1780] sm:$0xff]
        %v1170 = vld [vmem:[%s235 + $0x1788] sm:$0xff]
        %v1171 = vld [vmem:[%s235 + $0x1790] sm:$0xff]
        %v1172 = vld [vmem:[%s235 + $0x1798] sm:$0xff]
        %v1173 = vld [vmem:[%s235 + $0x17a0] sm:$0xff]
        %v1174 = vld [vmem:[%s235 + $0x17a8] sm:$0xff]
        %v1175 = vld [vmem:[%s235 + $0x17b0] sm:$0xff]
        %v1176 = vld [vmem:[%s235 + $0x17b8] sm:$0xff]
        %v1177 = vld [vmem:[%s235 + $0x17c0] sm:$0xff]
        %v1178 = vld [vmem:[%s235 + $0x17c8] sm:$0xff]
        %v1179 = vld [vmem:[%s235 + $0x17d0] sm:$0xff]
        %v1180 = vld [vmem:[%s235 + $0x17d8] sm:$0xff]
        %v1181 = vld [vmem:[%s235 + $0x17e0] sm:$0xff]
        %v1182 = vld [vmem:[%s235 + $0x17e8] sm:$0xff]
        %v1183 = vld [vmem:[%s235 + $0x17f0] sm:$0xff]
        %v1184 = vld [vmem:[%s235 + $0x17f8] sm:$0xff]
        %v1953 = vunpack.c.l.b16 %v417
        %v1954 = vunpack.c.h.b16 %v417
        %v1955 = vunpack.c.l.b16 %v418
        %v1956 = vunpack.c.h.b16 %v418
        %v1957 = vunpack.c.l.b16 %v419
        %v1958 = vunpack.c.h.b16 %v419
        %v1959 = vunpack.c.l.b16 %v420
        %v1960 = vunpack.c.h.b16 %v420
        %v1961 = vunpack.c.l.b16 %v421
        %v1962 = vunpack.c.h.b16 %v421
        %v1963 = vunpack.c.l.b16 %v422
        %v1964 = vunpack.c.h.b16 %v422
        %v1965 = vunpack.c.l.b16 %v423
        %v1966 = vunpack.c.h.b16 %v423
        %v1967 = vunpack.c.l.b16 %v424
        %v1968 = vunpack.c.h.b16 %v424
        %v1969 = vunpack.c.l.b16 %v425
        %v1970 = vunpack.c.h.b16 %v425
        %v1971 = vunpack.c.l.b16 %v426
        %v1972 = vunpack.c.h.b16 %v426
        %v1973 = vunpack.c.l.b16 %v427
        %v1974 = vunpack.c.h.b16 %v427
        %v1975 = vunpack.c.l.b16 %v428
        %v1976 = vunpack.c.h.b16 %v428
        %v1977 = vunpack.c.l.b16 %v429
        %v1978 = vunpack.c.h.b16 %v429
        %v1979 = vunpack.c.l.b16 %v430
        %v1980 = vunpack.c.h.b16 %v430
        %v1981 = vunpack.c.l.b16 %v431
        %v1982 = vunpack.c.h.b16 %v431
        %v1983 = vunpack.c.l.b16 %v432
        %v1984 = vunpack.c.h.b16 %v432
        %v1985 = vunpack.c.l.b16 %v433
        %v1986 = vunpack.c.h.b16 %v433
        %v1987 = vunpack.c.l.b16 %v434
        %v1988 = vunpack.c.h.b16 %v434
        %v1989 = vunpack.c.l.b16 %v435
        %v1990 = vunpack.c.h.b16 %v435
        %v1991 = vunpack.c.l.b16 %v436
        %v1992 = vunpack.c.h.b16 %v436
        %v1993 = vunpack.c.l.b16 %v437
        %v1994 = vunpack.c.h.b16 %v437
        %v1995 = vunpack.c.l.b16 %v438
        %v1996 = vunpack.c.h.b16 %v438
        %v1997 = vunpack.c.l.b16 %v439
        %v1998 = vunpack.c.h.b16 %v439
        %v1999 = vunpack.c.l.b16 %v440
        %v2000 = vunpack.c.h.b16 %v440
        %v2001 = vunpack.c.l.b16 %v441
        %v2002 = vunpack.c.h.b16 %v441
        %v2003 = vunpack.c.l.b16 %v442
        %v2004 = vunpack.c.h.b16 %v442
        %v2005 = vunpack.c.l.b16 %v443
        %v2006 = vunpack.c.h.b16 %v443
        %v2007 = vunpack.c.l.b16 %v444
        %v2008 = vunpack.c.h.b16 %v444
        %v2009 = vunpack.c.l.b16 %v445
        %v2010 = vunpack.c.h.b16 %v445
        %v2011 = vunpack.c.l.b16 %v446
        %v2012 = vunpack.c.h.b16 %v446
        %v2013 = vunpack.c.l.b16 %v447
        %v2014 = vunpack.c.h.b16 %v447
        %v2015 = vunpack.c.l.b16 %v448
        %v2016 = vunpack.c.h.b16 %v448
        %v2017 = vunpack.c.l.b16 %v449
        %v2018 = vunpack.c.h.b16 %v449
        %v2019 = vunpack.c.l.b16 %v450
        %v2020 = vunpack.c.h.b16 %v450
        %v2021 = vunpack.c.l.b16 %v451
        %v2022 = vunpack.c.h.b16 %v451
        %v2023 = vunpack.c.l.b16 %v452
        %v2024 = vunpack.c.h.b16 %v452
        %v2025 = vunpack.c.l.b16 %v453
        %v2026 = vunpack.c.h.b16 %v453
        %v2027 = vunpack.c.l.b16 %v454
        %v2028 = vunpack.c.h.b16 %v454
        %v2029 = vunpack.c.l.b16 %v455
        %v2030 = vunpack.c.h.b16 %v455
        %v2031 = vunpack.c.l.b16 %v456
        %v2032 = vunpack.c.h.b16 %v456
        %v2033 = vunpack.c.l.b16 %v457
        %v2034 = vunpack.c.h.b16 %v457
        %v2035 = vunpack.c.l.b16 %v458
        %v2036 = vunpack.c.h.b16 %v458
        %v2037 = vunpack.c.l.b16 %v459
        %v2038 = vunpack.c.h.b16 %v459
        %v2039 = vunpack.c.l.b16 %v460
        %v2040 = vunpack.c.h.b16 %v460
        %v2041 = vunpack.c.l.b16 %v461
        %v2042 = vunpack.c.h.b16 %v461
        %v2043 = vunpack.c.l.b16 %v462
        %v2044 = vunpack.c.h.b16 %v462
        %v2045 = vunpack.c.l.b16 %v463
        %v2046 = vunpack.c.h.b16 %v463
        %v2047 = vunpack.c.l.b16 %v464
        %v2048 = vunpack.c.h.b16 %v464
        %v2049 = vunpack.c.l.b16 %v465
        %v2050 = vunpack.c.h.b16 %v465
        %v2051 = vunpack.c.l.b16 %v466
        %v2052 = vunpack.c.h.b16 %v466
        %v2053 = vunpack.c.l.b16 %v467
        %v2054 = vunpack.c.h.b16 %v467
        %v2055 = vunpack.c.l.b16 %v468
        %v2056 = vunpack.c.h.b16 %v468
        %v2057 = vunpack.c.l.b16 %v469
        %v2058 = vunpack.c.h.b16 %v469
        %v2059 = vunpack.c.l.b16 %v470
        %v2060 = vunpack.c.h.b16 %v470
        %v2061 = vunpack.c.l.b16 %v471
        %v2062 = vunpack.c.h.b16 %v471
        %v2063 = vunpack.c.l.b16 %v472
        %v2064 = vunpack.c.h.b16 %v472
        %v2065 = vunpack.c.l.b16 %v473
        %v2066 = vunpack.c.h.b16 %v473
        %v2067 = vunpack.c.l.b16 %v474
        %v2068 = vunpack.c.h.b16 %v474
        %v2069 = vunpack.c.l.b16 %v475
        %v2070 = vunpack.c.h.b16 %v475
        %v2071 = vunpack.c.l.b16 %v476
        %v2072 = vunpack.c.h.b16 %v476
        %v2073 = vunpack.c.l.b16 %v477
        %v2074 = vunpack.c.h.b16 %v477
        %v2075 = vunpack.c.l.b16 %v478
        %v2076 = vunpack.c.h.b16 %v478
        %v2077 = vunpack.c.l.b16 %v479
        %v2078 = vunpack.c.h.b16 %v479
        %v2079 = vunpack.c.l.b16 %v480
        %v2080 = vunpack.c.h.b16 %v480
        %v2081 = vunpack.c.l.b16 %v481
        %v2082 = vunpack.c.h.b16 %v481
        %v2083 = vunpack.c.l.b16 %v482
        %v2084 = vunpack.c.h.b16 %v482
        %v2085 = vunpack.c.l.b16 %v483
        %v2086 = vunpack.c.h.b16 %v483
        %v2087 = vunpack.c.l.b16 %v484
        %v2088 = vunpack.c.h.b16 %v484
        %v2089 = vunpack.c.l.b16 %v485
        %v2090 = vunpack.c.h.b16 %v485
        %v2091 = vunpack.c.l.b16 %v486
        %v2092 = vunpack.c.h.b16 %v486
        %v2093 = vunpack.c.l.b16 %v487
        %v2094 = vunpack.c.h.b16 %v487
        %v2095 = vunpack.c.l.b16 %v488
        %v2096 = vunpack.c.h.b16 %v488
        %v2097 = vunpack.c.l.b16 %v489
        %v2098 = vunpack.c.h.b16 %v489
        %v2099 = vunpack.c.l.b16 %v490
        %v2100 = vunpack.c.h.b16 %v490
        %v2101 = vunpack.c.l.b16 %v491
        %v2102 = vunpack.c.h.b16 %v491
        %v2103 = vunpack.c.l.b16 %v492
        %v2104 = vunpack.c.h.b16 %v492
        %v2105 = vunpack.c.l.b16 %v493
        %v2106 = vunpack.c.h.b16 %v493
        %v2107 = vunpack.c.l.b16 %v494
        %v2108 = vunpack.c.h.b16 %v494
        %v2109 = vunpack.c.l.b16 %v495
        %v2110 = vunpack.c.h.b16 %v495
        %v2111 = vunpack.c.l.b16 %v496
        %v2112 = vunpack.c.h.b16 %v496
        %v2113 = vunpack.c.l.b16 %v497
        %v2114 = vunpack.c.h.b16 %v497
        %v2115 = vunpack.c.l.b16 %v498
        %v2116 = vunpack.c.h.b16 %v498
        %v2117 = vunpack.c.l.b16 %v499
        %v2118 = vunpack.c.h.b16 %v499
        %v2119 = vunpack.c.l.b16 %v500
        %v2120 = vunpack.c.h.b16 %v500
        %v2121 = vunpack.c.l.b16 %v501
        %v2122 = vunpack.c.h.b16 %v501
        %v2123 = vunpack.c.l.b16 %v502
        %v2124 = vunpack.c.h.b16 %v502
        %v2125 = vunpack.c.l.b16 %v503
        %v2126 = vunpack.c.h.b16 %v503
        %v2127 = vunpack.c.l.b16 %v504
        %v2128 = vunpack.c.h.b16 %v504
        %v2129 = vunpack.c.l.b16 %v505
        %v2130 = vunpack.c.h.b16 %v505
        %v2131 = vunpack.c.l.b16 %v506
        %v2132 = vunpack.c.h.b16 %v506
        %v2133 = vunpack.c.l.b16 %v507
        %v2134 = vunpack.c.h.b16 %v507
        %v2135 = vunpack.c.l.b16 %v508
        %v2136 = vunpack.c.h.b16 %v508
        %v2137 = vunpack.c.l.b16 %v509
        %v2138 = vunpack.c.h.b16 %v509
        %v2139 = vunpack.c.l.b16 %v510
        %v2140 = vunpack.c.h.b16 %v510
        %v2141 = vunpack.c.l.b16 %v511
        %v2142 = vunpack.c.h.b16 %v511
        %v2143 = vunpack.c.l.b16 %v512
        %v2144 = vunpack.c.h.b16 %v512
        %v2145 = vunpack.c.l.b16 %v513
        %v2146 = vunpack.c.h.b16 %v513
        %v2147 = vunpack.c.l.b16 %v514
        %v2148 = vunpack.c.h.b16 %v514
        %v2149 = vunpack.c.l.b16 %v515
        %v2150 = vunpack.c.h.b16 %v515
        %v2151 = vunpack.c.l.b16 %v516
        %v2152 = vunpack.c.h.b16 %v516
        %v2153 = vunpack.c.l.b16 %v517
        %v2154 = vunpack.c.h.b16 %v517
        %v2155 = vunpack.c.l.b16 %v518
        %v2156 = vunpack.c.h.b16 %v518
        %v2157 = vunpack.c.l.b16 %v519
        %v2158 = vunpack.c.h.b16 %v519
        %v2159 = vunpack.c.l.b16 %v520
        %v2160 = vunpack.c.h.b16 %v520
        %v2161 = vunpack.c.l.b16 %v521
        %v2162 = vunpack.c.h.b16 %v521
        %v2163 = vunpack.c.l.b16 %v522
        %v2164 = vunpack.c.h.b16 %v522
        %v2165 = vunpack.c.l.b16 %v523
        %v2166 = vunpack.c.h.b16 %v523
        %v2167 = vunpack.c.l.b16 %v524
        %v2168 = vunpack.c.h.b16 %v524
        %v2169 = vunpack.c.l.b16 %v525
        %v2170 = vunpack.c.h.b16 %v525
        %v2171 = vunpack.c.l.b16 %v526
        %v2172 = vunpack.c.h.b16 %v526
        %v2173 = vunpack.c.l.b16 %v527
        %v2174 = vunpack.c.h.b16 %v527
        %v2175 = vunpack.c.l.b16 %v528
        %v2176 = vunpack.c.h.b16 %v528
        %v2177 = vunpack.c.l.b16 %v529
        %v2178 = vunpack.c.h.b16 %v529
        %v2179 = vunpack.c.l.b16 %v530
        %v2180 = vunpack.c.h.b16 %v530
        %v2181 = vunpack.c.l.b16 %v531
        %v2182 = vunpack.c.h.b16 %v531
        %v2183 = vunpack.c.l.b16 %v532
        %v2184 = vunpack.c.h.b16 %v532
        %v2185 = vunpack.c.l.b16 %v533
        %v2186 = vunpack.c.h.b16 %v533
        %v2187 = vunpack.c.l.b16 %v534
        %v2188 = vunpack.c.h.b16 %v534
        %v2189 = vunpack.c.l.b16 %v535
        %v2190 = vunpack.c.h.b16 %v535
        %v2191 = vunpack.c.l.b16 %v536
        %v2192 = vunpack.c.h.b16 %v536
        %v2193 = vunpack.c.l.b16 %v537
        %v2194 = vunpack.c.h.b16 %v537
        %v2195 = vunpack.c.l.b16 %v538
        %v2196 = vunpack.c.h.b16 %v538
        %v2197 = vunpack.c.l.b16 %v539
        %v2198 = vunpack.c.h.b16 %v539
        %v2199 = vunpack.c.l.b16 %v540
        %v2200 = vunpack.c.h.b16 %v540
        %v2201 = vunpack.c.l.b16 %v541
        %v2202 = vunpack.c.h.b16 %v541
        %v2203 = vunpack.c.l.b16 %v542
        %v2204 = vunpack.c.h.b16 %v542
        %v2205 = vunpack.c.l.b16 %v543
        %v2206 = vunpack.c.h.b16 %v543
        %v2207 = vunpack.c.l.b16 %v544
        %v2208 = vunpack.c.h.b16 %v544
        %v2209 = vunpack.c.l.b16 %v545
        %v2210 = vunpack.c.h.b16 %v545
        %v2211 = vunpack.c.l.b16 %v546
        %v2212 = vunpack.c.h.b16 %v546
        %v2213 = vunpack.c.l.b16 %v547
        %v2214 = vunpack.c.h.b16 %v547
        %v2215 = vunpack.c.l.b16 %v548
        %v2216 = vunpack.c.h.b16 %v548
        %v2217 = vunpack.c.l.b16 %v549
        %v2218 = vunpack.c.h.b16 %v549
        %v2219 = vunpack.c.l.b16 %v550
        %v2220 = vunpack.c.h.b16 %v550
        %v2221 = vunpack.c.l.b16 %v551
        %v2222 = vunpack.c.h.b16 %v551
        %v2223 = vunpack.c.l.b16 %v552
        %v2224 = vunpack.c.h.b16 %v552
        %v2225 = vunpack.c.l.b16 %v553
        %v2226 = vunpack.c.h.b16 %v553
        %v2227 = vunpack.c.l.b16 %v554
        %v2228 = vunpack.c.h.b16 %v554
        %v2229 = vunpack.c.l.b16 %v555
        %v2230 = vunpack.c.h.b16 %v555
        %v2231 = vunpack.c.l.b16 %v556
        %v2232 = vunpack.c.h.b16 %v556
        %v2233 = vunpack.c.l.b16 %v557
        %v2234 = vunpack.c.h.b16 %v557
        %v2235 = vunpack.c.l.b16 %v558
        %v2236 = vunpack.c.h.b16 %v558
        %v2237 = vunpack.c.l.b16 %v559
        %v2238 = vunpack.c.h.b16 %v559
        %v2239 = vunpack.c.l.b16 %v560
        %v2240 = vunpack.c.h.b16 %v560
        %v2241 = vunpack.c.l.b16 %v561
        %v2242 = vunpack.c.h.b16 %v561
        %v2243 = vunpack.c.l.b16 %v562
        %v2244 = vunpack.c.h.b16 %v562
        %v2245 = vunpack.c.l.b16 %v563
        %v2246 = vunpack.c.h.b16 %v563
        %v2247 = vunpack.c.l.b16 %v564
        %v2248 = vunpack.c.h.b16 %v564
        %v2249 = vunpack.c.l.b16 %v565
        %v2250 = vunpack.c.h.b16 %v565
        %v2251 = vunpack.c.l.b16 %v566
        %v2252 = vunpack.c.h.b16 %v566
        %v2253 = vunpack.c.l.b16 %v567
        %v2254 = vunpack.c.h.b16 %v567
        %v2255 = vunpack.c.l.b16 %v568
        %v2256 = vunpack.c.h.b16 %v568
        %v2257 = vunpack.c.l.b16 %v569
        %v2258 = vunpack.c.h.b16 %v569
        %v2259 = vunpack.c.l.b16 %v570
        %v2260 = vunpack.c.h.b16 %v570
        %v2261 = vunpack.c.l.b16 %v571
        %v2262 = vunpack.c.h.b16 %v571
        %v2263 = vunpack.c.l.b16 %v572
        %v2264 = vunpack.c.h.b16 %v572
        %v2265 = vunpack.c.l.b16 %v573
        %v2266 = vunpack.c.h.b16 %v573
        %v2267 = vunpack.c.l.b16 %v574
        %v2268 = vunpack.c.h.b16 %v574
        %v2269 = vunpack.c.l.b16 %v575
        %v2270 = vunpack.c.h.b16 %v575
        %v2271 = vunpack.c.l.b16 %v576
        %v2272 = vunpack.c.h.b16 %v576
        %v2273 = vunpack.c.l.b16 %v577
        %v2274 = vunpack.c.h.b16 %v577
        %v2275 = vunpack.c.l.b16 %v578
        %v2276 = vunpack.c.h.b16 %v578
        %v2277 = vunpack.c.l.b16 %v579
        %v2278 = vunpack.c.h.b16 %v579
        %v2279 = vunpack.c.l.b16 %v580
        %v2280 = vunpack.c.h.b16 %v580
        %v2281 = vunpack.c.l.b16 %v581
        %v2282 = vunpack.c.h.b16 %v581
        %v2283 = vunpack.c.l.b16 %v582
        %v2284 = vunpack.c.h.b16 %v582
        %v2285 = vunpack.c.l.b16 %v583
        %v2286 = vunpack.c.h.b16 %v583
        %v2287 = vunpack.c.l.b16 %v584
        %v2288 = vunpack.c.h.b16 %v584
        %v2289 = vunpack.c.l.b16 %v585
        %v2290 = vunpack.c.h.b16 %v585
        %v2291 = vunpack.c.l.b16 %v586
        %v2292 = vunpack.c.h.b16 %v586
        %v2293 = vunpack.c.l.b16 %v587
        %v2294 = vunpack.c.h.b16 %v587
        %v2295 = vunpack.c.l.b16 %v588
        %v2296 = vunpack.c.h.b16 %v588
        %v2297 = vunpack.c.l.b16 %v589
        %v2298 = vunpack.c.h.b16 %v589
        %v2299 = vunpack.c.l.b16 %v590
        %v2300 = vunpack.c.h.b16 %v590
        %v2301 = vunpack.c.l.b16 %v591
        %v2302 = vunpack.c.h.b16 %v591
        %v2303 = vunpack.c.l.b16 %v592
        %v2304 = vunpack.c.h.b16 %v592
        %v2305 = vunpack.c.l.b16 %v593
        %v2306 = vunpack.c.h.b16 %v593
        %v2307 = vunpack.c.l.b16 %v594
        %v2308 = vunpack.c.h.b16 %v594
        %v2309 = vunpack.c.l.b16 %v595
        %v2310 = vunpack.c.h.b16 %v595
        %v2311 = vunpack.c.l.b16 %v596
        %v2312 = vunpack.c.h.b16 %v596
        %v2313 = vunpack.c.l.b16 %v597
        %v2314 = vunpack.c.h.b16 %v597
        %v2315 = vunpack.c.l.b16 %v598
        %v2316 = vunpack.c.h.b16 %v598
        %v2317 = vunpack.c.l.b16 %v599
        %v2318 = vunpack.c.h.b16 %v599
        %v2319 = vunpack.c.l.b16 %v600
        %v2320 = vunpack.c.h.b16 %v600
        %v2321 = vunpack.c.l.b16 %v601
        %v2322 = vunpack.c.h.b16 %v601
        %v2323 = vunpack.c.l.b16 %v602
        %v2324 = vunpack.c.h.b16 %v602
        %v2325 = vunpack.c.l.b16 %v603
        %v2326 = vunpack.c.h.b16 %v603
        %v2327 = vunpack.c.l.b16 %v604
        %v2328 = vunpack.c.h.b16 %v604
        %v2329 = vunpack.c.l.b16 %v605
        %v2330 = vunpack.c.h.b16 %v605
        %v2331 = vunpack.c.l.b16 %v606
        %v2332 = vunpack.c.h.b16 %v606
        %v2333 = vunpack.c.l.b16 %v607
        %v2334 = vunpack.c.h.b16 %v607
        %v2335 = vunpack.c.l.b16 %v608
        %v2336 = vunpack.c.h.b16 %v608
        %v2337 = vunpack.c.l.b16 %v609
        %v2338 = vunpack.c.h.b16 %v609
        %v2339 = vunpack.c.l.b16 %v610
        %v2340 = vunpack.c.h.b16 %v610
        %v2341 = vunpack.c.l.b16 %v611
        %v2342 = vunpack.c.h.b16 %v611
        %v2343 = vunpack.c.l.b16 %v612
        %v2344 = vunpack.c.h.b16 %v612
        %v2345 = vunpack.c.l.b16 %v613
        %v2346 = vunpack.c.h.b16 %v613
        %v2347 = vunpack.c.l.b16 %v614
        %v2348 = vunpack.c.h.b16 %v614
        %v2349 = vunpack.c.l.b16 %v615
        %v2350 = vunpack.c.h.b16 %v615
        %v2351 = vunpack.c.l.b16 %v616
        %v2352 = vunpack.c.h.b16 %v616
        %v2353 = vunpack.c.l.b16 %v617
        %v2354 = vunpack.c.h.b16 %v617
        %v2355 = vunpack.c.l.b16 %v618
        %v2356 = vunpack.c.h.b16 %v618
        %v2357 = vunpack.c.l.b16 %v619
        %v2358 = vunpack.c.h.b16 %v619
        %v2359 = vunpack.c.l.b16 %v620
        %v2360 = vunpack.c.h.b16 %v620
        %v2361 = vunpack.c.l.b16 %v621
        %v2362 = vunpack.c.h.b16 %v621
        %v2363 = vunpack.c.l.b16 %v622
        %v2364 = vunpack.c.h.b16 %v622
        %v2365 = vunpack.c.l.b16 %v623
        %v2366 = vunpack.c.h.b16 %v623
        %v2367 = vunpack.c.l.b16 %v624
        %v2368 = vunpack.c.h.b16 %v624
        %v2369 = vunpack.c.l.b16 %v625
        %v2370 = vunpack.c.h.b16 %v625
        %v2371 = vunpack.c.l.b16 %v626
        %v2372 = vunpack.c.h.b16 %v626
        %v2373 = vunpack.c.l.b16 %v627
        %v2374 = vunpack.c.h.b16 %v627
        %v2375 = vunpack.c.l.b16 %v628
        %v2376 = vunpack.c.h.b16 %v628
        %v2377 = vunpack.c.l.b16 %v629
        %v2378 = vunpack.c.h.b16 %v629
        %v2379 = vunpack.c.l.b16 %v630
        %v2380 = vunpack.c.h.b16 %v630
        %v2381 = vunpack.c.l.b16 %v631
        %v2382 = vunpack.c.h.b16 %v631
        %v2383 = vunpack.c.l.b16 %v632
        %v2384 = vunpack.c.h.b16 %v632
        %v2385 = vunpack.c.l.b16 %v633
        %v2386 = vunpack.c.h.b16 %v633
        %v2387 = vunpack.c.l.b16 %v634
        %v2388 = vunpack.c.h.b16 %v634
        %v2389 = vunpack.c.l.b16 %v635
        %v2390 = vunpack.c.h.b16 %v635
        %v2391 = vunpack.c.l.b16 %v636
        %v2392 = vunpack.c.h.b16 %v636
        %v2393 = vunpack.c.l.b16 %v637
        %v2394 = vunpack.c.h.b16 %v637
        %v2395 = vunpack.c.l.b16 %v638
        %v2396 = vunpack.c.h.b16 %v638
        %v2397 = vunpack.c.l.b16 %v639
        %v2398 = vunpack.c.h.b16 %v639
        %v2399 = vunpack.c.l.b16 %v640
        %v2400 = vunpack.c.h.b16 %v640
        %v2401 = vunpack.c.l.b16 %v641
        %v2402 = vunpack.c.h.b16 %v641
        %v2403 = vunpack.c.l.b16 %v642
        %v2404 = vunpack.c.h.b16 %v642
        %v2405 = vunpack.c.l.b16 %v643
        %v2406 = vunpack.c.h.b16 %v643
        %v2407 = vunpack.c.l.b16 %v644
        %v2408 = vunpack.c.h.b16 %v644
        %v2409 = vunpack.c.l.b16 %v645
        %v2410 = vunpack.c.h.b16 %v645
        %v2411 = vunpack.c.l.b16 %v646
        %v2412 = vunpack.c.h.b16 %v646
        %v2413 = vunpack.c.l.b16 %v647
        %v2414 = vunpack.c.h.b16 %v647
        %v2415 = vunpack.c.l.b16 %v648
        %v2416 = vunpack.c.h.b16 %v648
        %v2417 = vunpack.c.l.b16 %v649
        %v2418 = vunpack.c.h.b16 %v649
        %v2419 = vunpack.c.l.b16 %v650
        %v2420 = vunpack.c.h.b16 %v650
        %v2421 = vunpack.c.l.b16 %v651
        %v2422 = vunpack.c.h.b16 %v651
        %v2423 = vunpack.c.l.b16 %v652
        %v2424 = vunpack.c.h.b16 %v652
        %v2425 = vunpack.c.l.b16 %v653
        %v2426 = vunpack.c.h.b16 %v653
        %v2427 = vunpack.c.l.b16 %v654
        %v2428 = vunpack.c.h.b16 %v654
        %v2429 = vunpack.c.l.b16 %v655
        %v2430 = vunpack.c.h.b16 %v655
        %v2431 = vunpack.c.l.b16 %v656
        %v2432 = vunpack.c.h.b16 %v656
        %v2433 = vunpack.c.l.b16 %v657
        %v2434 = vunpack.c.h.b16 %v657
        %v2435 = vunpack.c.l.b16 %v658
        %v2436 = vunpack.c.h.b16 %v658
        %v2437 = vunpack.c.l.b16 %v659
        %v2438 = vunpack.c.h.b16 %v659
        %v2439 = vunpack.c.l.b16 %v660
        %v2440 = vunpack.c.h.b16 %v660
        %v2441 = vunpack.c.l.b16 %v661
        %v2442 = vunpack.c.h.b16 %v661
        %v2443 = vunpack.c.l.b16 %v662
        %v2444 = vunpack.c.h.b16 %v662
        %v2445 = vunpack.c.l.b16 %v663
        %v2446 = vunpack.c.h.b16 %v663
        %v2447 = vunpack.c.l.b16 %v664
        %v2448 = vunpack.c.h.b16 %v664
        %v2449 = vunpack.c.l.b16 %v665
        %v2450 = vunpack.c.h.b16 %v665
        %v2451 = vunpack.c.l.b16 %v666
        %v2452 = vunpack.c.h.b16 %v666
        %v2453 = vunpack.c.l.b16 %v667
        %v2454 = vunpack.c.h.b16 %v667
        %v2455 = vunpack.c.l.b16 %v668
        %v2456 = vunpack.c.h.b16 %v668
        %v2457 = vunpack.c.l.b16 %v669
        %v2458 = vunpack.c.h.b16 %v669
        %v2459 = vunpack.c.l.b16 %v670
        %v2460 = vunpack.c.h.b16 %v670
        %v2461 = vunpack.c.l.b16 %v671
        %v2462 = vunpack.c.h.b16 %v671
        %v2463 = vunpack.c.l.b16 %v672
        %v2464 = vunpack.c.h.b16 %v672
        %v2465 = vunpack.c.l.b16 %v673
        %v2466 = vunpack.c.h.b16 %v673
        %v2467 = vunpack.c.l.b16 %v674
        %v2468 = vunpack.c.h.b16 %v674
        %v2469 = vunpack.c.l.b16 %v675
        %v2470 = vunpack.c.h.b16 %v675
        %v2471 = vunpack.c.l.b16 %v676
        %v2472 = vunpack.c.h.b16 %v676
        %v2473 = vunpack.c.l.b16 %v677
        %v2474 = vunpack.c.h.b16 %v677
        %v2475 = vunpack.c.l.b16 %v678
        %v2476 = vunpack.c.h.b16 %v678
        %v2477 = vunpack.c.l.b16 %v679
        %v2478 = vunpack.c.h.b16 %v679
        %v2479 = vunpack.c.l.b16 %v680
        %v2480 = vunpack.c.h.b16 %v680
        %v2481 = vunpack.c.l.b16 %v681
        %v2482 = vunpack.c.h.b16 %v681
        %v2483 = vunpack.c.l.b16 %v682
        %v2484 = vunpack.c.h.b16 %v682
        %v2485 = vunpack.c.l.b16 %v683
        %v2486 = vunpack.c.h.b16 %v683
        %v2487 = vunpack.c.l.b16 %v684
        %v2488 = vunpack.c.h.b16 %v684
        %v2489 = vunpack.c.l.b16 %v685
        %v2490 = vunpack.c.h.b16 %v685
        %v2491 = vunpack.c.l.b16 %v686
        %v2492 = vunpack.c.h.b16 %v686
        %v2493 = vunpack.c.l.b16 %v687
        %v2494 = vunpack.c.h.b16 %v687
        %v2495 = vunpack.c.l.b16 %v688
        %v2496 = vunpack.c.h.b16 %v688
        %v2497 = vunpack.c.l.b16 %v689
        %v2498 = vunpack.c.h.b16 %v689
        %v2499 = vunpack.c.l.b16 %v690
        %v2500 = vunpack.c.h.b16 %v690
        %v2501 = vunpack.c.l.b16 %v691
        %v2502 = vunpack.c.h.b16 %v691
        %v2503 = vunpack.c.l.b16 %v692
        %v2504 = vunpack.c.h.b16 %v692
        %v2505 = vunpack.c.l.b16 %v693
        %v2506 = vunpack.c.h.b16 %v693
        %v2507 = vunpack.c.l.b16 %v694
        %v2508 = vunpack.c.h.b16 %v694
        %v2509 = vunpack.c.l.b16 %v695
        %v2510 = vunpack.c.h.b16 %v695
        %v2511 = vunpack.c.l.b16 %v696
        %v2512 = vunpack.c.h.b16 %v696
        %v2513 = vunpack.c.l.b16 %v697
        %v2514 = vunpack.c.h.b16 %v697
        %v2515 = vunpack.c.l.b16 %v698
        %v2516 = vunpack.c.h.b16 %v698
        %v2517 = vunpack.c.l.b16 %v699
        %v2518 = vunpack.c.h.b16 %v699
        %v2519 = vunpack.c.l.b16 %v700
        %v2520 = vunpack.c.h.b16 %v700
        %v2521 = vunpack.c.l.b16 %v701
        %v2522 = vunpack.c.h.b16 %v701
        %v2523 = vunpack.c.l.b16 %v702
        %v2524 = vunpack.c.h.b16 %v702
        %v2525 = vunpack.c.l.b16 %v703
        %v2526 = vunpack.c.h.b16 %v703
        %v2527 = vunpack.c.l.b16 %v704
        %v2528 = vunpack.c.h.b16 %v704
        %v2529 = vunpack.c.l.b16 %v705
        %v2530 = vunpack.c.h.b16 %v705
        %v2531 = vunpack.c.l.b16 %v706
        %v2532 = vunpack.c.h.b16 %v706
        %v2533 = vunpack.c.l.b16 %v707
        %v2534 = vunpack.c.h.b16 %v707
        %v2535 = vunpack.c.l.b16 %v708
        %v2536 = vunpack.c.h.b16 %v708
        %v2537 = vunpack.c.l.b16 %v709
        %v2538 = vunpack.c.h.b16 %v709
        %v2539 = vunpack.c.l.b16 %v710
        %v2540 = vunpack.c.h.b16 %v710
        %v2541 = vunpack.c.l.b16 %v711
        %v2542 = vunpack.c.h.b16 %v711
        %v2543 = vunpack.c.l.b16 %v712
        %v2544 = vunpack.c.h.b16 %v712
        %v2545 = vunpack.c.l.b16 %v713
        %v2546 = vunpack.c.h.b16 %v713
        %v2547 = vunpack.c.l.b16 %v714
        %v2548 = vunpack.c.h.b16 %v714
        %v2549 = vunpack.c.l.b16 %v715
        %v2550 = vunpack.c.h.b16 %v715
        %v2551 = vunpack.c.l.b16 %v716
        %v2552 = vunpack.c.h.b16 %v716
        %v2553 = vunpack.c.l.b16 %v717
        %v2554 = vunpack.c.h.b16 %v717
        %v2555 = vunpack.c.l.b16 %v718
        %v2556 = vunpack.c.h.b16 %v718
        %v2557 = vunpack.c.l.b16 %v719
        %v2558 = vunpack.c.h.b16 %v719
        %v2559 = vunpack.c.l.b16 %v720
        %v2560 = vunpack.c.h.b16 %v720
        %v2561 = vunpack.c.l.b16 %v721
        %v2562 = vunpack.c.h.b16 %v721
        %v2563 = vunpack.c.l.b16 %v722
        %v2564 = vunpack.c.h.b16 %v722
        %v2565 = vunpack.c.l.b16 %v723
        %v2566 = vunpack.c.h.b16 %v723
        %v2567 = vunpack.c.l.b16 %v724
        %v2568 = vunpack.c.h.b16 %v724
        %v2569 = vunpack.c.l.b16 %v725
        %v2570 = vunpack.c.h.b16 %v725
        %v2571 = vunpack.c.l.b16 %v726
        %v2572 = vunpack.c.h.b16 %v726
        %v2573 = vunpack.c.l.b16 %v727
        %v2574 = vunpack.c.h.b16 %v727
        %v2575 = vunpack.c.l.b16 %v728
        %v2576 = vunpack.c.h.b16 %v728
        %v2577 = vunpack.c.l.b16 %v729
        %v2578 = vunpack.c.h.b16 %v729
        %v2579 = vunpack.c.l.b16 %v730
        %v2580 = vunpack.c.h.b16 %v730
        %v2581 = vunpack.c.l.b16 %v731
        %v2582 = vunpack.c.h.b16 %v731
        %v2583 = vunpack.c.l.b16 %v732
        %v2584 = vunpack.c.h.b16 %v732
        %v2585 = vunpack.c.l.b16 %v733
        %v2586 = vunpack.c.h.b16 %v733
        %v2587 = vunpack.c.l.b16 %v734
        %v2588 = vunpack.c.h.b16 %v734
        %v2589 = vunpack.c.l.b16 %v735
        %v2590 = vunpack.c.h.b16 %v735
        %v2591 = vunpack.c.l.b16 %v736
        %v2592 = vunpack.c.h.b16 %v736
        %v2593 = vunpack.c.l.b16 %v737
        %v2594 = vunpack.c.h.b16 %v737
        %v2595 = vunpack.c.l.b16 %v738
        %v2596 = vunpack.c.h.b16 %v738
        %v2597 = vunpack.c.l.b16 %v739
        %v2598 = vunpack.c.h.b16 %v739
        %v2599 = vunpack.c.l.b16 %v740
        %v2600 = vunpack.c.h.b16 %v740
        %v2601 = vunpack.c.l.b16 %v741
        %v2602 = vunpack.c.h.b16 %v741
        %v2603 = vunpack.c.l.b16 %v742
        %v2604 = vunpack.c.h.b16 %v742
        %v2605 = vunpack.c.l.b16 %v743
        %v2606 = vunpack.c.h.b16 %v743
        %v2607 = vunpack.c.l.b16 %v744
        %v2608 = vunpack.c.h.b16 %v744
        %v2609 = vunpack.c.l.b16 %v745
        %v2610 = vunpack.c.h.b16 %v745
        %v2611 = vunpack.c.l.b16 %v746
        %v2612 = vunpack.c.h.b16 %v746
        %v2613 = vunpack.c.l.b16 %v747
        %v2614 = vunpack.c.h.b16 %v747
        %v2615 = vunpack.c.l.b16 %v748
        %v2616 = vunpack.c.h.b16 %v748
        %v2617 = vunpack.c.l.b16 %v749
        %v2618 = vunpack.c.h.b16 %v749
        %v2619 = vunpack.c.l.b16 %v750
        %v2620 = vunpack.c.h.b16 %v750
        %v2621 = vunpack.c.l.b16 %v751
        %v2622 = vunpack.c.h.b16 %v751
        %v2623 = vunpack.c.l.b16 %v752
        %v2624 = vunpack.c.h.b16 %v752
        %v2625 = vunpack.c.l.b16 %v753
        %v2626 = vunpack.c.h.b16 %v753
        %v2627 = vunpack.c.l.b16 %v754
        %v2628 = vunpack.c.h.b16 %v754
        %v2629 = vunpack.c.l.b16 %v755
        %v2630 = vunpack.c.h.b16 %v755
        %v2631 = vunpack.c.l.b16 %v756
        %v2632 = vunpack.c.h.b16 %v756
        %v2633 = vunpack.c.l.b16 %v757
        %v2634 = vunpack.c.h.b16 %v757
        %v2635 = vunpack.c.l.b16 %v758
        %v2636 = vunpack.c.h.b16 %v758
        %v2637 = vunpack.c.l.b16 %v759
        %v2638 = vunpack.c.h.b16 %v759
        %v2639 = vunpack.c.l.b16 %v760
        %v2640 = vunpack.c.h.b16 %v760
        %v2641 = vunpack.c.l.b16 %v761
        %v2642 = vunpack.c.h.b16 %v761
        %v2643 = vunpack.c.l.b16 %v762
        %v2644 = vunpack.c.h.b16 %v762
        %v2645 = vunpack.c.l.b16 %v763
        %v2646 = vunpack.c.h.b16 %v763
        %v2647 = vunpack.c.l.b16 %v764
        %v2648 = vunpack.c.h.b16 %v764
        %v2649 = vunpack.c.l.b16 %v765
        %v2650 = vunpack.c.h.b16 %v765
        %v2651 = vunpack.c.l.b16 %v766
        %v2652 = vunpack.c.h.b16 %v766
        %v2653 = vunpack.c.l.b16 %v767
        %v2654 = vunpack.c.h.b16 %v767
        %v2655 = vunpack.c.l.b16 %v768
        %v2656 = vunpack.c.h.b16 %v768
        %v2657 = vunpack.c.l.b16 %v769
        %v2658 = vunpack.c.h.b16 %v769
        %v2659 = vunpack.c.l.b16 %v770
        %v2660 = vunpack.c.h.b16 %v770
        %v2661 = vunpack.c.l.b16 %v771
        %v2662 = vunpack.c.h.b16 %v771
        %v2663 = vunpack.c.l.b16 %v772
        %v2664 = vunpack.c.h.b16 %v772
        %v2665 = vunpack.c.l.b16 %v773
        %v2666 = vunpack.c.h.b16 %v773
        %v2667 = vunpack.c.l.b16 %v774
        %v2668 = vunpack.c.h.b16 %v774
        %v2669 = vunpack.c.l.b16 %v775
        %v2670 = vunpack.c.h.b16 %v775
        %v2671 = vunpack.c.l.b16 %v776
        %v2672 = vunpack.c.h.b16 %v776
        %v2673 = vunpack.c.l.b16 %v777
        %v2674 = vunpack.c.h.b16 %v777
        %v2675 = vunpack.c.l.b16 %v778
        %v2676 = vunpack.c.h.b16 %v778
        %v2677 = vunpack.c.l.b16 %v779
        %v2678 = vunpack.c.h.b16 %v779
        %v2679 = vunpack.c.l.b16 %v780
        %v2680 = vunpack.c.h.b16 %v780
        %v2681 = vunpack.c.l.b16 %v781
        %v2682 = vunpack.c.h.b16 %v781
        %v2683 = vunpack.c.l.b16 %v782
        %v2684 = vunpack.c.h.b16 %v782
        %v2685 = vunpack.c.l.b16 %v783
        %v2686 = vunpack.c.h.b16 %v783
        %v2687 = vunpack.c.l.b16 %v784
        %v2688 = vunpack.c.h.b16 %v784
        %v2689 = vunpack.c.l.b16 %v785
        %v2690 = vunpack.c.h.b16 %v785
        %v2691 = vunpack.c.l.b16 %v786
        %v2692 = vunpack.c.h.b16 %v786
        %v2693 = vunpack.c.l.b16 %v787
        %v2694 = vunpack.c.h.b16 %v787
        %v2695 = vunpack.c.l.b16 %v788
        %v2696 = vunpack.c.h.b16 %v788
        %v2697 = vunpack.c.l.b16 %v789
        %v2698 = vunpack.c.h.b16 %v789
        %v2699 = vunpack.c.l.b16 %v790
        %v2700 = vunpack.c.h.b16 %v790
        %v2701 = vunpack.c.l.b16 %v791
        %v2702 = vunpack.c.h.b16 %v791
        %v2703 = vunpack.c.l.b16 %v792
        %v2704 = vunpack.c.h.b16 %v792
        %v2705 = vunpack.c.l.b16 %v793
        %v2706 = vunpack.c.h.b16 %v793
        %v2707 = vunpack.c.l.b16 %v794
        %v2708 = vunpack.c.h.b16 %v794
        %v2709 = vunpack.c.l.b16 %v795
        %v2710 = vunpack.c.h.b16 %v795
        %v2711 = vunpack.c.l.b16 %v796
        %v2712 = vunpack.c.h.b16 %v796
        %v2713 = vunpack.c.l.b16 %v797
        %v2714 = vunpack.c.h.b16 %v797
        %v2715 = vunpack.c.l.b16 %v798
        %v2716 = vunpack.c.h.b16 %v798
        %v2717 = vunpack.c.l.b16 %v799
        %v2718 = vunpack.c.h.b16 %v799
        %v2719 = vunpack.c.l.b16 %v800
        %v2720 = vunpack.c.h.b16 %v800
        %v2721 = vunpack.c.l.b16 %v801
        %v2722 = vunpack.c.h.b16 %v801
        %v2723 = vunpack.c.l.b16 %v802
        %v2724 = vunpack.c.h.b16 %v802
        %v2725 = vunpack.c.l.b16 %v803
        %v2726 = vunpack.c.h.b16 %v803
        %v2727 = vunpack.c.l.b16 %v804
        %v2728 = vunpack.c.h.b16 %v804
        %v2729 = vunpack.c.l.b16 %v805
        %v2730 = vunpack.c.h.b16 %v805
        %v2731 = vunpack.c.l.b16 %v806
        %v2732 = vunpack.c.h.b16 %v806
        %v2733 = vunpack.c.l.b16 %v807
        %v2734 = vunpack.c.h.b16 %v807
        %v2735 = vunpack.c.l.b16 %v808
        %v2736 = vunpack.c.h.b16 %v808
        %v2737 = vunpack.c.l.b16 %v809
        %v2738 = vunpack.c.h.b16 %v809
        %v2739 = vunpack.c.l.b16 %v810
        %v2740 = vunpack.c.h.b16 %v810
        %v2741 = vunpack.c.l.b16 %v811
        %v2742 = vunpack.c.h.b16 %v811
        %v2743 = vunpack.c.l.b16 %v812
        %v2744 = vunpack.c.h.b16 %v812
        %v2745 = vunpack.c.l.b16 %v813
        %v2746 = vunpack.c.h.b16 %v813
        %v2747 = vunpack.c.l.b16 %v814
        %v2748 = vunpack.c.h.b16 %v814
        %v2749 = vunpack.c.l.b16 %v815
        %v2750 = vunpack.c.h.b16 %v815
        %v2751 = vunpack.c.l.b16 %v816
        %v2752 = vunpack.c.h.b16 %v816
        %v2753 = vunpack.c.l.b16 %v817
        %v2754 = vunpack.c.h.b16 %v817
        %v2755 = vunpack.c.l.b16 %v818
        %v2756 = vunpack.c.h.b16 %v818
        %v2757 = vunpack.c.l.b16 %v819
        %v2758 = vunpack.c.h.b16 %v819
        %v2759 = vunpack.c.l.b16 %v820
        %v2760 = vunpack.c.h.b16 %v820
        %v2761 = vunpack.c.l.b16 %v821
        %v2762 = vunpack.c.h.b16 %v821
        %v2763 = vunpack.c.l.b16 %v822
        %v2764 = vunpack.c.h.b16 %v822
        %v2765 = vunpack.c.l.b16 %v823
        %v2766 = vunpack.c.h.b16 %v823
        %v2767 = vunpack.c.l.b16 %v824
        %v2768 = vunpack.c.h.b16 %v824
        %v2769 = vunpack.c.l.b16 %v825
        %v2770 = vunpack.c.h.b16 %v825
        %v2771 = vunpack.c.l.b16 %v826
        %v2772 = vunpack.c.h.b16 %v826
        %v2773 = vunpack.c.l.b16 %v827
        %v2774 = vunpack.c.h.b16 %v827
        %v2775 = vunpack.c.l.b16 %v828
        %v2776 = vunpack.c.h.b16 %v828
        %v2777 = vunpack.c.l.b16 %v829
        %v2778 = vunpack.c.h.b16 %v829
        %v2779 = vunpack.c.l.b16 %v830
        %v2780 = vunpack.c.h.b16 %v830
        %v2781 = vunpack.c.l.b16 %v831
        %v2782 = vunpack.c.h.b16 %v831
        %v2783 = vunpack.c.l.b16 %v832
        %v2784 = vunpack.c.h.b16 %v832
        %v2785 = vunpack.c.l.b16 %v833
        %v2786 = vunpack.c.h.b16 %v833
        %v2787 = vunpack.c.l.b16 %v834
        %v2788 = vunpack.c.h.b16 %v834
        %v2789 = vunpack.c.l.b16 %v835
        %v2790 = vunpack.c.h.b16 %v835
        %v2791 = vunpack.c.l.b16 %v836
        %v2792 = vunpack.c.h.b16 %v836
        %v2793 = vunpack.c.l.b16 %v837
        %v2794 = vunpack.c.h.b16 %v837
        %v2795 = vunpack.c.l.b16 %v838
        %v2796 = vunpack.c.h.b16 %v838
        %v2797 = vunpack.c.l.b16 %v839
        %v2798 = vunpack.c.h.b16 %v839
        %v2799 = vunpack.c.l.b16 %v840
        %v2800 = vunpack.c.h.b16 %v840
        %v2801 = vunpack.c.l.b16 %v841
        %v2802 = vunpack.c.h.b16 %v841
        %v2803 = vunpack.c.l.b16 %v842
        %v2804 = vunpack.c.h.b16 %v842
        %v2805 = vunpack.c.l.b16 %v843
        %v2806 = vunpack.c.h.b16 %v843
        %v2807 = vunpack.c.l.b16 %v844
        %v2808 = vunpack.c.h.b16 %v844
        %v2809 = vunpack.c.l.b16 %v845
        %v2810 = vunpack.c.h.b16 %v845
        %v2811 = vunpack.c.l.b16 %v846
        %v2812 = vunpack.c.h.b16 %v846
        %v2813 = vunpack.c.l.b16 %v847
        %v2814 = vunpack.c.h.b16 %v847
        %v2815 = vunpack.c.l.b16 %v848
        %v2816 = vunpack.c.h.b16 %v848
        %v2817 = vunpack.c.l.b16 %v849
        %v2818 = vunpack.c.h.b16 %v849
        %v2819 = vunpack.c.l.b16 %v850
        %v2820 = vunpack.c.h.b16 %v850
        %v2821 = vunpack.c.l.b16 %v851
        %v2822 = vunpack.c.h.b16 %v851
        %v2823 = vunpack.c.l.b16 %v852
        %v2824 = vunpack.c.h.b16 %v852
        %v2825 = vunpack.c.l.b16 %v853
        %v2826 = vunpack.c.h.b16 %v853
        %v2827 = vunpack.c.l.b16 %v854
        %v2828 = vunpack.c.h.b16 %v854
        %v2829 = vunpack.c.l.b16 %v855
        %v2830 = vunpack.c.h.b16 %v855
        %v2831 = vunpack.c.l.b16 %v856
        %v2832 = vunpack.c.h.b16 %v856
        %v2833 = vunpack.c.l.b16 %v857
        %v2834 = vunpack.c.h.b16 %v857
        %v2835 = vunpack.c.l.b16 %v858
        %v2836 = vunpack.c.h.b16 %v858
        %v2837 = vunpack.c.l.b16 %v859
        %v2838 = vunpack.c.h.b16 %v859
        %v2839 = vunpack.c.l.b16 %v860
        %v2840 = vunpack.c.h.b16 %v860
        %v2841 = vunpack.c.l.b16 %v861
        %v2842 = vunpack.c.h.b16 %v861
        %v2843 = vunpack.c.l.b16 %v862
        %v2844 = vunpack.c.h.b16 %v862
        %v2845 = vunpack.c.l.b16 %v863
        %v2846 = vunpack.c.h.b16 %v863
        %v2847 = vunpack.c.l.b16 %v864
        %v2848 = vunpack.c.h.b16 %v864
        %v2849 = vunpack.c.l.b16 %v865
        %v2850 = vunpack.c.h.b16 %v865
        %v2851 = vunpack.c.l.b16 %v866
        %v2852 = vunpack.c.h.b16 %v866
        %v2853 = vunpack.c.l.b16 %v867
        %v2854 = vunpack.c.h.b16 %v867
        %v2855 = vunpack.c.l.b16 %v868
        %v2856 = vunpack.c.h.b16 %v868
        %v2857 = vunpack.c.l.b16 %v869
        %v2858 = vunpack.c.h.b16 %v869
        %v2859 = vunpack.c.l.b16 %v870
        %v2860 = vunpack.c.h.b16 %v870
        %v2861 = vunpack.c.l.b16 %v871
        %v2862 = vunpack.c.h.b16 %v871
        %v2863 = vunpack.c.l.b16 %v872
        %v2864 = vunpack.c.h.b16 %v872
        %v2865 = vunpack.c.l.b16 %v873
        %v2866 = vunpack.c.h.b16 %v873
        %v2867 = vunpack.c.l.b16 %v874
        %v2868 = vunpack.c.h.b16 %v874
        %v2869 = vunpack.c.l.b16 %v875
        %v2870 = vunpack.c.h.b16 %v875
        %v2871 = vunpack.c.l.b16 %v876
        %v2872 = vunpack.c.h.b16 %v876
        %v2873 = vunpack.c.l.b16 %v877
        %v2874 = vunpack.c.h.b16 %v877
        %v2875 = vunpack.c.l.b16 %v878
        %v2876 = vunpack.c.h.b16 %v878
        %v2877 = vunpack.c.l.b16 %v879
        %v2878 = vunpack.c.h.b16 %v879
        %v2879 = vunpack.c.l.b16 %v880
        %v2880 = vunpack.c.h.b16 %v880
        %v2881 = vunpack.c.l.b16 %v881
        %v2882 = vunpack.c.h.b16 %v881
        %v2883 = vunpack.c.l.b16 %v882
        %v2884 = vunpack.c.h.b16 %v882
        %v2885 = vunpack.c.l.b16 %v883
        %v2886 = vunpack.c.h.b16 %v883
        %v2887 = vunpack.c.l.b16 %v884
        %v2888 = vunpack.c.h.b16 %v884
        %v2889 = vunpack.c.l.b16 %v885
        %v2890 = vunpack.c.h.b16 %v885
        %v2891 = vunpack.c.l.b16 %v886
        %v2892 = vunpack.c.h.b16 %v886
        %v2893 = vunpack.c.l.b16 %v887
        %v2894 = vunpack.c.h.b16 %v887
        %v2895 = vunpack.c.l.b16 %v888
        %v2896 = vunpack.c.h.b16 %v888
        %v2897 = vunpack.c.l.b16 %v889
        %v2898 = vunpack.c.h.b16 %v889
        %v2899 = vunpack.c.l.b16 %v890
        %v2900 = vunpack.c.h.b16 %v890
        %v2901 = vunpack.c.l.b16 %v891
        %v2902 = vunpack.c.h.b16 %v891
        %v2903 = vunpack.c.l.b16 %v892
        %v2904 = vunpack.c.h.b16 %v892
        %v2905 = vunpack.c.l.b16 %v893
        %v2906 = vunpack.c.h.b16 %v893
        %v2907 = vunpack.c.l.b16 %v894
        %v2908 = vunpack.c.h.b16 %v894
        %v2909 = vunpack.c.l.b16 %v895
        %v2910 = vunpack.c.h.b16 %v895
        %v2911 = vunpack.c.l.b16 %v896
        %v2912 = vunpack.c.h.b16 %v896
        %v2913 = vunpack.c.l.b16 %v897
        %v2914 = vunpack.c.h.b16 %v897
        %v2915 = vunpack.c.l.b16 %v898
        %v2916 = vunpack.c.h.b16 %v898
        %v2917 = vunpack.c.l.b16 %v899
        %v2918 = vunpack.c.h.b16 %v899
        %v2919 = vunpack.c.l.b16 %v900
        %v2920 = vunpack.c.h.b16 %v900
        %v2921 = vunpack.c.l.b16 %v901
        %v2922 = vunpack.c.h.b16 %v901
        %v2923 = vunpack.c.l.b16 %v902
        %v2924 = vunpack.c.h.b16 %v902
        %v2925 = vunpack.c.l.b16 %v903
        %v2926 = vunpack.c.h.b16 %v903
        %v2927 = vunpack.c.l.b16 %v904
        %v2928 = vunpack.c.h.b16 %v904
        %v2929 = vunpack.c.l.b16 %v905
        %v2930 = vunpack.c.h.b16 %v905
        %v2931 = vunpack.c.l.b16 %v906
        %v2932 = vunpack.c.h.b16 %v906
        %v2933 = vunpack.c.l.b16 %v907
        %v2934 = vunpack.c.h.b16 %v907
        %v2935 = vunpack.c.l.b16 %v908
        %v2936 = vunpack.c.h.b16 %v908
        %v2937 = vunpack.c.l.b16 %v909
        %v2938 = vunpack.c.h.b16 %v909
        %v2939 = vunpack.c.l.b16 %v910
        %v2940 = vunpack.c.h.b16 %v910
        %v2941 = vunpack.c.l.b16 %v911
        %v2942 = vunpack.c.h.b16 %v911
        %v2943 = vunpack.c.l.b16 %v912
        %v2944 = vunpack.c.h.b16 %v912
        %v2945 = vunpack.c.l.b16 %v913
        %v2946 = vunpack.c.h.b16 %v913
        %v2947 = vunpack.c.l.b16 %v914
        %v2948 = vunpack.c.h.b16 %v914
        %v2949 = vunpack.c.l.b16 %v915
        %v2950 = vunpack.c.h.b16 %v915
        %v2951 = vunpack.c.l.b16 %v916
        %v2952 = vunpack.c.h.b16 %v916
        %v2953 = vunpack.c.l.b16 %v917
        %v2954 = vunpack.c.h.b16 %v917
        %v2955 = vunpack.c.l.b16 %v918
        %v2956 = vunpack.c.h.b16 %v918
        %v2957 = vunpack.c.l.b16 %v919
        %v2958 = vunpack.c.h.b16 %v919
        %v2959 = vunpack.c.l.b16 %v920
        %v2960 = vunpack.c.h.b16 %v920
        %v2961 = vunpack.c.l.b16 %v921
        %v2962 = vunpack.c.h.b16 %v921
        %v2963 = vunpack.c.l.b16 %v922
        %v2964 = vunpack.c.h.b16 %v922
        %v2965 = vunpack.c.l.b16 %v923
        %v2966 = vunpack.c.h.b16 %v923
        %v2967 = vunpack.c.l.b16 %v924
        %v2968 = vunpack.c.h.b16 %v924
        %v2969 = vunpack.c.l.b16 %v925
        %v2970 = vunpack.c.h.b16 %v925
        %v2971 = vunpack.c.l.b16 %v926
        %v2972 = vunpack.c.h.b16 %v926
        %v2973 = vunpack.c.l.b16 %v927
        %v2974 = vunpack.c.h.b16 %v927
        %v2975 = vunpack.c.l.b16 %v928
        %v2976 = vunpack.c.h.b16 %v928
        %v2977 = vunpack.c.l.b16 %v929
        %v2978 = vunpack.c.h.b16 %v929
        %v2979 = vunpack.c.l.b16 %v930
        %v2980 = vunpack.c.h.b16 %v930
        %v2981 = vunpack.c.l.b16 %v931
        %v2982 = vunpack.c.h.b16 %v931
        %v2983 = vunpack.c.l.b16 %v932
        %v2984 = vunpack.c.h.b16 %v932
        %v2985 = vunpack.c.l.b16 %v933
        %v2986 = vunpack.c.h.b16 %v933
        %v2987 = vunpack.c.l.b16 %v934
        %v2988 = vunpack.c.h.b16 %v934
        %v2989 = vunpack.c.l.b16 %v935
        %v2990 = vunpack.c.h.b16 %v935
        %v2991 = vunpack.c.l.b16 %v936
        %v2992 = vunpack.c.h.b16 %v936
        %v2993 = vunpack.c.l.b16 %v937
        %v2994 = vunpack.c.h.b16 %v937
        %v2995 = vunpack.c.l.b16 %v938
        %v2996 = vunpack.c.h.b16 %v938
        %v2997 = vunpack.c.l.b16 %v939
        %v2998 = vunpack.c.h.b16 %v939
        %v2999 = vunpack.c.l.b16 %v940
        %v3000 = vunpack.c.h.b16 %v940
        %v3001 = vunpack.c.l.b16 %v941
        %v3002 = vunpack.c.h.b16 %v941
        %v3003 = vunpack.c.l.b16 %v942
        %v3004 = vunpack.c.h.b16 %v942
        %v3005 = vunpack.c.l.b16 %v943
        %v3006 = vunpack.c.h.b16 %v943
        %v3007 = vunpack.c.l.b16 %v944
        %v3008 = vunpack.c.h.b16 %v944
        %v3009 = vunpack.c.l.b16 %v945
        %v3010 = vunpack.c.h.b16 %v945
        %v3011 = vunpack.c.l.b16 %v946
        %v3012 = vunpack.c.h.b16 %v946
        %v3013 = vunpack.c.l.b16 %v947
        %v3014 = vunpack.c.h.b16 %v947
        %v3015 = vunpack.c.l.b16 %v948
        %v3016 = vunpack.c.h.b16 %v948
        %v3017 = vunpack.c.l.b16 %v949
        %v3018 = vunpack.c.h.b16 %v949
        %v3019 = vunpack.c.l.b16 %v950
        %v3020 = vunpack.c.h.b16 %v950
        %v3021 = vunpack.c.l.b16 %v951
        %v3022 = vunpack.c.h.b16 %v951
        %v3023 = vunpack.c.l.b16 %v952
        %v3024 = vunpack.c.h.b16 %v952
        %v3025 = vunpack.c.l.b16 %v953
        %v3026 = vunpack.c.h.b16 %v953
        %v3027 = vunpack.c.l.b16 %v954
        %v3028 = vunpack.c.h.b16 %v954
        %v3029 = vunpack.c.l.b16 %v955
        %v3030 = vunpack.c.h.b16 %v955
        %v3031 = vunpack.c.l.b16 %v956
        %v3032 = vunpack.c.h.b16 %v956
        %v3033 = vunpack.c.l.b16 %v957
        %v3034 = vunpack.c.h.b16 %v957
        %v3035 = vunpack.c.l.b16 %v958
        %v3036 = vunpack.c.h.b16 %v958
        %v3037 = vunpack.c.l.b16 %v959
        %v3038 = vunpack.c.h.b16 %v959
        %v3039 = vunpack.c.l.b16 %v960
        %v3040 = vunpack.c.h.b16 %v960
        %v3041 = vunpack.c.l.b16 %v961
        %v3042 = vunpack.c.h.b16 %v961
        %v3043 = vunpack.c.l.b16 %v962
        %v3044 = vunpack.c.h.b16 %v962
        %v3045 = vunpack.c.l.b16 %v963
        %v3046 = vunpack.c.h.b16 %v963
        %v3047 = vunpack.c.l.b16 %v964
        %v3048 = vunpack.c.h.b16 %v964
        %v3049 = vunpack.c.l.b16 %v965
        %v3050 = vunpack.c.h.b16 %v965
        %v3051 = vunpack.c.l.b16 %v966
        %v3052 = vunpack.c.h.b16 %v966
        %v3053 = vunpack.c.l.b16 %v967
        %v3054 = vunpack.c.h.b16 %v967
        %v3055 = vunpack.c.l.b16 %v968
        %v3056 = vunpack.c.h.b16 %v968
        %v3057 = vunpack.c.l.b16 %v969
        %v3058 = vunpack.c.h.b16 %v969
        %v3059 = vunpack.c.l.b16 %v970
        %v3060 = vunpack.c.h.b16 %v970
        %v3061 = vunpack.c.l.b16 %v971
        %v3062 = vunpack.c.h.b16 %v971
        %v3063 = vunpack.c.l.b16 %v972
        %v3064 = vunpack.c.h.b16 %v972
        %v3065 = vunpack.c.l.b16 %v973
        %v3066 = vunpack.c.h.b16 %v973
        %v3067 = vunpack.c.l.b16 %v974
        %v3068 = vunpack.c.h.b16 %v974
        %v3069 = vunpack.c.l.b16 %v975
        %v3070 = vunpack.c.h.b16 %v975
        %v3071 = vunpack.c.l.b16 %v976
        %v3072 = vunpack.c.h.b16 %v976
        %v3073 = vunpack.c.l.b16 %v977
        %v3074 = vunpack.c.h.b16 %v977
        %v3075 = vunpack.c.l.b16 %v978
        %v3076 = vunpack.c.h.b16 %v978
        %v3077 = vunpack.c.l.b16 %v979
        %v3078 = vunpack.c.h.b16 %v979
        %v3079 = vunpack.c.l.b16 %v980
        %v3080 = vunpack.c.h.b16 %v980
        %v3081 = vunpack.c.l.b16 %v981
        %v3082 = vunpack.c.h.b16 %v981
        %v3083 = vunpack.c.l.b16 %v982
        %v3084 = vunpack.c.h.b16 %v982
        %v3085 = vunpack.c.l.b16 %v983
        %v3086 = vunpack.c.h.b16 %v983
        %v3087 = vunpack.c.l.b16 %v984
        %v3088 = vunpack.c.h.b16 %v984
        %v3089 = vunpack.c.l.b16 %v985
        %v3090 = vunpack.c.h.b16 %v985
        %v3091 = vunpack.c.l.b16 %v986
        %v3092 = vunpack.c.h.b16 %v986
        %v3093 = vunpack.c.l.b16 %v987
        %v3094 = vunpack.c.h.b16 %v987
        %v3095 = vunpack.c.l.b16 %v988
        %v3096 = vunpack.c.h.b16 %v988
        %v3097 = vunpack.c.l.b16 %v989
        %v3098 = vunpack.c.h.b16 %v989
        %v3099 = vunpack.c.l.b16 %v990
        %v3100 = vunpack.c.h.b16 %v990
        %v3101 = vunpack.c.l.b16 %v991
        %v3102 = vunpack.c.h.b16 %v991
        %v3103 = vunpack.c.l.b16 %v992
        %v3104 = vunpack.c.h.b16 %v992
        %v3105 = vunpack.c.l.b16 %v993
        %v3106 = vunpack.c.h.b16 %v993
        %v3107 = vunpack.c.l.b16 %v994
        %v3108 = vunpack.c.h.b16 %v994
        %v3109 = vunpack.c.l.b16 %v995
        %v3110 = vunpack.c.h.b16 %v995
        %v3111 = vunpack.c.l.b16 %v996
        %v3112 = vunpack.c.h.b16 %v996
        %v3113 = vunpack.c.l.b16 %v997
        %v3114 = vunpack.c.h.b16 %v997
        %v3115 = vunpack.c.l.b16 %v998
        %v3116 = vunpack.c.h.b16 %v998
        %v3117 = vunpack.c.l.b16 %v999
        %v3118 = vunpack.c.h.b16 %v999
        %v3119 = vunpack.c.l.b16 %v1000
        %v3120 = vunpack.c.h.b16 %v1000
        %v3121 = vunpack.c.l.b16 %v1001
        %v3122 = vunpack.c.h.b16 %v1001
        %v3123 = vunpack.c.l.b16 %v1002
        %v3124 = vunpack.c.h.b16 %v1002
        %v3125 = vunpack.c.l.b16 %v1003
        %v3126 = vunpack.c.h.b16 %v1003
        %v3127 = vunpack.c.l.b16 %v1004
        %v3128 = vunpack.c.h.b16 %v1004
        %v3129 = vunpack.c.l.b16 %v1005
        %v3130 = vunpack.c.h.b16 %v1005
        %v3131 = vunpack.c.l.b16 %v1006
        %v3132 = vunpack.c.h.b16 %v1006
        %v3133 = vunpack.c.l.b16 %v1007
        %v3134 = vunpack.c.h.b16 %v1007
        %v3135 = vunpack.c.l.b16 %v1008
        %v3136 = vunpack.c.h.b16 %v1008
        %v3137 = vunpack.c.l.b16 %v1009
        %v3138 = vunpack.c.h.b16 %v1009
        %v3139 = vunpack.c.l.b16 %v1010
        %v3140 = vunpack.c.h.b16 %v1010
        %v3141 = vunpack.c.l.b16 %v1011
        %v3142 = vunpack.c.h.b16 %v1011
        %v3143 = vunpack.c.l.b16 %v1012
        %v3144 = vunpack.c.h.b16 %v1012
        %v3145 = vunpack.c.l.b16 %v1013
        %v3146 = vunpack.c.h.b16 %v1013
        %v3147 = vunpack.c.l.b16 %v1014
        %v3148 = vunpack.c.h.b16 %v1014
        %v3149 = vunpack.c.l.b16 %v1015
        %v3150 = vunpack.c.h.b16 %v1015
        %v3151 = vunpack.c.l.b16 %v1016
        %v3152 = vunpack.c.h.b16 %v1016
        %v3153 = vunpack.c.l.b16 %v1017
        %v3154 = vunpack.c.h.b16 %v1017
        %v3155 = vunpack.c.l.b16 %v1018
        %v3156 = vunpack.c.h.b16 %v1018
        %v3157 = vunpack.c.l.b16 %v1019
        %v3158 = vunpack.c.h.b16 %v1019
        %v3159 = vunpack.c.l.b16 %v1020
        %v3160 = vunpack.c.h.b16 %v1020
        %v3161 = vunpack.c.l.b16 %v1021
        %v3162 = vunpack.c.h.b16 %v1021
        %v3163 = vunpack.c.l.b16 %v1022
        %v3164 = vunpack.c.h.b16 %v1022
        %v3165 = vunpack.c.l.b16 %v1023
        %v3166 = vunpack.c.h.b16 %v1023
        %v3167 = vunpack.c.l.b16 %v1024
        %v3168 = vunpack.c.h.b16 %v1024
        %v3169 = vunpack.c.l.b16 %v1025
        %v3170 = vunpack.c.h.b16 %v1025
        %v3171 = vunpack.c.l.b16 %v1026
        %v3172 = vunpack.c.h.b16 %v1026
        %v3173 = vunpack.c.l.b16 %v1027
        %v3174 = vunpack.c.h.b16 %v1027
        %v3175 = vunpack.c.l.b16 %v1028
        %v3176 = vunpack.c.h.b16 %v1028
        %v3177 = vunpack.c.l.b16 %v1029
        %v3178 = vunpack.c.h.b16 %v1029
        %v3179 = vunpack.c.l.b16 %v1030
        %v3180 = vunpack.c.h.b16 %v1030
        %v3181 = vunpack.c.l.b16 %v1031
        %v3182 = vunpack.c.h.b16 %v1031
        %v3183 = vunpack.c.l.b16 %v1032
        %v3184 = vunpack.c.h.b16 %v1032
        %v3185 = vunpack.c.l.b16 %v1033
        %v3186 = vunpack.c.h.b16 %v1033
        %v3187 = vunpack.c.l.b16 %v1034
        %v3188 = vunpack.c.h.b16 %v1034
        %v3189 = vunpack.c.l.b16 %v1035
        %v3190 = vunpack.c.h.b16 %v1035
        %v3191 = vunpack.c.l.b16 %v1036
        %v3192 = vunpack.c.h.b16 %v1036
        %v3193 = vunpack.c.l.b16 %v1037
        %v3194 = vunpack.c.h.b16 %v1037
        %v3195 = vunpack.c.l.b16 %v1038
        %v3196 = vunpack.c.h.b16 %v1038
        %v3197 = vunpack.c.l.b16 %v1039
        %v3198 = vunpack.c.h.b16 %v1039
        %v3199 = vunpack.c.l.b16 %v1040
        %v3200 = vunpack.c.h.b16 %v1040
        %v3201 = vunpack.c.l.b16 %v1041
        %v3202 = vunpack.c.h.b16 %v1041
        %v3203 = vunpack.c.l.b16 %v1042
        %v3204 = vunpack.c.h.b16 %v1042
        %v3205 = vunpack.c.l.b16 %v1043
        %v3206 = vunpack.c.h.b16 %v1043
        %v3207 = vunpack.c.l.b16 %v1044
        %v3208 = vunpack.c.h.b16 %v1044
        %v3209 = vunpack.c.l.b16 %v1045
        %v3210 = vunpack.c.h.b16 %v1045
        %v3211 = vunpack.c.l.b16 %v1046
        %v3212 = vunpack.c.h.b16 %v1046
        %v3213 = vunpack.c.l.b16 %v1047
        %v3214 = vunpack.c.h.b16 %v1047
        %v3215 = vunpack.c.l.b16 %v1048
        %v3216 = vunpack.c.h.b16 %v1048
        %v3217 = vunpack.c.l.b16 %v1049
        %v3218 = vunpack.c.h.b16 %v1049
        %v3219 = vunpack.c.l.b16 %v1050
        %v3220 = vunpack.c.h.b16 %v1050
        %v3221 = vunpack.c.l.b16 %v1051
        %v3222 = vunpack.c.h.b16 %v1051
        %v3223 = vunpack.c.l.b16 %v1052
        %v3224 = vunpack.c.h.b16 %v1052
        %v3225 = vunpack.c.l.b16 %v1053
        %v3226 = vunpack.c.h.b16 %v1053
        %v3227 = vunpack.c.l.b16 %v1054
        %v3228 = vunpack.c.h.b16 %v1054
        %v3229 = vunpack.c.l.b16 %v1055
        %v3230 = vunpack.c.h.b16 %v1055
        %v3231 = vunpack.c.l.b16 %v1056
        %v3232 = vunpack.c.h.b16 %v1056
        %v3233 = vunpack.c.l.b16 %v1057
        %v3234 = vunpack.c.h.b16 %v1057
        %v3235 = vunpack.c.l.b16 %v1058
        %v3236 = vunpack.c.h.b16 %v1058
        %v3237 = vunpack.c.l.b16 %v1059
        %v3238 = vunpack.c.h.b16 %v1059
        %v3239 = vunpack.c.l.b16 %v1060
        %v3240 = vunpack.c.h.b16 %v1060
        %v3241 = vunpack.c.l.b16 %v1061
        %v3242 = vunpack.c.h.b16 %v1061
        %v3243 = vunpack.c.l.b16 %v1062
        %v3244 = vunpack.c.h.b16 %v1062
        %v3245 = vunpack.c.l.b16 %v1063
        %v3246 = vunpack.c.h.b16 %v1063
        %v3247 = vunpack.c.l.b16 %v1064
        %v3248 = vunpack.c.h.b16 %v1064
        %v3249 = vunpack.c.l.b16 %v1065
        %v3250 = vunpack.c.h.b16 %v1065
        %v3251 = vunpack.c.l.b16 %v1066
        %v3252 = vunpack.c.h.b16 %v1066
        %v3253 = vunpack.c.l.b16 %v1067
        %v3254 = vunpack.c.h.b16 %v1067
        %v3255 = vunpack.c.l.b16 %v1068
        %v3256 = vunpack.c.h.b16 %v1068
        %v3257 = vunpack.c.l.b16 %v1069
        %v3258 = vunpack.c.h.b16 %v1069
        %v3259 = vunpack.c.l.b16 %v1070
        %v3260 = vunpack.c.h.b16 %v1070
        %v3261 = vunpack.c.l.b16 %v1071
        %v3262 = vunpack.c.h.b16 %v1071
        %v3263 = vunpack.c.l.b16 %v1072
        %v3264 = vunpack.c.h.b16 %v1072
        %v3265 = vunpack.c.l.b16 %v1073
        %v3266 = vunpack.c.h.b16 %v1073
        %v3267 = vunpack.c.l.b16 %v1074
        %v3268 = vunpack.c.h.b16 %v1074
        %v3269 = vunpack.c.l.b16 %v1075
        %v3270 = vunpack.c.h.b16 %v1075
        %v3271 = vunpack.c.l.b16 %v1076
        %v3272 = vunpack.c.h.b16 %v1076
        %v3273 = vunpack.c.l.b16 %v1077
        %v3274 = vunpack.c.h.b16 %v1077
        %v3275 = vunpack.c.l.b16 %v1078
        %v3276 = vunpack.c.h.b16 %v1078
        %v3277 = vunpack.c.l.b16 %v1079
        %v3278 = vunpack.c.h.b16 %v1079
        %v3279 = vunpack.c.l.b16 %v1080
        %v3280 = vunpack.c.h.b16 %v1080
        %v3281 = vunpack.c.l.b16 %v1081
        %v3282 = vunpack.c.h.b16 %v1081
        %v3283 = vunpack.c.l.b16 %v1082
        %v3284 = vunpack.c.h.b16 %v1082
        %v3285 = vunpack.c.l.b16 %v1083
        %v3286 = vunpack.c.h.b16 %v1083
        %v3287 = vunpack.c.l.b16 %v1084
        %v3288 = vunpack.c.h.b16 %v1084
        %v3289 = vunpack.c.l.b16 %v1085
        %v3290 = vunpack.c.h.b16 %v1085
        %v3291 = vunpack.c.l.b16 %v1086
        %v3292 = vunpack.c.h.b16 %v1086
        %v3293 = vunpack.c.l.b16 %v1087
        %v3294 = vunpack.c.h.b16 %v1087
        %v3295 = vunpack.c.l.b16 %v1088
        %v3296 = vunpack.c.h.b16 %v1088
        %v3297 = vunpack.c.l.b16 %v1089
        %v3298 = vunpack.c.h.b16 %v1089
        %v3299 = vunpack.c.l.b16 %v1090
        %v3300 = vunpack.c.h.b16 %v1090
        %v3301 = vunpack.c.l.b16 %v1091
        %v3302 = vunpack.c.h.b16 %v1091
        %v3303 = vunpack.c.l.b16 %v1092
        %v3304 = vunpack.c.h.b16 %v1092
        %v3305 = vunpack.c.l.b16 %v1093
        %v3306 = vunpack.c.h.b16 %v1093
        %v3307 = vunpack.c.l.b16 %v1094
        %v3308 = vunpack.c.h.b16 %v1094
        %v3309 = vunpack.c.l.b16 %v1095
        %v3310 = vunpack.c.h.b16 %v1095
        %v3311 = vunpack.c.l.b16 %v1096
        %v3312 = vunpack.c.h.b16 %v1096
        %v3313 = vunpack.c.l.b16 %v1097
        %v3314 = vunpack.c.h.b16 %v1097
        %v3315 = vunpack.c.l.b16 %v1098
        %v3316 = vunpack.c.h.b16 %v1098
        %v3317 = vunpack.c.l.b16 %v1099
        %v3318 = vunpack.c.h.b16 %v1099
        %v3319 = vunpack.c.l.b16 %v1100
        %v3320 = vunpack.c.h.b16 %v1100
        %v3321 = vunpack.c.l.b16 %v1101
        %v3322 = vunpack.c.h.b16 %v1101
        %v3323 = vunpack.c.l.b16 %v1102
        %v3324 = vunpack.c.h.b16 %v1102
        %v3325 = vunpack.c.l.b16 %v1103
        %v3326 = vunpack.c.h.b16 %v1103
        %v3327 = vunpack.c.l.b16 %v1104
        %v3328 = vunpack.c.h.b16 %v1104
        %v3329 = vunpack.c.l.b16 %v1105
        %v3330 = vunpack.c.h.b16 %v1105
        %v3331 = vunpack.c.l.b16 %v1106
        %v3332 = vunpack.c.h.b16 %v1106
        %v3333 = vunpack.c.l.b16 %v1107
        %v3334 = vunpack.c.h.b16 %v1107
        %v3335 = vunpack.c.l.b16 %v1108
        %v3336 = vunpack.c.h.b16 %v1108
        %v3337 = vunpack.c.l.b16 %v1109
        %v3338 = vunpack.c.h.b16 %v1109
        %v3339 = vunpack.c.l.b16 %v1110
        %v3340 = vunpack.c.h.b16 %v1110
        %v3341 = vunpack.c.l.b16 %v1111
        %v3342 = vunpack.c.h.b16 %v1111
        %v3343 = vunpack.c.l.b16 %v1112
        %v3344 = vunpack.c.h.b16 %v1112
        %v3345 = vunpack.c.l.b16 %v1113
        %v3346 = vunpack.c.h.b16 %v1113
        %v3347 = vunpack.c.l.b16 %v1114
        %v3348 = vunpack.c.h.b16 %v1114
        %v3349 = vunpack.c.l.b16 %v1115
        %v3350 = vunpack.c.h.b16 %v1115
        %v3351 = vunpack.c.l.b16 %v1116
        %v3352 = vunpack.c.h.b16 %v1116
        %v3353 = vunpack.c.l.b16 %v1117
        %v3354 = vunpack.c.h.b16 %v1117
        %v3355 = vunpack.c.l.b16 %v1118
        %v3356 = vunpack.c.h.b16 %v1118
        %v3357 = vunpack.c.l.b16 %v1119
        %v3358 = vunpack.c.h.b16 %v1119
        %v3359 = vunpack.c.l.b16 %v1120
        %v3360 = vunpack.c.h.b16 %v1120
        %v3361 = vunpack.c.l.b16 %v1121
        %v3362 = vunpack.c.h.b16 %v1121
        %v3363 = vunpack.c.l.b16 %v1122
        %v3364 = vunpack.c.h.b16 %v1122
        %v3365 = vunpack.c.l.b16 %v1123
        %v3366 = vunpack.c.h.b16 %v1123
        %v3367 = vunpack.c.l.b16 %v1124
        %v3368 = vunpack.c.h.b16 %v1124
        %v3369 = vunpack.c.l.b16 %v1125
        %v3370 = vunpack.c.h.b16 %v1125
        %v3371 = vunpack.c.l.b16 %v1126
        %v3372 = vunpack.c.h.b16 %v1126
        %v3373 = vunpack.c.l.b16 %v1127
        %v3374 = vunpack.c.h.b16 %v1127
        %v3375 = vunpack.c.l.b16 %v1128
        %v3376 = vunpack.c.h.b16 %v1128
        %v3377 = vunpack.c.l.b16 %v1129
        %v3378 = vunpack.c.h.b16 %v1129
        %v3379 = vunpack.c.l.b16 %v1130
        %v3380 = vunpack.c.h.b16 %v1130
        %v3381 = vunpack.c.l.b16 %v1131
        %v3382 = vunpack.c.h.b16 %v1131
        %v3383 = vunpack.c.l.b16 %v1132
        %v3384 = vunpack.c.h.b16 %v1132
        %v3385 = vunpack.c.l.b16 %v1133
        %v3386 = vunpack.c.h.b16 %v1133
        %v3387 = vunpack.c.l.b16 %v1134
        %v3388 = vunpack.c.h.b16 %v1134
        %v3389 = vunpack.c.l.b16 %v1135
        %v3390 = vunpack.c.h.b16 %v1135
        %v3391 = vunpack.c.l.b16 %v1136
        %v3392 = vunpack.c.h.b16 %v1136
        %v3393 = vunpack.c.l.b16 %v1137
        %v3394 = vunpack.c.h.b16 %v1137
        %v3395 = vunpack.c.l.b16 %v1138
        %v3396 = vunpack.c.h.b16 %v1138
        %v3397 = vunpack.c.l.b16 %v1139
        %v3398 = vunpack.c.h.b16 %v1139
        %v3399 = vunpack.c.l.b16 %v1140
        %v3400 = vunpack.c.h.b16 %v1140
        %v3401 = vunpack.c.l.b16 %v1141
        %v3402 = vunpack.c.h.b16 %v1141
        %v3403 = vunpack.c.l.b16 %v1142
        %v3404 = vunpack.c.h.b16 %v1142
        %v3405 = vunpack.c.l.b16 %v1143
        %v3406 = vunpack.c.h.b16 %v1143
        %v3407 = vunpack.c.l.b16 %v1144
        %v3408 = vunpack.c.h.b16 %v1144
        %v3409 = vunpack.c.l.b16 %v1145
        %v3410 = vunpack.c.h.b16 %v1145
        %v3411 = vunpack.c.l.b16 %v1146
        %v3412 = vunpack.c.h.b16 %v1146
        %v3413 = vunpack.c.l.b16 %v1147
        %v3414 = vunpack.c.h.b16 %v1147
        %v3415 = vunpack.c.l.b16 %v1148
        %v3416 = vunpack.c.h.b16 %v1148
        %v3417 = vunpack.c.l.b16 %v1149
        %v3418 = vunpack.c.h.b16 %v1149
        %v3419 = vunpack.c.l.b16 %v1150
        %v3420 = vunpack.c.h.b16 %v1150
        %v3421 = vunpack.c.l.b16 %v1151
        %v3422 = vunpack.c.h.b16 %v1151
        %v3423 = vunpack.c.l.b16 %v1152
        %v3424 = vunpack.c.h.b16 %v1152
        %v3425 = vunpack.c.l.b16 %v1153
        %v3426 = vunpack.c.h.b16 %v1153
        %v3427 = vunpack.c.l.b16 %v1154
        %v3428 = vunpack.c.h.b16 %v1154
        %v3429 = vunpack.c.l.b16 %v1155
        %v3430 = vunpack.c.h.b16 %v1155
        %v3431 = vunpack.c.l.b16 %v1156
        %v3432 = vunpack.c.h.b16 %v1156
        %v3433 = vunpack.c.l.b16 %v1157
        %v3434 = vunpack.c.h.b16 %v1157
        %v3435 = vunpack.c.l.b16 %v1158
        %v3436 = vunpack.c.h.b16 %v1158
        %v3437 = vunpack.c.l.b16 %v1159
        %v3438 = vunpack.c.h.b16 %v1159
        %v3439 = vunpack.c.l.b16 %v1160
        %v3440 = vunpack.c.h.b16 %v1160
        %v3441 = vunpack.c.l.b16 %v1161
        %v3442 = vunpack.c.h.b16 %v1161
        %v3443 = vunpack.c.l.b16 %v1162
        %v3444 = vunpack.c.h.b16 %v1162
        %v3445 = vunpack.c.l.b16 %v1163
        %v3446 = vunpack.c.h.b16 %v1163
        %v3447 = vunpack.c.l.b16 %v1164
        %v3448 = vunpack.c.h.b16 %v1164
        %v3449 = vunpack.c.l.b16 %v1165
        %v3450 = vunpack.c.h.b16 %v1165
        %v3451 = vunpack.c.l.b16 %v1166
        %v3452 = vunpack.c.h.b16 %v1166
        %v3453 = vunpack.c.l.b16 %v1167
        %v3454 = vunpack.c.h.b16 %v1167
        %v3455 = vunpack.c.l.b16 %v1168
        %v3456 = vunpack.c.h.b16 %v1168
        %v3457 = vunpack.c.l.b16 %v1169
        %v3458 = vunpack.c.h.b16 %v1169
        %v3459 = vunpack.c.l.b16 %v1170
        %v3460 = vunpack.c.h.b16 %v1170
        %v3461 = vunpack.c.l.b16 %v1171
        %v3462 = vunpack.c.h.b16 %v1171
        %v3463 = vunpack.c.l.b16 %v1172
        %v3464 = vunpack.c.h.b16 %v1172
        %v3465 = vunpack.c.l.b16 %v1173
        %v3466 = vunpack.c.h.b16 %v1173
        %v3467 = vunpack.c.l.b16 %v1174
        %v3468 = vunpack.c.h.b16 %v1174
        %v3469 = vunpack.c.l.b16 %v1175
        %v3470 = vunpack.c.h.b16 %v1175
        %v3471 = vunpack.c.l.b16 %v1176
        %v3472 = vunpack.c.h.b16 %v1176
        %v3473 = vunpack.c.l.b16 %v1177
        %v3474 = vunpack.c.h.b16 %v1177
        %v3475 = vunpack.c.l.b16 %v1178
        %v3476 = vunpack.c.h.b16 %v1178
        %v3477 = vunpack.c.l.b16 %v1179
        %v3478 = vunpack.c.h.b16 %v1179
        %v3479 = vunpack.c.l.b16 %v1180
        %v3480 = vunpack.c.h.b16 %v1180
        %v3481 = vunpack.c.l.b16 %v1181
        %v3482 = vunpack.c.h.b16 %v1181
        %v3483 = vunpack.c.l.b16 %v1182
        %v3484 = vunpack.c.h.b16 %v1182
        %v3485 = vunpack.c.l.b16 %v1183
        %v3486 = vunpack.c.h.b16 %v1183
        %v3487 = vunpack.c.l.b16 %v1184
        %v3488 = vunpack.c.h.b16 %v1184
        %v3489 = vpack.c.b16 %v1965, %v1953
        %v3490 = vpack.c.b16 %v1966, %v1954
        %v3491 = vpack.c.b16 %v1967, %v1955
        %v3492 = vpack.c.b16 %v1968, %v1956
        %v3493 = vpack.c.b16 %v1969, %v1957
        %v3494 = vpack.c.b16 %v1970, %v1958
        %v3495 = vpack.c.b16 %v1971, %v1959
        %v3496 = vpack.c.b16 %v1972, %v1960
        %v3497 = vpack.c.b16 %v1973, %v1961
        %v3498 = vpack.c.b16 %v1974, %v1962
        %v3499 = vpack.c.b16 %v1975, %v1963
        %v3500 = vpack.c.b16 %v1976, %v1964
        %v3501 = vpack.c.b16 %v1989, %v1977
        %v3502 = vpack.c.b16 %v1990, %v1978
        %v3503 = vpack.c.b16 %v1991, %v1979
        %v3504 = vpack.c.b16 %v1992, %v1980
        %v3505 = vpack.c.b16 %v1993, %v1981
        %v3506 = vpack.c.b16 %v1994, %v1982
        %v3507 = vpack.c.b16 %v1995, %v1983
        %v3508 = vpack.c.b16 %v1996, %v1984
        %v3509 = vpack.c.b16 %v1997, %v1985
        %v3510 = vpack.c.b16 %v1998, %v1986
        %v3511 = vpack.c.b16 %v1999, %v1987
        %v3512 = vpack.c.b16 %v2000, %v1988
        %v3513 = vpack.c.b16 %v2013, %v2001
        %v3514 = vpack.c.b16 %v2014, %v2002
        %v3515 = vpack.c.b16 %v2015, %v2003
        %v3516 = vpack.c.b16 %v2016, %v2004
        %v3517 = vpack.c.b16 %v2017, %v2005
        %v3518 = vpack.c.b16 %v2018, %v2006
        %v3519 = vpack.c.b16 %v2019, %v2007
        %v3520 = vpack.c.b16 %v2020, %v2008
        %v3521 = vpack.c.b16 %v2021, %v2009
        %v3522 = vpack.c.b16 %v2022, %v2010
        %v3523 = vpack.c.b16 %v2023, %v2011
        %v3524 = vpack.c.b16 %v2024, %v2012
        %v3525 = vpack.c.b16 %v2037, %v2025
        %v3526 = vpack.c.b16 %v2038, %v2026
        %v3527 = vpack.c.b16 %v2039, %v2027
        %v3528 = vpack.c.b16 %v2040, %v2028
        %v3529 = vpack.c.b16 %v2041, %v2029
        %v3530 = vpack.c.b16 %v2042, %v2030
        %v3531 = vpack.c.b16 %v2043, %v2031
        %v3532 = vpack.c.b16 %v2044, %v2032
        %v3533 = vpack.c.b16 %v2045, %v2033
        %v3534 = vpack.c.b16 %v2046, %v2034
        %v3535 = vpack.c.b16 %v2047, %v2035
        %v3536 = vpack.c.b16 %v2048, %v2036
        %v3537 = vpack.c.b16 %v2061, %v2049
        %v3538 = vpack.c.b16 %v2062, %v2050
        %v3539 = vpack.c.b16 %v2063, %v2051
        %v3540 = vpack.c.b16 %v2064, %v2052
        %v3541 = vpack.c.b16 %v2065, %v2053
        %v3542 = vpack.c.b16 %v2066, %v2054
        %v3543 = vpack.c.b16 %v2067, %v2055
        %v3544 = vpack.c.b16 %v2068, %v2056
        %v3545 = vpack.c.b16 %v2069, %v2057
        %v3546 = vpack.c.b16 %v2070, %v2058
        %v3547 = vpack.c.b16 %v2071, %v2059
        %v3548 = vpack.c.b16 %v2072, %v2060
        %v3549 = vpack.c.b16 %v2085, %v2073
        %v3550 = vpack.c.b16 %v2086, %v2074
        %v3551 = vpack.c.b16 %v2087, %v2075
        %v3552 = vpack.c.b16 %v2088, %v2076
        %v3553 = vpack.c.b16 %v2089, %v2077
        %v3554 = vpack.c.b16 %v2090, %v2078
        %v3555 = vpack.c.b16 %v2091, %v2079
        %v3556 = vpack.c.b16 %v2092, %v2080
        %v3557 = vpack.c.b16 %v2093, %v2081
        %v3558 = vpack.c.b16 %v2094, %v2082
        %v3559 = vpack.c.b16 %v2095, %v2083
        %v3560 = vpack.c.b16 %v2096, %v2084
        %v3561 = vpack.c.b16 %v2109, %v2097
        %v3562 = vpack.c.b16 %v2110, %v2098
        %v3563 = vpack.c.b16 %v2111, %v2099
        %v3564 = vpack.c.b16 %v2112, %v2100
        %v3565 = vpack.c.b16 %v2113, %v2101
        %v3566 = vpack.c.b16 %v2114, %v2102
        %v3567 = vpack.c.b16 %v2115, %v2103
        %v3568 = vpack.c.b16 %v2116, %v2104
        %v3569 = vpack.c.b16 %v2117, %v2105
        %v3570 = vpack.c.b16 %v2118, %v2106
        %v3571 = vpack.c.b16 %v2119, %v2107
        %v3572 = vpack.c.b16 %v2120, %v2108
        %v3573 = vpack.c.b16 %v2133, %v2121
        %v3574 = vpack.c.b16 %v2134, %v2122
        %v3575 = vpack.c.b16 %v2135, %v2123
        %v3576 = vpack.c.b16 %v2136, %v2124
        %v3577 = vpack.c.b16 %v2137, %v2125
        %v3578 = vpack.c.b16 %v2138, %v2126
        %v3579 = vpack.c.b16 %v2139, %v2127
        %v3580 = vpack.c.b16 %v2140, %v2128
        %v3581 = vpack.c.b16 %v2141, %v2129
        %v3582 = vpack.c.b16 %v2142, %v2130
        %v3583 = vpack.c.b16 %v2143, %v2131
        %v3584 = vpack.c.b16 %v2144, %v2132
        %v3585 = vpack.c.b16 %v2157, %v2145
        %v3586 = vpack.c.b16 %v2158, %v2146
        %v3587 = vpack.c.b16 %v2159, %v2147
        %v3588 = vpack.c.b16 %v2160, %v2148
        %v3589 = vpack.c.b16 %v2161, %v2149
        %v3590 = vpack.c.b16 %v2162, %v2150
        %v3591 = vpack.c.b16 %v2163, %v2151
        %v3592 = vpack.c.b16 %v2164, %v2152
        %v3593 = vpack.c.b16 %v2165, %v2153
        %v3594 = vpack.c.b16 %v2166, %v2154
        %v3595 = vpack.c.b16 %v2167, %v2155
        %v3596 = vpack.c.b16 %v2168, %v2156
        %v3597 = vpack.c.b16 %v2181, %v2169
        %v3598 = vpack.c.b16 %v2182, %v2170
        %v3599 = vpack.c.b16 %v2183, %v2171
        %v3600 = vpack.c.b16 %v2184, %v2172
        %v3601 = vpack.c.b16 %v2185, %v2173
        %v3602 = vpack.c.b16 %v2186, %v2174
        %v3603 = vpack.c.b16 %v2187, %v2175
        %v3604 = vpack.c.b16 %v2188, %v2176
        %v3605 = vpack.c.b16 %v2189, %v2177
        %v3606 = vpack.c.b16 %v2190, %v2178
        %v3607 = vpack.c.b16 %v2191, %v2179
        %v3608 = vpack.c.b16 %v2192, %v2180
        %v3609 = vpack.c.b16 %v2205, %v2193
        %v3610 = vpack.c.b16 %v2206, %v2194
        %v3611 = vpack.c.b16 %v2207, %v2195
        %v3612 = vpack.c.b16 %v2208, %v2196
        %v3613 = vpack.c.b16 %v2209, %v2197
        %v3614 = vpack.c.b16 %v2210, %v2198
        %v3615 = vpack.c.b16 %v2211, %v2199
        %v3616 = vpack.c.b16 %v2212, %v2200
        %v3617 = vpack.c.b16 %v2213, %v2201
        %v3618 = vpack.c.b16 %v2214, %v2202
        %v3619 = vpack.c.b16 %v2215, %v2203
        %v3620 = vpack.c.b16 %v2216, %v2204
        %v3621 = vpack.c.b16 %v2229, %v2217
        %v3622 = vpack.c.b16 %v2230, %v2218
        %v3623 = vpack.c.b16 %v2231, %v2219
        %v3624 = vpack.c.b16 %v2232, %v2220
        %v3625 = vpack.c.b16 %v2233, %v2221
        %v3626 = vpack.c.b16 %v2234, %v2222
        %v3627 = vpack.c.b16 %v2235, %v2223
        %v3628 = vpack.c.b16 %v2236, %v2224
        %v3629 = vpack.c.b16 %v2237, %v2225
        %v3630 = vpack.c.b16 %v2238, %v2226
        %v3631 = vpack.c.b16 %v2239, %v2227
        %v3632 = vpack.c.b16 %v2240, %v2228
        %v3633 = vpack.c.b16 %v2253, %v2241
        %v3634 = vpack.c.b16 %v2254, %v2242
        %v3635 = vpack.c.b16 %v2255, %v2243
        %v3636 = vpack.c.b16 %v2256, %v2244
        %v3637 = vpack.c.b16 %v2257, %v2245
        %v3638 = vpack.c.b16 %v2258, %v2246
        %v3639 = vpack.c.b16 %v2259, %v2247
        %v3640 = vpack.c.b16 %v2260, %v2248
        %v3641 = vpack.c.b16 %v2261, %v2249
        %v3642 = vpack.c.b16 %v2262, %v2250
        %v3643 = vpack.c.b16 %v2263, %v2251
        %v3644 = vpack.c.b16 %v2264, %v2252
        %v3645 = vpack.c.b16 %v2277, %v2265
        %v3646 = vpack.c.b16 %v2278, %v2266
        %v3647 = vpack.c.b16 %v2279, %v2267
        %v3648 = vpack.c.b16 %v2280, %v2268
        %v3649 = vpack.c.b16 %v2281, %v2269
        %v3650 = vpack.c.b16 %v2282, %v2270
        %v3651 = vpack.c.b16 %v2283, %v2271
        %v3652 = vpack.c.b16 %v2284, %v2272
        %v3653 = vpack.c.b16 %v2285, %v2273
        %v3654 = vpack.c.b16 %v2286, %v2274
        %v3655 = vpack.c.b16 %v2287, %v2275
        %v3656 = vpack.c.b16 %v2288, %v2276
        %v3657 = vpack.c.b16 %v2301, %v2289
        %v3658 = vpack.c.b16 %v2302, %v2290
        %v3659 = vpack.c.b16 %v2303, %v2291
        %v3660 = vpack.c.b16 %v2304, %v2292
        %v3661 = vpack.c.b16 %v2305, %v2293
        %v3662 = vpack.c.b16 %v2306, %v2294
        %v3663 = vpack.c.b16 %v2307, %v2295
        %v3664 = vpack.c.b16 %v2308, %v2296
        %v3665 = vpack.c.b16 %v2309, %v2297
        %v3666 = vpack.c.b16 %v2310, %v2298
        %v3667 = vpack.c.b16 %v2311, %v2299
        %v3668 = vpack.c.b16 %v2312, %v2300
        %v3669 = vpack.c.b16 %v2325, %v2313
        %v3670 = vpack.c.b16 %v2326, %v2314
        %v3671 = vpack.c.b16 %v2327, %v2315
        %v3672 = vpack.c.b16 %v2328, %v2316
        %v3673 = vpack.c.b16 %v2329, %v2317
        %v3674 = vpack.c.b16 %v2330, %v2318
        %v3675 = vpack.c.b16 %v2331, %v2319
        %v3676 = vpack.c.b16 %v2332, %v2320
        %v3677 = vpack.c.b16 %v2333, %v2321
        %v3678 = vpack.c.b16 %v2334, %v2322
        %v3679 = vpack.c.b16 %v2335, %v2323
        %v3680 = vpack.c.b16 %v2336, %v2324
        %v3681 = vpack.c.b16 %v2349, %v2337
        %v3682 = vpack.c.b16 %v2350, %v2338
        %v3683 = vpack.c.b16 %v2351, %v2339
        %v3684 = vpack.c.b16 %v2352, %v2340
        %v3685 = vpack.c.b16 %v2353, %v2341
        %v3686 = vpack.c.b16 %v2354, %v2342
        %v3687 = vpack.c.b16 %v2355, %v2343
        %v3688 = vpack.c.b16 %v2356, %v2344
        %v3689 = vpack.c.b16 %v2357, %v2345
        %v3690 = vpack.c.b16 %v2358, %v2346
        %v3691 = vpack.c.b16 %v2359, %v2347
        %v3692 = vpack.c.b16 %v2360, %v2348
        %v3693 = vpack.c.b16 %v2373, %v2361
        %v3694 = vpack.c.b16 %v2374, %v2362
        %v3695 = vpack.c.b16 %v2375, %v2363
        %v3696 = vpack.c.b16 %v2376, %v2364
        %v3697 = vpack.c.b16 %v2377, %v2365
        %v3698 = vpack.c.b16 %v2378, %v2366
        %v3699 = vpack.c.b16 %v2379, %v2367
        %v3700 = vpack.c.b16 %v2380, %v2368
        %v3701 = vpack.c.b16 %v2381, %v2369
        %v3702 = vpack.c.b16 %v2382, %v2370
        %v3703 = vpack.c.b16 %v2383, %v2371
        %v3704 = vpack.c.b16 %v2384, %v2372
        %v3705 = vpack.c.b16 %v2397, %v2385
        %v3706 = vpack.c.b16 %v2398, %v2386
        %v3707 = vpack.c.b16 %v2399, %v2387
        %v3708 = vpack.c.b16 %v2400, %v2388
        %v3709 = vpack.c.b16 %v2401, %v2389
        %v3710 = vpack.c.b16 %v2402, %v2390
        %v3711 = vpack.c.b16 %v2403, %v2391
        %v3712 = vpack.c.b16 %v2404, %v2392
        %v3713 = vpack.c.b16 %v2405, %v2393
        %v3714 = vpack.c.b16 %v2406, %v2394
        %v3715 = vpack.c.b16 %v2407, %v2395
        %v3716 = vpack.c.b16 %v2408, %v2396
        %v3717 = vpack.c.b16 %v2421, %v2409
        %v3718 = vpack.c.b16 %v2422, %v2410
        %v3719 = vpack.c.b16 %v2423, %v2411
        %v3720 = vpack.c.b16 %v2424, %v2412
        %v3721 = vpack.c.b16 %v2425, %v2413
        %v3722 = vpack.c.b16 %v2426, %v2414
        %v3723 = vpack.c.b16 %v2427, %v2415
        %v3724 = vpack.c.b16 %v2428, %v2416
        %v3725 = vpack.c.b16 %v2429, %v2417
        %v3726 = vpack.c.b16 %v2430, %v2418
        %v3727 = vpack.c.b16 %v2431, %v2419
        %v3728 = vpack.c.b16 %v2432, %v2420
        %v3729 = vpack.c.b16 %v2445, %v2433
        %v3730 = vpack.c.b16 %v2446, %v2434
        %v3731 = vpack.c.b16 %v2447, %v2435
        %v3732 = vpack.c.b16 %v2448, %v2436
        %v3733 = vpack.c.b16 %v2449, %v2437
        %v3734 = vpack.c.b16 %v2450, %v2438
        %v3735 = vpack.c.b16 %v2451, %v2439
        %v3736 = vpack.c.b16 %v2452, %v2440
        %v3737 = vpack.c.b16 %v2453, %v2441
        %v3738 = vpack.c.b16 %v2454, %v2442
        %v3739 = vpack.c.b16 %v2455, %v2443
        %v3740 = vpack.c.b16 %v2456, %v2444
        %v3741 = vpack.c.b16 %v2469, %v2457
        %v3742 = vpack.c.b16 %v2470, %v2458
        %v3743 = vpack.c.b16 %v2471, %v2459
        %v3744 = vpack.c.b16 %v2472, %v2460
        %v3745 = vpack.c.b16 %v2473, %v2461
        %v3746 = vpack.c.b16 %v2474, %v2462
        %v3747 = vpack.c.b16 %v2475, %v2463
        %v3748 = vpack.c.b16 %v2476, %v2464
        %v3749 = vpack.c.b16 %v2477, %v2465
        %v3750 = vpack.c.b16 %v2478, %v2466
        %v3751 = vpack.c.b16 %v2479, %v2467
        %v3752 = vpack.c.b16 %v2480, %v2468
        %v3753 = vpack.c.b16 %v2493, %v2481
        %v3754 = vpack.c.b16 %v2494, %v2482
        %v3755 = vpack.c.b16 %v2495, %v2483
        %v3756 = vpack.c.b16 %v2496, %v2484
        %v3757 = vpack.c.b16 %v2497, %v2485
        %v3758 = vpack.c.b16 %v2498, %v2486
        %v3759 = vpack.c.b16 %v2499, %v2487
        %v3760 = vpack.c.b16 %v2500, %v2488
        %v3761 = vpack.c.b16 %v2501, %v2489
        %v3762 = vpack.c.b16 %v2502, %v2490
        %v3763 = vpack.c.b16 %v2503, %v2491
        %v3764 = vpack.c.b16 %v2504, %v2492
        %v3765 = vpack.c.b16 %v2517, %v2505
        %v3766 = vpack.c.b16 %v2518, %v2506
        %v3767 = vpack.c.b16 %v2519, %v2507
        %v3768 = vpack.c.b16 %v2520, %v2508
        %v3769 = vpack.c.b16 %v2521, %v2509
        %v3770 = vpack.c.b16 %v2522, %v2510
        %v3771 = vpack.c.b16 %v2523, %v2511
        %v3772 = vpack.c.b16 %v2524, %v2512
        %v3773 = vpack.c.b16 %v2525, %v2513
        %v3774 = vpack.c.b16 %v2526, %v2514
        %v3775 = vpack.c.b16 %v2527, %v2515
        %v3776 = vpack.c.b16 %v2528, %v2516
        %v3777 = vpack.c.b16 %v2541, %v2529
        %v3778 = vpack.c.b16 %v2542, %v2530
        %v3779 = vpack.c.b16 %v2543, %v2531
        %v3780 = vpack.c.b16 %v2544, %v2532
        %v3781 = vpack.c.b16 %v2545, %v2533
        %v3782 = vpack.c.b16 %v2546, %v2534
        %v3783 = vpack.c.b16 %v2547, %v2535
        %v3784 = vpack.c.b16 %v2548, %v2536
        %v3785 = vpack.c.b16 %v2549, %v2537
        %v3786 = vpack.c.b16 %v2550, %v2538
        %v3787 = vpack.c.b16 %v2551, %v2539
        %v3788 = vpack.c.b16 %v2552, %v2540
        %v3789 = vpack.c.b16 %v2565, %v2553
        %v3790 = vpack.c.b16 %v2566, %v2554
        %v3791 = vpack.c.b16 %v2567, %v2555
        %v3792 = vpack.c.b16 %v2568, %v2556
        %v3793 = vpack.c.b16 %v2569, %v2557
        %v3794 = vpack.c.b16 %v2570, %v2558
        %v3795 = vpack.c.b16 %v2571, %v2559
        %v3796 = vpack.c.b16 %v2572, %v2560
        %v3797 = vpack.c.b16 %v2573, %v2561
        %v3798 = vpack.c.b16 %v2574, %v2562
        %v3799 = vpack.c.b16 %v2575, %v2563
        %v3800 = vpack.c.b16 %v2576, %v2564
        %v3801 = vpack.c.b16 %v2589, %v2577
        %v3802 = vpack.c.b16 %v2590, %v2578
        %v3803 = vpack.c.b16 %v2591, %v2579
        %v3804 = vpack.c.b16 %v2592, %v2580
        %v3805 = vpack.c.b16 %v2593, %v2581
        %v3806 = vpack.c.b16 %v2594, %v2582
        %v3807 = vpack.c.b16 %v2595, %v2583
        %v3808 = vpack.c.b16 %v2596, %v2584
        %v3809 = vpack.c.b16 %v2597, %v2585
        %v3810 = vpack.c.b16 %v2598, %v2586
        %v3811 = vpack.c.b16 %v2599, %v2587
        %v3812 = vpack.c.b16 %v2600, %v2588
        %v3813 = vpack.c.b16 %v2613, %v2601
        %v3814 = vpack.c.b16 %v2614, %v2602
        %v3815 = vpack.c.b16 %v2615, %v2603
        %v3816 = vpack.c.b16 %v2616, %v2604
        %v3817 = vpack.c.b16 %v2617, %v2605
        %v3818 = vpack.c.b16 %v2618, %v2606
        %v3819 = vpack.c.b16 %v2619, %v2607
        %v3820 = vpack.c.b16 %v2620, %v2608
        %v3821 = vpack.c.b16 %v2621, %v2609
        %v3822 = vpack.c.b16 %v2622, %v2610
        %v3823 = vpack.c.b16 %v2623, %v2611
        %v3824 = vpack.c.b16 %v2624, %v2612
        %v3825 = vpack.c.b16 %v2637, %v2625
        %v3826 = vpack.c.b16 %v2638, %v2626
        %v3827 = vpack.c.b16 %v2639, %v2627
        %v3828 = vpack.c.b16 %v2640, %v2628
        %v3829 = vpack.c.b16 %v2641, %v2629
        %v3830 = vpack.c.b16 %v2642, %v2630
        %v3831 = vpack.c.b16 %v2643, %v2631
        %v3832 = vpack.c.b16 %v2644, %v2632
        %v3833 = vpack.c.b16 %v2645, %v2633
        %v3834 = vpack.c.b16 %v2646, %v2634
        %v3835 = vpack.c.b16 %v2647, %v2635
        %v3836 = vpack.c.b16 %v2648, %v2636
        %v3837 = vpack.c.b16 %v2661, %v2649
        %v3838 = vpack.c.b16 %v2662, %v2650
        %v3839 = vpack.c.b16 %v2663, %v2651
        %v3840 = vpack.c.b16 %v2664, %v2652
        %v3841 = vpack.c.b16 %v2665, %v2653
        %v3842 = vpack.c.b16 %v2666, %v2654
        %v3843 = vpack.c.b16 %v2667, %v2655
        %v3844 = vpack.c.b16 %v2668, %v2656
        %v3845 = vpack.c.b16 %v2669, %v2657
        %v3846 = vpack.c.b16 %v2670, %v2658
        %v3847 = vpack.c.b16 %v2671, %v2659
        %v3848 = vpack.c.b16 %v2672, %v2660
        %v3849 = vpack.c.b16 %v2685, %v2673
        %v3850 = vpack.c.b16 %v2686, %v2674
        %v3851 = vpack.c.b16 %v2687, %v2675
        %v3852 = vpack.c.b16 %v2688, %v2676
        %v3853 = vpack.c.b16 %v2689, %v2677
        %v3854 = vpack.c.b16 %v2690, %v2678
        %v3855 = vpack.c.b16 %v2691, %v2679
        %v3856 = vpack.c.b16 %v2692, %v2680
        %v3857 = vpack.c.b16 %v2693, %v2681
        %v3858 = vpack.c.b16 %v2694, %v2682
        %v3859 = vpack.c.b16 %v2695, %v2683
        %v3860 = vpack.c.b16 %v2696, %v2684
        %v3861 = vpack.c.b16 %v2709, %v2697
        %v3862 = vpack.c.b16 %v2710, %v2698
        %v3863 = vpack.c.b16 %v2711, %v2699
        %v3864 = vpack.c.b16 %v2712, %v2700
        %v3865 = vpack.c.b16 %v2713, %v2701
        %v3866 = vpack.c.b16 %v2714, %v2702
        %v3867 = vpack.c.b16 %v2715, %v2703
        %v3868 = vpack.c.b16 %v2716, %v2704
        %v3869 = vpack.c.b16 %v2717, %v2705
        %v3870 = vpack.c.b16 %v2718, %v2706
        %v3871 = vpack.c.b16 %v2719, %v2707
        %v3872 = vpack.c.b16 %v2720, %v2708
        %v3873 = vpack.c.b16 %v2733, %v2721
        %v3874 = vpack.c.b16 %v2734, %v2722
        %v3875 = vpack.c.b16 %v2735, %v2723
        %v3876 = vpack.c.b16 %v2736, %v2724
        %v3877 = vpack.c.b16 %v2737, %v2725
        %v3878 = vpack.c.b16 %v2738, %v2726
        %v3879 = vpack.c.b16 %v2739, %v2727
        %v3880 = vpack.c.b16 %v2740, %v2728
        %v3881 = vpack.c.b16 %v2741, %v2729
        %v3882 = vpack.c.b16 %v2742, %v2730
        %v3883 = vpack.c.b16 %v2743, %v2731
        %v3884 = vpack.c.b16 %v2744, %v2732
        %v3885 = vpack.c.b16 %v2757, %v2745
        %v3886 = vpack.c.b16 %v2758, %v2746
        %v3887 = vpack.c.b16 %v2759, %v2747
        %v3888 = vpack.c.b16 %v2760, %v2748
        %v3889 = vpack.c.b16 %v2761, %v2749
        %v3890 = vpack.c.b16 %v2762, %v2750
        %v3891 = vpack.c.b16 %v2763, %v2751
        %v3892 = vpack.c.b16 %v2764, %v2752
        %v3893 = vpack.c.b16 %v2765, %v2753
        %v3894 = vpack.c.b16 %v2766, %v2754
        %v3895 = vpack.c.b16 %v2767, %v2755
        %v3896 = vpack.c.b16 %v2768, %v2756
        %v3897 = vpack.c.b16 %v2781, %v2769
        %v3898 = vpack.c.b16 %v2782, %v2770
        %v3899 = vpack.c.b16 %v2783, %v2771
        %v3900 = vpack.c.b16 %v2784, %v2772
        %v3901 = vpack.c.b16 %v2785, %v2773
        %v3902 = vpack.c.b16 %v2786, %v2774
        %v3903 = vpack.c.b16 %v2787, %v2775
        %v3904 = vpack.c.b16 %v2788, %v2776
        %v3905 = vpack.c.b16 %v2789, %v2777
        %v3906 = vpack.c.b16 %v2790, %v2778
        %v3907 = vpack.c.b16 %v2791, %v2779
        %v3908 = vpack.c.b16 %v2792, %v2780
        %v3909 = vpack.c.b16 %v2805, %v2793
        %v3910 = vpack.c.b16 %v2806, %v2794
        %v3911 = vpack.c.b16 %v2807, %v2795
        %v3912 = vpack.c.b16 %v2808, %v2796
        %v3913 = vpack.c.b16 %v2809, %v2797
        %v3914 = vpack.c.b16 %v2810, %v2798
        %v3915 = vpack.c.b16 %v2811, %v2799
        %v3916 = vpack.c.b16 %v2812, %v2800
        %v3917 = vpack.c.b16 %v2813, %v2801
        %v3918 = vpack.c.b16 %v2814, %v2802
        %v3919 = vpack.c.b16 %v2815, %v2803
        %v3920 = vpack.c.b16 %v2816, %v2804
        %v3921 = vpack.c.b16 %v2829, %v2817
        %v3922 = vpack.c.b16 %v2830, %v2818
        %v3923 = vpack.c.b16 %v2831, %v2819
        %v3924 = vpack.c.b16 %v2832, %v2820
        %v3925 = vpack.c.b16 %v2833, %v2821
        %v3926 = vpack.c.b16 %v2834, %v2822
        %v3927 = vpack.c.b16 %v2835, %v2823
        %v3928 = vpack.c.b16 %v2836, %v2824
        %v3929 = vpack.c.b16 %v2837, %v2825
        %v3930 = vpack.c.b16 %v2838, %v2826
        %v3931 = vpack.c.b16 %v2839, %v2827
        %v3932 = vpack.c.b16 %v2840, %v2828
        %v3933 = vpack.c.b16 %v2853, %v2841
        %v3934 = vpack.c.b16 %v2854, %v2842
        %v3935 = vpack.c.b16 %v2855, %v2843
        %v3936 = vpack.c.b16 %v2856, %v2844
        %v3937 = vpack.c.b16 %v2857, %v2845
        %v3938 = vpack.c.b16 %v2858, %v2846
        %v3939 = vpack.c.b16 %v2859, %v2847
        %v3940 = vpack.c.b16 %v2860, %v2848
        %v3941 = vpack.c.b16 %v2861, %v2849
        %v3942 = vpack.c.b16 %v2862, %v2850
        %v3943 = vpack.c.b16 %v2863, %v2851
        %v3944 = vpack.c.b16 %v2864, %v2852
        %v3945 = vpack.c.b16 %v2877, %v2865
        %v3946 = vpack.c.b16 %v2878, %v2866
        %v3947 = vpack.c.b16 %v2879, %v2867
        %v3948 = vpack.c.b16 %v2880, %v2868
        %v3949 = vpack.c.b16 %v2881, %v2869
        %v3950 = vpack.c.b16 %v2882, %v2870
        %v3951 = vpack.c.b16 %v2883, %v2871
        %v3952 = vpack.c.b16 %v2884, %v2872
        %v3953 = vpack.c.b16 %v2885, %v2873
        %v3954 = vpack.c.b16 %v2886, %v2874
        %v3955 = vpack.c.b16 %v2887, %v2875
        %v3956 = vpack.c.b16 %v2888, %v2876
        %v3957 = vpack.c.b16 %v2901, %v2889
        %v3958 = vpack.c.b16 %v2902, %v2890
        %v3959 = vpack.c.b16 %v2903, %v2891
        %v3960 = vpack.c.b16 %v2904, %v2892
        %v3961 = vpack.c.b16 %v2905, %v2893
        %v3962 = vpack.c.b16 %v2906, %v2894
        %v3963 = vpack.c.b16 %v2907, %v2895
        %v3964 = vpack.c.b16 %v2908, %v2896
        %v3965 = vpack.c.b16 %v2909, %v2897
        %v3966 = vpack.c.b16 %v2910, %v2898
        %v3967 = vpack.c.b16 %v2911, %v2899
        %v3968 = vpack.c.b16 %v2912, %v2900
        %v3969 = vpack.c.b16 %v2925, %v2913
        %v3970 = vpack.c.b16 %v2926, %v2914
        %v3971 = vpack.c.b16 %v2927, %v2915
        %v3972 = vpack.c.b16 %v2928, %v2916
        %v3973 = vpack.c.b16 %v2929, %v2917
        %v3974 = vpack.c.b16 %v2930, %v2918
        %v3975 = vpack.c.b16 %v2931, %v2919
        %v3976 = vpack.c.b16 %v2932, %v2920
        %v3977 = vpack.c.b16 %v2933, %v2921
        %v3978 = vpack.c.b16 %v2934, %v2922
        %v3979 = vpack.c.b16 %v2935, %v2923
        %v3980 = vpack.c.b16 %v2936, %v2924
        %v3981 = vpack.c.b16 %v2949, %v2937
        %v3982 = vpack.c.b16 %v2950, %v2938
        %v3983 = vpack.c.b16 %v2951, %v2939
        %v3984 = vpack.c.b16 %v2952, %v2940
        %v3985 = vpack.c.b16 %v2953, %v2941
        %v3986 = vpack.c.b16 %v2954, %v2942
        %v3987 = vpack.c.b16 %v2955, %v2943
        %v3988 = vpack.c.b16 %v2956, %v2944
        %v3989 = vpack.c.b16 %v2957, %v2945
        %v3990 = vpack.c.b16 %v2958, %v2946
        %v3991 = vpack.c.b16 %v2959, %v2947
        %v3992 = vpack.c.b16 %v2960, %v2948
        %v3993 = vpack.c.b16 %v2973, %v2961
        %v3994 = vpack.c.b16 %v2974, %v2962
        %v3995 = vpack.c.b16 %v2975, %v2963
        %v3996 = vpack.c.b16 %v2976, %v2964
        %v3997 = vpack.c.b16 %v2977, %v2965
        %v3998 = vpack.c.b16 %v2978, %v2966
        %v3999 = vpack.c.b16 %v2979, %v2967
        %v4000 = vpack.c.b16 %v2980, %v2968
        %v4001 = vpack.c.b16 %v2981, %v2969
        %v4002 = vpack.c.b16 %v2982, %v2970
        %v4003 = vpack.c.b16 %v2983, %v2971
        %v4004 = vpack.c.b16 %v2984, %v2972
        %v4005 = vpack.c.b16 %v2997, %v2985
        %v4006 = vpack.c.b16 %v2998, %v2986
        %v4007 = vpack.c.b16 %v2999, %v2987
        %v4008 = vpack.c.b16 %v3000, %v2988
        %v4009 = vpack.c.b16 %v3001, %v2989
        %v4010 = vpack.c.b16 %v3002, %v2990
        %v4011 = vpack.c.b16 %v3003, %v2991
        %v4012 = vpack.c.b16 %v3004, %v2992
        %v4013 = vpack.c.b16 %v3005, %v2993
        %v4014 = vpack.c.b16 %v3006, %v2994
        %v4015 = vpack.c.b16 %v3007, %v2995
        %v4016 = vpack.c.b16 %v3008, %v2996
        %v4017 = vpack.c.b16 %v3021, %v3009
        %v4018 = vpack.c.b16 %v3022, %v3010
        %v4019 = vpack.c.b16 %v3023, %v3011
        %v4020 = vpack.c.b16 %v3024, %v3012
        %v4021 = vpack.c.b16 %v3025, %v3013
        %v4022 = vpack.c.b16 %v3026, %v3014
        %v4023 = vpack.c.b16 %v3027, %v3015
        %v4024 = vpack.c.b16 %v3028, %v3016
        %v4025 = vpack.c.b16 %v3029, %v3017
        %v4026 = vpack.c.b16 %v3030, %v3018
        %v4027 = vpack.c.b16 %v3031, %v3019
        %v4028 = vpack.c.b16 %v3032, %v3020
        %v4029 = vpack.c.b16 %v3045, %v3033
        %v4030 = vpack.c.b16 %v3046, %v3034
        %v4031 = vpack.c.b16 %v3047, %v3035
        %v4032 = vpack.c.b16 %v3048, %v3036
        %v4033 = vpack.c.b16 %v3049, %v3037
        %v4034 = vpack.c.b16 %v3050, %v3038
        %v4035 = vpack.c.b16 %v3051, %v3039
        %v4036 = vpack.c.b16 %v3052, %v3040
        %v4037 = vpack.c.b16 %v3053, %v3041
        %v4038 = vpack.c.b16 %v3054, %v3042
        %v4039 = vpack.c.b16 %v3055, %v3043
        %v4040 = vpack.c.b16 %v3056, %v3044
        %v4041 = vpack.c.b16 %v3069, %v3057
        %v4042 = vpack.c.b16 %v3070, %v3058
        %v4043 = vpack.c.b16 %v3071, %v3059
        %v4044 = vpack.c.b16 %v3072, %v3060
        %v4045 = vpack.c.b16 %v3073, %v3061
        %v4046 = vpack.c.b16 %v3074, %v3062
        %v4047 = vpack.c.b16 %v3075, %v3063
        %v4048 = vpack.c.b16 %v3076, %v3064
        %v4049 = vpack.c.b16 %v3077, %v3065
        %v4050 = vpack.c.b16 %v3078, %v3066
        %v4051 = vpack.c.b16 %v3079, %v3067
        %v4052 = vpack.c.b16 %v3080, %v3068
        %v4053 = vpack.c.b16 %v3093, %v3081
        %v4054 = vpack.c.b16 %v3094, %v3082
        %v4055 = vpack.c.b16 %v3095, %v3083
        %v4056 = vpack.c.b16 %v3096, %v3084
        %v4057 = vpack.c.b16 %v3097, %v3085
        %v4058 = vpack.c.b16 %v3098, %v3086
        %v4059 = vpack.c.b16 %v3099, %v3087
        %v4060 = vpack.c.b16 %v3100, %v3088
        %v4061 = vpack.c.b16 %v3101, %v3089
        %v4062 = vpack.c.b16 %v3102, %v3090
        %v4063 = vpack.c.b16 %v3103, %v3091
        %v4064 = vpack.c.b16 %v3104, %v3092
        %v4065 = vpack.c.b16 %v3117, %v3105
        %v4066 = vpack.c.b16 %v3118, %v3106
        %v4067 = vpack.c.b16 %v3119, %v3107
        %v4068 = vpack.c.b16 %v3120, %v3108
        %v4069 = vpack.c.b16 %v3121, %v3109
        %v4070 = vpack.c.b16 %v3122, %v3110
        %v4071 = vpack.c.b16 %v3123, %v3111
        %v4072 = vpack.c.b16 %v3124, %v3112
        %v4073 = vpack.c.b16 %v3125, %v3113
        %v4074 = vpack.c.b16 %v3126, %v3114
        %v4075 = vpack.c.b16 %v3127, %v3115
        %v4076 = vpack.c.b16 %v3128, %v3116
        %v4077 = vpack.c.b16 %v3141, %v3129
        %v4078 = vpack.c.b16 %v3142, %v3130
        %v4079 = vpack.c.b16 %v3143, %v3131
        %v4080 = vpack.c.b16 %v3144, %v3132
        %v4081 = vpack.c.b16 %v3145, %v3133
        %v4082 = vpack.c.b16 %v3146, %v3134
        %v4083 = vpack.c.b16 %v3147, %v3135
        %v4084 = vpack.c.b16 %v3148, %v3136
        %v4085 = vpack.c.b16 %v3149, %v3137
        %v4086 = vpack.c.b16 %v3150, %v3138
        %v4087 = vpack.c.b16 %v3151, %v3139
        %v4088 = vpack.c.b16 %v3152, %v3140
        %v4089 = vpack.c.b16 %v3165, %v3153
        %v4090 = vpack.c.b16 %v3166, %v3154
        %v4091 = vpack.c.b16 %v3167, %v3155
        %v4092 = vpack.c.b16 %v3168, %v3156
        %v4093 = vpack.c.b16 %v3169, %v3157
        %v4094 = vpack.c.b16 %v3170, %v3158
        %v4095 = vpack.c.b16 %v3171, %v3159
        %v4096 = vpack.c.b16 %v3172, %v3160
        %v4097 = vpack.c.b16 %v3173, %v3161
        %v4098 = vpack.c.b16 %v3174, %v3162
        %v4099 = vpack.c.b16 %v3175, %v3163
        %v4100 = vpack.c.b16 %v3176, %v3164
        %v4101 = vpack.c.b16 %v3189, %v3177
        %v4102 = vpack.c.b16 %v3190, %v3178
        %v4103 = vpack.c.b16 %v3191, %v3179
        %v4104 = vpack.c.b16 %v3192, %v3180
        %v4105 = vpack.c.b16 %v3193, %v3181
        %v4106 = vpack.c.b16 %v3194, %v3182
        %v4107 = vpack.c.b16 %v3195, %v3183
        %v4108 = vpack.c.b16 %v3196, %v3184
        %v4109 = vpack.c.b16 %v3197, %v3185
        %v4110 = vpack.c.b16 %v3198, %v3186
        %v4111 = vpack.c.b16 %v3199, %v3187
        %v4112 = vpack.c.b16 %v3200, %v3188
        %v4113 = vpack.c.b16 %v3213, %v3201
        %v4114 = vpack.c.b16 %v3214, %v3202
        %v4115 = vpack.c.b16 %v3215, %v3203
        %v4116 = vpack.c.b16 %v3216, %v3204
        %v4117 = vpack.c.b16 %v3217, %v3205
        %v4118 = vpack.c.b16 %v3218, %v3206
        %v4119 = vpack.c.b16 %v3219, %v3207
        %v4120 = vpack.c.b16 %v3220, %v3208
        %v4121 = vpack.c.b16 %v3221, %v3209
        %v4122 = vpack.c.b16 %v3222, %v3210
        %v4123 = vpack.c.b16 %v3223, %v3211
        %v4124 = vpack.c.b16 %v3224, %v3212
        %v4125 = vpack.c.b16 %v3237, %v3225
        %v4126 = vpack.c.b16 %v3238, %v3226
        %v4127 = vpack.c.b16 %v3239, %v3227
        %v4128 = vpack.c.b16 %v3240, %v3228
        %v4129 = vpack.c.b16 %v3241, %v3229
        %v4130 = vpack.c.b16 %v3242, %v3230
        %v4131 = vpack.c.b16 %v3243, %v3231
        %v4132 = vpack.c.b16 %v3244, %v3232
        %v4133 = vpack.c.b16 %v3245, %v3233
        %v4134 = vpack.c.b16 %v3246, %v3234
        %v4135 = vpack.c.b16 %v3247, %v3235
        %v4136 = vpack.c.b16 %v3248, %v3236
        %v4137 = vpack.c.b16 %v3261, %v3249
        %v4138 = vpack.c.b16 %v3262, %v3250
        %v4139 = vpack.c.b16 %v3263, %v3251
        %v4140 = vpack.c.b16 %v3264, %v3252
        %v4141 = vpack.c.b16 %v3265, %v3253
        %v4142 = vpack.c.b16 %v3266, %v3254
        %v4143 = vpack.c.b16 %v3267, %v3255
        %v4144 = vpack.c.b16 %v3268, %v3256
        %v4145 = vpack.c.b16 %v3269, %v3257
        %v4146 = vpack.c.b16 %v3270, %v3258
        %v4147 = vpack.c.b16 %v3271, %v3259
        %v4148 = vpack.c.b16 %v3272, %v3260
        %v4149 = vpack.c.b16 %v3285, %v3273
        %v4150 = vpack.c.b16 %v3286, %v3274
        %v4151 = vpack.c.b16 %v3287, %v3275
        %v4152 = vpack.c.b16 %v3288, %v3276
        %v4153 = vpack.c.b16 %v3289, %v3277
        %v4154 = vpack.c.b16 %v3290, %v3278
        %v4155 = vpack.c.b16 %v3291, %v3279
        %v4156 = vpack.c.b16 %v3292, %v3280
        %v4157 = vpack.c.b16 %v3293, %v3281
        %v4158 = vpack.c.b16 %v3294, %v3282
        %v4159 = vpack.c.b16 %v3295, %v3283
        %v4160 = vpack.c.b16 %v3296, %v3284
        %v4161 = vpack.c.b16 %v3309, %v3297
        %v4162 = vpack.c.b16 %v3310, %v3298
        %v4163 = vpack.c.b16 %v3311, %v3299
        %v4164 = vpack.c.b16 %v3312, %v3300
        %v4165 = vpack.c.b16 %v3313, %v3301
        %v4166 = vpack.c.b16 %v3314, %v3302
        %v4167 = vpack.c.b16 %v3315, %v3303
        %v4168 = vpack.c.b16 %v3316, %v3304
        %v4169 = vpack.c.b16 %v3317, %v3305
        %v4170 = vpack.c.b16 %v3318, %v3306
        %v4171 = vpack.c.b16 %v3319, %v3307
        %v4172 = vpack.c.b16 %v3320, %v3308
        %v4173 = vpack.c.b16 %v3333, %v3321
        %v4174 = vpack.c.b16 %v3334, %v3322
        %v4175 = vpack.c.b16 %v3335, %v3323
        %v4176 = vpack.c.b16 %v3336, %v3324
        %v4177 = vpack.c.b16 %v3337, %v3325
        %v4178 = vpack.c.b16 %v3338, %v3326
        %v4179 = vpack.c.b16 %v3339, %v3327
        %v4180 = vpack.c.b16 %v3340, %v3328
        %v4181 = vpack.c.b16 %v3341, %v3329
        %v4182 = vpack.c.b16 %v3342, %v3330
        %v4183 = vpack.c.b16 %v3343, %v3331
        %v4184 = vpack.c.b16 %v3344, %v3332
        %v4185 = vpack.c.b16 %v3357, %v3345
        %v4186 = vpack.c.b16 %v3358, %v3346
        %v4187 = vpack.c.b16 %v3359, %v3347
        %v4188 = vpack.c.b16 %v3360, %v3348
        %v4189 = vpack.c.b16 %v3361, %v3349
        %v4190 = vpack.c.b16 %v3362, %v3350
        %v4191 = vpack.c.b16 %v3363, %v3351
        %v4192 = vpack.c.b16 %v3364, %v3352
        %v4193 = vpack.c.b16 %v3365, %v3353
        %v4194 = vpack.c.b16 %v3366, %v3354
        %v4195 = vpack.c.b16 %v3367, %v3355
        %v4196 = vpack.c.b16 %v3368, %v3356
        %v4197 = vpack.c.b16 %v3381, %v3369
        %v4198 = vpack.c.b16 %v3382, %v3370
        %v4199 = vpack.c.b16 %v3383, %v3371
        %v4200 = vpack.c.b16 %v3384, %v3372
        %v4201 = vpack.c.b16 %v3385, %v3373
        %v4202 = vpack.c.b16 %v3386, %v3374
        %v4203 = vpack.c.b16 %v3387, %v3375
        %v4204 = vpack.c.b16 %v3388, %v3376
        %v4205 = vpack.c.b16 %v3389, %v3377
        %v4206 = vpack.c.b16 %v3390, %v3378
        %v4207 = vpack.c.b16 %v3391, %v3379
        %v4208 = vpack.c.b16 %v3392, %v3380
        %v4209 = vpack.c.b16 %v3405, %v3393
        %v4210 = vpack.c.b16 %v3406, %v3394
        %v4211 = vpack.c.b16 %v3407, %v3395
        %v4212 = vpack.c.b16 %v3408, %v3396
        %v4213 = vpack.c.b16 %v3409, %v3397
        %v4214 = vpack.c.b16 %v3410, %v3398
        %v4215 = vpack.c.b16 %v3411, %v3399
        %v4216 = vpack.c.b16 %v3412, %v3400
        %v4217 = vpack.c.b16 %v3413, %v3401
        %v4218 = vpack.c.b16 %v3414, %v3402
        %v4219 = vpack.c.b16 %v3415, %v3403
        %v4220 = vpack.c.b16 %v3416, %v3404
        %v4221 = vpack.c.b16 %v3429, %v3417
        %v4222 = vpack.c.b16 %v3430, %v3418
        %v4223 = vpack.c.b16 %v3431, %v3419
        %v4224 = vpack.c.b16 %v3432, %v3420
        %v4225 = vpack.c.b16 %v3433, %v3421
        %v4226 = vpack.c.b16 %v3434, %v3422
        %v4227 = vpack.c.b16 %v3435, %v3423
        %v4228 = vpack.c.b16 %v3436, %v3424
        %v4229 = vpack.c.b16 %v3437, %v3425
        %v4230 = vpack.c.b16 %v3438, %v3426
        %v4231 = vpack.c.b16 %v3439, %v3427
        %v4232 = vpack.c.b16 %v3440, %v3428
        %v4233 = vpack.c.b16 %v3453, %v3441
        %v4234 = vpack.c.b16 %v3454, %v3442
        %v4235 = vpack.c.b16 %v3455, %v3443
        %v4236 = vpack.c.b16 %v3456, %v3444
        %v4237 = vpack.c.b16 %v3457, %v3445
        %v4238 = vpack.c.b16 %v3458, %v3446
        %v4239 = vpack.c.b16 %v3459, %v3447
        %v4240 = vpack.c.b16 %v3460, %v3448
        %v4241 = vpack.c.b16 %v3461, %v3449
        %v4242 = vpack.c.b16 %v3462, %v3450
        %v4243 = vpack.c.b16 %v3463, %v3451
        %v4244 = vpack.c.b16 %v3464, %v3452
        %v4245 = vpack.c.b16 %v3477, %v3465
        %v4246 = vpack.c.b16 %v3478, %v3466
        %v4247 = vpack.c.b16 %v3479, %v3467
        %v4248 = vpack.c.b16 %v3480, %v3468
        %v4249 = vpack.c.b16 %v3481, %v3469
        %v4250 = vpack.c.b16 %v3482, %v3470
        %v4251 = vpack.c.b16 %v3483, %v3471
        %v4252 = vpack.c.b16 %v3484, %v3472
        %v4253 = vpack.c.b16 %v3485, %v3473
        %v4254 = vpack.c.b16 %v3486, %v3474
        %v4255 = vpack.c.b16 %v3487, %v3475
        %v4256 = vpack.c.b16 %v3488, %v3476
        %5025 = vmatpush.bf16.msra.mxu0 %v3573
        %5026 = vmatpush.bf16.msra.mxu0 %v3561
        %5027 = vmatpush.bf16.msra.mxu0 %v3549
        %5028 = vmatpush.bf16.msra.mxu0 %v3537
        %5029 = vmatpush.bf16.msra.mxu0 %v3525
        %5030 = vmatpush.bf16.msra.mxu0 %v3513
        %5031 = vmatpush.bf16.msra.mxu0 %v3501
        %5032 = vmatpush.bf16.msra.mxu0 %v3489
        %5033 = vmatmul.bf16.gmra.mxu0 %v401
        %v5034 = vpop.f32.mrf.mxu0
        %v5035 = vadd.f32 0.0, %v5034
        %v5036 = vpop.f32.mrf.mxu0
        %v5037 = vadd.f32 0.0, %v5036
        %5038 = vmatmul.bf16.gmra.mxu0 %v409
        %v5039 = vpop.f32.mrf.mxu0
        %v5040 = vadd.f32 0.0, %v5039
        %v5041 = vpop.f32.mrf.mxu0
        %v5042 = vadd.f32 0.0, %v5041
        %5043 = vdwg.mxu0
        %5044 = vmatpush.bf16.msra.mxu0 %v3669
        %5045 = vmatpush.bf16.msra.mxu0 %v3657
        %5046 = vmatpush.bf16.msra.mxu0 %v3645
        %5047 = vmatpush.bf16.msra.mxu0 %v3633
        %5048 = vmatpush.bf16.msra.mxu0 %v3621
        %5049 = vmatpush.bf16.msra.mxu0 %v3609
        %5050 = vmatpush.bf16.msra.mxu0 %v3597
        %5051 = vmatpush.bf16.msra.mxu0 %v3585
        %5052 = vmatmul.bf16.gmra.mxu0 %v402
        %v5053 = vpop.f32.mrf.mxu0
        %v5054 = vadd.f32 %v5035, %v5053
        %v5055 = vpop.f32.mrf.mxu0
        %v5056 = vadd.f32 %v5037, %v5055
        %5057 = vmatmul.bf16.gmra.mxu0 %v410
        %v5058 = vpop.f32.mrf.mxu0
        %v5059 = vadd.f32 %v5040, %v5058
        %v5060 = vpop.f32.mrf.mxu0
        %v5061 = vadd.f32 %v5042, %v5060
        %5062 = vdwg.mxu0
        %5063 = vmatpush.bf16.msra.mxu0 %v3765
        %5064 = vmatpush.bf16.msra.mxu0 %v3753
        %5065 = vmatpush.bf16.msra.mxu0 %v3741
        %5066 = vmatpush.bf16.msra.mxu0 %v3729
        %5067 = vmatpush.bf16.msra.mxu0 %v3717
        %5068 = vmatpush.bf16.msra.mxu0 %v3705
        %5069 = vmatpush.bf16.msra.mxu0 %v3693
        %5070 = vmatpush.bf16.msra.mxu0 %v3681
        %5071 = vmatmul.bf16.gmra.mxu0 %v403
        %v5072 = vpop.f32.mrf.mxu0
        %v5073 = vadd.f32 %v5054, %v5072
        %v5074 = vpop.f32.mrf.mxu0
        %v5075 = vadd.f32 %v5056, %v5074
        %5076 = vmatmul.bf16.gmra.mxu0 %v411
        %v5077 = vpop.f32.mrf.mxu0
        %v5078 = vadd.f32 %v5059, %v5077
        %v5079 = vpop.f32.mrf.mxu0
        %v5080 = vadd.f32 %v5061, %v5079
        %5081 = vdwg.mxu0
        %5082 = vmatpush.bf16.msra.mxu0 %v3861
        %5083 = vmatpush.bf16.msra.mxu0 %v3849
        %5084 = vmatpush.bf16.msra.mxu0 %v3837
        %5085 = vmatpush.bf16.msra.mxu0 %v3825
        %5086 = vmatpush.bf16.msra.mxu0 %v3813
        %5087 = vmatpush.bf16.msra.mxu0 %v3801
        %5088 = vmatpush.bf16.msra.mxu0 %v3789
        %5089 = vmatpush.bf16.msra.mxu0 %v3777
        %5090 = vmatmul.bf16.gmra.mxu0 %v404
        %v5091 = vpop.f32.mrf.mxu0
        %v5092 = vadd.f32 %v5073, %v5091
        %v5093 = vpop.f32.mrf.mxu0
        %v5094 = vadd.f32 %v5075, %v5093
        %5095 = vmatmul.bf16.gmra.mxu0 %v412
        %v5096 = vpop.f32.mrf.mxu0
        %v5097 = vadd.f32 %v5078, %v5096
        %v5098 = vpop.f32.mrf.mxu0
        %v5099 = vadd.f32 %v5080, %v5098
        %5100 = vdwg.mxu0
        %5101 = vmatpush.bf16.msra.mxu0 %v3957
        %5102 = vmatpush.bf16.msra.mxu0 %v3945
        %5103 = vmatpush.bf16.msra.mxu0 %v3933
        %5104 = vmatpush.bf16.msra.mxu0 %v3921
        %5105 = vmatpush.bf16.msra.mxu0 %v3909
        %5106 = vmatpush.bf16.msra.mxu0 %v3897
        %5107 = vmatpush.bf16.msra.mxu0 %v3885
        %5108 = vmatpush.bf16.msra.mxu0 %v3873
        %5109 = vmatmul.bf16.gmra.mxu0 %v405
        %v5110 = vpop.f32.mrf.mxu0
        %v5111 = vadd.f32 %v5092, %v5110
        %v5112 = vpop.f32.mrf.mxu0
        %v5113 = vadd.f32 %v5094, %v5112
        %5114 = vmatmul.bf16.gmra.mxu0 %v413
        %v5115 = vpop.f32.mrf.mxu0
        %v5116 = vadd.f32 %v5097, %v5115
        %v5117 = vpop.f32.mrf.mxu0
        %v5118 = vadd.f32 %v5099, %v5117
        %5119 = vdwg.mxu0
        %5120 = vmatpush.bf16.msra.mxu0 %v4053
        %5121 = vmatpush.bf16.msra.mxu0 %v4041
        %5122 = vmatpush.bf16.msra.mxu0 %v4029
        %5123 = vmatpush.bf16.msra.mxu0 %v4017
        %5124 = vmatpush.bf16.msra.mxu0 %v4005
        %5125 = vmatpush.bf16.msra.mxu0 %v3993
        %5126 = vmatpush.bf16.msra.mxu0 %v3981
        %5127 = vmatpush.bf16.msra.mxu0 %v3969
        %5128 = vmatmul.bf16.gmra.mxu0 %v406
        %v5129 = vpop.f32.mrf.mxu0
        %v5130 = vadd.f32 %v5111, %v5129
        %v5131 = vpop.f32.mrf.mxu0
        %v5132 = vadd.f32 %v5113, %v5131
        %5133 = vmatmul.bf16.gmra.mxu0 %v414
        %v5134 = vpop.f32.mrf.mxu0
        %v5135 = vadd.f32 %v5116, %v5134
        %v5136 = vpop.f32.mrf.mxu0
        %v5137 = vadd.f32 %v5118, %v5136
        %5138 = vdwg.mxu0
        %5139 = vmatpush.bf16.msra.mxu0 %v4149
        %5140 = vmatpush.bf16.msra.mxu0 %v4137
        %5141 = vmatpush.bf16.msra.mxu0 %v4125
        %5142 = vmatpush.bf16.msra.mxu0 %v4113
        %5143 = vmatpush.bf16.msra.mxu0 %v4101
        %5144 = vmatpush.bf16.msra.mxu0 %v4089
        %5145 = vmatpush.bf16.msra.mxu0 %v4077
        %5146 = vmatpush.bf16.msra.mxu0 %v4065
        %5147 = vmatmul.bf16.gmra.mxu0 %v407
        %v5148 = vpop.f32.mrf.mxu0
        %v5149 = vadd.f32 %v5130, %v5148
        %v5150 = vpop.f32.mrf.mxu0
        %v5151 = vadd.f32 %v5132, %v5150
        %5152 = vmatmul.bf16.gmra.mxu0 %v415
        %v5153 = vpop.f32.mrf.mxu0
        %v5154 = vadd.f32 %v5135, %v5153
        %v5155 = vpop.f32.mrf.mxu0
        %v5156 = vadd.f32 %v5137, %v5155
        %5157 = vdwg.mxu0
        %5158 = vmatpush.bf16.msra.mxu0 %v4245
        %5159 = vmatpush.bf16.msra.mxu0 %v4233
        %5160 = vmatpush.bf16.msra.mxu0 %v4221
        %5161 = vmatpush.bf16.msra.mxu0 %v4209
        %5162 = vmatpush.bf16.msra.mxu0 %v4197
        %5163 = vmatpush.bf16.msra.mxu0 %v4185
        %5164 = vmatpush.bf16.msra.mxu0 %v4173
        %5165 = vmatpush.bf16.msra.mxu0 %v4161
        %5166 = vmatmul.bf16.gmra.mxu0 %v408
        %v5167 = vpop.f32.mrf.mxu0
        %v5168 = vadd.f32 %v5149, %v5167
        %v5169 = vpop.f32.mrf.mxu0
        %v5170 = vadd.f32 %v5151, %v5169
        %5171 = vmatmul.bf16.gmra.mxu0 %v416
        %v5172 = vpop.f32.mrf.mxu0
        %v5173 = vadd.f32 %v5154, %v5172
        %v5174 = vpop.f32.mrf.mxu0
        %v5175 = vadd.f32 %v5156, %v5174
        %5176 = vdwg.mxu0
        %5177 = vmatpush.bf16.msra.mxu0 %v3574
        %5178 = vmatpush.bf16.msra.mxu0 %v3562
        %5179 = vmatpush.bf16.msra.mxu0 %v3550
        %5180 = vmatpush.bf16.msra.mxu0 %v3538
        %5181 = vmatpush.bf16.msra.mxu0 %v3526
        %5182 = vmatpush.bf16.msra.mxu0 %v3514
        %5183 = vmatpush.bf16.msra.mxu0 %v3502
        %5184 = vmatpush.bf16.msra.mxu0 %v3490
        %5185 = vmatmul.bf16.gmra.mxu0 %v401
        %v5186 = vpop.f32.mrf.mxu0
        %v5187 = vadd.f32 0.0, %v5186
        %v5188 = vpop.f32.mrf.mxu0
        %v5189 = vadd.f32 0.0, %v5188
        %5190 = vmatmul.bf16.gmra.mxu0 %v409
        %v5191 = vpop.f32.mrf.mxu0
        %v5192 = vadd.f32 0.0, %v5191
        %v5193 = vpop.f32.mrf.mxu0
        %v5194 = vadd.f32 0.0, %v5193
        %5195 = vdwg.mxu0
        %5196 = vmatpush.bf16.msra.mxu0 %v3670
        %5197 = vmatpush.bf16.msra.mxu0 %v3658
        %5198 = vmatpush.bf16.msra.mxu0 %v3646
        %5199 = vmatpush.bf16.msra.mxu0 %v3634
        %5200 = vmatpush.bf16.msra.mxu0 %v3622
        %5201 = vmatpush.bf16.msra.mxu0 %v3610
        %5202 = vmatpush.bf16.msra.mxu0 %v3598
        %5203 = vmatpush.bf16.msra.mxu0 %v3586
        %5204 = vmatmul.bf16.gmra.mxu0 %v402
        %v5205 = vpop.f32.mrf.mxu0
        %v5206 = vadd.f32 %v5187, %v5205
        %v5207 = vpop.f32.mrf.mxu0
        %v5208 = vadd.f32 %v5189, %v5207
        %5209 = vmatmul.bf16.gmra.mxu0 %v410
        %v5210 = vpop.f32.mrf.mxu0
        %v5211 = vadd.f32 %v5192, %v5210
        %v5212 = vpop.f32.mrf.mxu0
        %v5213 = vadd.f32 %v5194, %v5212
        %5214 = vdwg.mxu0
        %5215 = vmatpush.bf16.msra.mxu0 %v3766
        %5216 = vmatpush.bf16.msra.mxu0 %v3754
        %5217 = vmatpush.bf16.msra.mxu0 %v3742
        %5218 = vmatpush.bf16.msra.mxu0 %v3730
        %5219 = vmatpush.bf16.msra.mxu0 %v3718
        %5220 = vmatpush.bf16.msra.mxu0 %v3706
        %5221 = vmatpush.bf16.msra.mxu0 %v3694
        %5222 = vmatpush.bf16.msra.mxu0 %v3682
        %5223 = vmatmul.bf16.gmra.mxu0 %v403
        %v5224 = vpop.f32.mrf.mxu0
        %v5225 = vadd.f32 %v5206, %v5224
        %v5226 = vpop.f32.mrf.mxu0
        %v5227 = vadd.f32 %v5208, %v5226
        %5228 = vmatmul.bf16.gmra.mxu0 %v411
        %v5229 = vpop.f32.mrf.mxu0
        %v5230 = vadd.f32 %v5211, %v5229
        %v5231 = vpop.f32.mrf.mxu0
        %v5232 = vadd.f32 %v5213, %v5231
        %5233 = vdwg.mxu0
        %5234 = vmatpush.bf16.msra.mxu0 %v3862
        %5235 = vmatpush.bf16.msra.mxu0 %v3850
        %5236 = vmatpush.bf16.msra.mxu0 %v3838
        %5237 = vmatpush.bf16.msra.mxu0 %v3826
        %5238 = vmatpush.bf16.msra.mxu0 %v3814
        %5239 = vmatpush.bf16.msra.mxu0 %v3802
        %5240 = vmatpush.bf16.msra.mxu0 %v3790
        %5241 = vmatpush.bf16.msra.mxu0 %v3778
        %5242 = vmatmul.bf16.gmra.mxu0 %v404
        %v5243 = vpop.f32.mrf.mxu0
        %v5244 = vadd.f32 %v5225, %v5243
        %v5245 = vpop.f32.mrf.mxu0
        %v5246 = vadd.f32 %v5227, %v5245
        %5247 = vmatmul.bf16.gmra.mxu0 %v412
        %v5248 = vpop.f32.mrf.mxu0
        %v5249 = vadd.f32 %v5230, %v5248
        %v5250 = vpop.f32.mrf.mxu0
        %v5251 = vadd.f32 %v5232, %v5250
        %5252 = vdwg.mxu0
        %5253 = vmatpush.bf16.msra.mxu0 %v3958
        %5254 = vmatpush.bf16.msra.mxu0 %v3946
        %5255 = vmatpush.bf16.msra.mxu0 %v3934
        %5256 = vmatpush.bf16.msra.mxu0 %v3922
        %5257 = vmatpush.bf16.msra.mxu0 %v3910
        %5258 = vmatpush.bf16.msra.mxu0 %v3898
        %5259 = vmatpush.bf16.msra.mxu0 %v3886
        %5260 = vmatpush.bf16.msra.mxu0 %v3874
        %5261 = vmatmul.bf16.gmra.mxu0 %v405
        %v5262 = vpop.f32.mrf.mxu0
        %v5263 = vadd.f32 %v5244, %v5262
        %v5264 = vpop.f32.mrf.mxu0
        %v5265 = vadd.f32 %v5246, %v5264
        %5266 = vmatmul.bf16.gmra.mxu0 %v413
        %v5267 = vpop.f32.mrf.mxu0
        %v5268 = vadd.f32 %v5249, %v5267
        %v5269 = vpop.f32.mrf.mxu0
        %v5270 = vadd.f32 %v5251, %v5269
        %5271 = vdwg.mxu0
        %5272 = vmatpush.bf16.msra.mxu0 %v4054
        %5273 = vmatpush.bf16.msra.mxu0 %v4042
        %5274 = vmatpush.bf16.msra.mxu0 %v4030
        %5275 = vmatpush.bf16.msra.mxu0 %v4018
        %5276 = vmatpush.bf16.msra.mxu0 %v4006
        %5277 = vmatpush.bf16.msra.mxu0 %v3994
        %5278 = vmatpush.bf16.msra.mxu0 %v3982
        %5279 = vmatpush.bf16.msra.mxu0 %v3970
        %5280 = vmatmul.bf16.gmra.mxu0 %v406
        %v5281 = vpop.f32.mrf.mxu0
        %v5282 = vadd.f32 %v5263, %v5281
        %v5283 = vpop.f32.mrf.mxu0
        %v5284 = vadd.f32 %v5265, %v5283
        %5285 = vmatmul.bf16.gmra.mxu0 %v414
        %v5286 = vpop.f32.mrf.mxu0
        %v5287 = vadd.f32 %v5268, %v5286
        %v5288 = vpop.f32.mrf.mxu0
        %v5289 = vadd.f32 %v5270, %v5288
        %5290 = vdwg.mxu0
        %5291 = vmatpush.bf16.msra.mxu0 %v4150
        %5292 = vmatpush.bf16.msra.mxu0 %v4138
        %5293 = vmatpush.bf16.msra.mxu0 %v4126
        %5294 = vmatpush.bf16.msra.mxu0 %v4114
        %5295 = vmatpush.bf16.msra.mxu0 %v4102
        %5296 = vmatpush.bf16.msra.mxu0 %v4090
        %5297 = vmatpush.bf16.msra.mxu0 %v4078
        %5298 = vmatpush.bf16.msra.mxu0 %v4066
        %5299 = vmatmul.bf16.gmra.mxu0 %v407
        %v5300 = vpop.f32.mrf.mxu0
        %v5301 = vadd.f32 %v5282, %v5300
        %v5302 = vpop.f32.mrf.mxu0
        %v5303 = vadd.f32 %v5284, %v5302
        %5304 = vmatmul.bf16.gmra.mxu0 %v415
        %v5305 = vpop.f32.mrf.mxu0
        %v5306 = vadd.f32 %v5287, %v5305
        %v5307 = vpop.f32.mrf.mxu0
        %v5308 = vadd.f32 %v5289, %v5307
        %5309 = vdwg.mxu0
        %5310 = vmatpush.bf16.msra.mxu0 %v4246
        %5311 = vmatpush.bf16.msra.mxu0 %v4234
        %5312 = vmatpush.bf16.msra.mxu0 %v4222
        %5313 = vmatpush.bf16.msra.mxu0 %v4210
        %5314 = vmatpush.bf16.msra.mxu0 %v4198
        %5315 = vmatpush.bf16.msra.mxu0 %v4186
        %5316 = vmatpush.bf16.msra.mxu0 %v4174
        %5317 = vmatpush.bf16.msra.mxu0 %v4162
        %5318 = vmatmul.bf16.gmra.mxu0 %v408
        %v5319 = vpop.f32.mrf.mxu0
        %v5320 = vadd.f32 %v5301, %v5319
        %v5321 = vpop.f32.mrf.mxu0
        %v5322 = vadd.f32 %v5303, %v5321
        %5323 = vmatmul.bf16.gmra.mxu0 %v416
        %v5324 = vpop.f32.mrf.mxu0
        %v5325 = vadd.f32 %v5306, %v5324
        %v5326 = vpop.f32.mrf.mxu0
        %v5327 = vadd.f32 %v5308, %v5326
        %5328 = vdwg.mxu0
        %5329 = vmatpush.bf16.msra.mxu0 %v3575
        %5330 = vmatpush.bf16.msra.mxu0 %v3563
        %5331 = vmatpush.bf16.msra.mxu0 %v3551
        %5332 = vmatpush.bf16.msra.mxu0 %v3539
        %5333 = vmatpush.bf16.msra.mxu0 %v3527
        %5334 = vmatpush.bf16.msra.mxu0 %v3515
        %5335 = vmatpush.bf16.msra.mxu0 %v3503
        %5336 = vmatpush.bf16.msra.mxu0 %v3491
        %5337 = vmatmul.bf16.gmra.mxu0 %v401
        %v5338 = vpop.f32.mrf.mxu0
        %v5339 = vadd.f32 0.0, %v5338
        %v5340 = vpop.f32.mrf.mxu0
        %v5341 = vadd.f32 0.0, %v5340
        %5342 = vmatmul.bf16.gmra.mxu0 %v409
        %v5343 = vpop.f32.mrf.mxu0
        %v5344 = vadd.f32 0.0, %v5343
        %v5345 = vpop.f32.mrf.mxu0
        %v5346 = vadd.f32 0.0, %v5345
        %5347 = vdwg.mxu0
        %5348 = vmatpush.bf16.msra.mxu0 %v3671
        %5349 = vmatpush.bf16.msra.mxu0 %v3659
        %5350 = vmatpush.bf16.msra.mxu0 %v3647
        %5351 = vmatpush.bf16.msra.mxu0 %v3635
        %5352 = vmatpush.bf16.msra.mxu0 %v3623
        %5353 = vmatpush.bf16.msra.mxu0 %v3611
        %5354 = vmatpush.bf16.msra.mxu0 %v3599
        %5355 = vmatpush.bf16.msra.mxu0 %v3587
        %5356 = vmatmul.bf16.gmra.mxu0 %v402
        %v5357 = vpop.f32.mrf.mxu0
        %v5358 = vadd.f32 %v5339, %v5357
        %v5359 = vpop.f32.mrf.mxu0
        %v5360 = vadd.f32 %v5341, %v5359
        %5361 = vmatmul.bf16.gmra.mxu0 %v410
        %v5362 = vpop.f32.mrf.mxu0
        %v5363 = vadd.f32 %v5344, %v5362
        %v5364 = vpop.f32.mrf.mxu0
        %v5365 = vadd.f32 %v5346, %v5364
        %5366 = vdwg.mxu0
        %5367 = vmatpush.bf16.msra.mxu0 %v3767
        %5368 = vmatpush.bf16.msra.mxu0 %v3755
        %5369 = vmatpush.bf16.msra.mxu0 %v3743
        %5370 = vmatpush.bf16.msra.mxu0 %v3731
        %5371 = vmatpush.bf16.msra.mxu0 %v3719
        %5372 = vmatpush.bf16.msra.mxu0 %v3707
        %5373 = vmatpush.bf16.msra.mxu0 %v3695
        %5374 = vmatpush.bf16.msra.mxu0 %v3683
        %5375 = vmatmul.bf16.gmra.mxu0 %v403
        %v5376 = vpop.f32.mrf.mxu0
        %v5377 = vadd.f32 %v5358, %v5376
        %v5378 = vpop.f32.mrf.mxu0
        %v5379 = vadd.f32 %v5360, %v5378
        %5380 = vmatmul.bf16.gmra.mxu0 %v411
        %v5381 = vpop.f32.mrf.mxu0
        %v5382 = vadd.f32 %v5363, %v5381
        %v5383 = vpop.f32.mrf.mxu0
        %v5384 = vadd.f32 %v5365, %v5383
        %5385 = vdwg.mxu0
        %5386 = vmatpush.bf16.msra.mxu0 %v3863
        %5387 = vmatpush.bf16.msra.mxu0 %v3851
        %5388 = vmatpush.bf16.msra.mxu0 %v3839
        %5389 = vmatpush.bf16.msra.mxu0 %v3827
        %5390 = vmatpush.bf16.msra.mxu0 %v3815
        %5391 = vmatpush.bf16.msra.mxu0 %v3803
        %5392 = vmatpush.bf16.msra.mxu0 %v3791
        %5393 = vmatpush.bf16.msra.mxu0 %v3779
        %5394 = vmatmul.bf16.gmra.mxu0 %v404
        %v5395 = vpop.f32.mrf.mxu0
        %v5396 = vadd.f32 %v5377, %v5395
        %v5397 = vpop.f32.mrf.mxu0
        %v5398 = vadd.f32 %v5379, %v5397
        %5399 = vmatmul.bf16.gmra.mxu0 %v412
        %v5400 = vpop.f32.mrf.mxu0
        %v5401 = vadd.f32 %v5382, %v5400
        %v5402 = vpop.f32.mrf.mxu0
        %v5403 = vadd.f32 %v5384, %v5402
        %5404 = vdwg.mxu0
        %5405 = vmatpush.bf16.msra.mxu0 %v3959
        %5406 = vmatpush.bf16.msra.mxu0 %v3947
        %5407 = vmatpush.bf16.msra.mxu0 %v3935
        %5408 = vmatpush.bf16.msra.mxu0 %v3923
        %5409 = vmatpush.bf16.msra.mxu0 %v3911
        %5410 = vmatpush.bf16.msra.mxu0 %v3899
        %5411 = vmatpush.bf16.msra.mxu0 %v3887
        %5412 = vmatpush.bf16.msra.mxu0 %v3875
        %5413 = vmatmul.bf16.gmra.mxu0 %v405
        %v5414 = vpop.f32.mrf.mxu0
        %v5415 = vadd.f32 %v5396, %v5414
        %v5416 = vpop.f32.mrf.mxu0
        %v5417 = vadd.f32 %v5398, %v5416
        %5418 = vmatmul.bf16.gmra.mxu0 %v413
        %v5419 = vpop.f32.mrf.mxu0
        %v5420 = vadd.f32 %v5401, %v5419
        %v5421 = vpop.f32.mrf.mxu0
        %v5422 = vadd.f32 %v5403, %v5421
        %5423 = vdwg.mxu0
        %5424 = vmatpush.bf16.msra.mxu0 %v4055
        %5425 = vmatpush.bf16.msra.mxu0 %v4043
        %5426 = vmatpush.bf16.msra.mxu0 %v4031
        %5427 = vmatpush.bf16.msra.mxu0 %v4019
        %5428 = vmatpush.bf16.msra.mxu0 %v4007
        %5429 = vmatpush.bf16.msra.mxu0 %v3995
        %5430 = vmatpush.bf16.msra.mxu0 %v3983
        %5431 = vmatpush.bf16.msra.mxu0 %v3971
        %5432 = vmatmul.bf16.gmra.mxu0 %v406
        %v5433 = vpop.f32.mrf.mxu0
        %v5434 = vadd.f32 %v5415, %v5433
        %v5435 = vpop.f32.mrf.mxu0
        %v5436 = vadd.f32 %v5417, %v5435
        %5437 = vmatmul.bf16.gmra.mxu0 %v414
        %v5438 = vpop.f32.mrf.mxu0
        %v5439 = vadd.f32 %v5420, %v5438
        %v5440 = vpop.f32.mrf.mxu0
        %v5441 = vadd.f32 %v5422, %v5440
        %5442 = vdwg.mxu0
        %5443 = vmatpush.bf16.msra.mxu0 %v4151
        %5444 = vmatpush.bf16.msra.mxu0 %v4139
        %5445 = vmatpush.bf16.msra.mxu0 %v4127
        %5446 = vmatpush.bf16.msra.mxu0 %v4115
        %5447 = vmatpush.bf16.msra.mxu0 %v4103
        %5448 = vmatpush.bf16.msra.mxu0 %v4091
        %5449 = vmatpush.bf16.msra.mxu0 %v4079
        %5450 = vmatpush.bf16.msra.mxu0 %v4067
        %5451 = vmatmul.bf16.gmra.mxu0 %v407
        %v5452 = vpop.f32.mrf.mxu0
        %v5453 = vadd.f32 %v5434, %v5452
        %v5454 = vpop.f32.mrf.mxu0
        %v5455 = vadd.f32 %v5436, %v5454
        %5456 = vmatmul.bf16.gmra.mxu0 %v415
        %v5457 = vpop.f32.mrf.mxu0
        %v5458 = vadd.f32 %v5439, %v5457
        %v5459 = vpop.f32.mrf.mxu0
        %v5460 = vadd.f32 %v5441, %v5459
        %5461 = vdwg.mxu0
        %5462 = vmatpush.bf16.msra.mxu0 %v4247
        %5463 = vmatpush.bf16.msra.mxu0 %v4235
        %5464 = vmatpush.bf16.msra.mxu0 %v4223
        %5465 = vmatpush.bf16.msra.mxu0 %v4211
        %5466 = vmatpush.bf16.msra.mxu0 %v4199
        %5467 = vmatpush.bf16.msra.mxu0 %v4187
        %5468 = vmatpush.bf16.msra.mxu0 %v4175
        %5469 = vmatpush.bf16.msra.mxu0 %v4163
        %5470 = vmatmul.bf16.gmra.mxu0 %v408
        %v5471 = vpop.f32.mrf.mxu0
        %v5472 = vadd.f32 %v5453, %v5471
        %v5473 = vpop.f32.mrf.mxu0
        %v5474 = vadd.f32 %v5455, %v5473
        %5475 = vmatmul.bf16.gmra.mxu0 %v416
        %v5476 = vpop.f32.mrf.mxu0
        %v5477 = vadd.f32 %v5458, %v5476
        %v5478 = vpop.f32.mrf.mxu0
        %v5479 = vadd.f32 %v5460, %v5478
        %5480 = vdwg.mxu0
        %5481 = vmatpush.bf16.msra.mxu0 %v3576
        %5482 = vmatpush.bf16.msra.mxu0 %v3564
        %5483 = vmatpush.bf16.msra.mxu0 %v3552
        %5484 = vmatpush.bf16.msra.mxu0 %v3540
        %5485 = vmatpush.bf16.msra.mxu0 %v3528
        %5486 = vmatpush.bf16.msra.mxu0 %v3516
        %5487 = vmatpush.bf16.msra.mxu0 %v3504
        %5488 = vmatpush.bf16.msra.mxu0 %v3492
        %5489 = vmatmul.bf16.gmra.mxu0 %v401
        %v5490 = vpop.f32.mrf.mxu0
        %v5491 = vadd.f32 0.0, %v5490
        %v5492 = vpop.f32.mrf.mxu0
        %v5493 = vadd.f32 0.0, %v5492
        %5494 = vmatmul.bf16.gmra.mxu0 %v409
        %v5495 = vpop.f32.mrf.mxu0
        %v5496 = vadd.f32 0.0, %v5495
        %v5497 = vpop.f32.mrf.mxu0
        %v5498 = vadd.f32 0.0, %v5497
        %5499 = vdwg.mxu0
        %5500 = vmatpush.bf16.msra.mxu0 %v3672
        %5501 = vmatpush.bf16.msra.mxu0 %v3660
        %5502 = vmatpush.bf16.msra.mxu0 %v3648
        %5503 = vmatpush.bf16.msra.mxu0 %v3636
        %5504 = vmatpush.bf16.msra.mxu0 %v3624
        %5505 = vmatpush.bf16.msra.mxu0 %v3612
        %5506 = vmatpush.bf16.msra.mxu0 %v3600
        %5507 = vmatpush.bf16.msra.mxu0 %v3588
        %5508 = vmatmul.bf16.gmra.mxu0 %v402
        %v5509 = vpop.f32.mrf.mxu0
        %v5510 = vadd.f32 %v5491, %v5509
        %v5511 = vpop.f32.mrf.mxu0
        %v5512 = vadd.f32 %v5493, %v5511
        %5513 = vmatmul.bf16.gmra.mxu0 %v410
        %v5514 = vpop.f32.mrf.mxu0
        %v5515 = vadd.f32 %v5496, %v5514
        %v5516 = vpop.f32.mrf.mxu0
        %v5517 = vadd.f32 %v5498, %v5516
        %5518 = vdwg.mxu0
        %5519 = vmatpush.bf16.msra.mxu0 %v3768
        %5520 = vmatpush.bf16.msra.mxu0 %v3756
        %5521 = vmatpush.bf16.msra.mxu0 %v3744
        %5522 = vmatpush.bf16.msra.mxu0 %v3732
        %5523 = vmatpush.bf16.msra.mxu0 %v3720
        %5524 = vmatpush.bf16.msra.mxu0 %v3708
        %5525 = vmatpush.bf16.msra.mxu0 %v3696
        %5526 = vmatpush.bf16.msra.mxu0 %v3684
        %5527 = vmatmul.bf16.gmra.mxu0 %v403
        %v5528 = vpop.f32.mrf.mxu0
        %v5529 = vadd.f32 %v5510, %v5528
        %v5530 = vpop.f32.mrf.mxu0
        %v5531 = vadd.f32 %v5512, %v5530
        %5532 = vmatmul.bf16.gmra.mxu0 %v411
        %v5533 = vpop.f32.mrf.mxu0
        %v5534 = vadd.f32 %v5515, %v5533
        %v5535 = vpop.f32.mrf.mxu0
        %v5536 = vadd.f32 %v5517, %v5535
        %5537 = vdwg.mxu0
        %5538 = vmatpush.bf16.msra.mxu0 %v3864
        %5539 = vmatpush.bf16.msra.mxu0 %v3852
        %5540 = vmatpush.bf16.msra.mxu0 %v3840
        %5541 = vmatpush.bf16.msra.mxu0 %v3828
        %5542 = vmatpush.bf16.msra.mxu0 %v3816
        %5543 = vmatpush.bf16.msra.mxu0 %v3804
        %5544 = vmatpush.bf16.msra.mxu0 %v3792
        %5545 = vmatpush.bf16.msra.mxu0 %v3780
        %5546 = vmatmul.bf16.gmra.mxu0 %v404
        %v5547 = vpop.f32.mrf.mxu0
        %v5548 = vadd.f32 %v5529, %v5547
        %v5549 = vpop.f32.mrf.mxu0
        %v5550 = vadd.f32 %v5531, %v5549
        %5551 = vmatmul.bf16.gmra.mxu0 %v412
        %v5552 = vpop.f32.mrf.mxu0
        %v5553 = vadd.f32 %v5534, %v5552
        %v5554 = vpop.f32.mrf.mxu0
        %v5555 = vadd.f32 %v5536, %v5554
        %5556 = vdwg.mxu0
        %5557 = vmatpush.bf16.msra.mxu0 %v3960
        %5558 = vmatpush.bf16.msra.mxu0 %v3948
        %5559 = vmatpush.bf16.msra.mxu0 %v3936
        %5560 = vmatpush.bf16.msra.mxu0 %v3924
        %5561 = vmatpush.bf16.msra.mxu0 %v3912
        %5562 = vmatpush.bf16.msra.mxu0 %v3900
        %5563 = vmatpush.bf16.msra.mxu0 %v3888
        %5564 = vmatpush.bf16.msra.mxu0 %v3876
        %5565 = vmatmul.bf16.gmra.mxu0 %v405
        %v5566 = vpop.f32.mrf.mxu0
        %v5567 = vadd.f32 %v5548, %v5566
        %v5568 = vpop.f32.mrf.mxu0
        %v5569 = vadd.f32 %v5550, %v5568
        %5570 = vmatmul.bf16.gmra.mxu0 %v413
        %v5571 = vpop.f32.mrf.mxu0
        %v5572 = vadd.f32 %v5553, %v5571
        %v5573 = vpop.f32.mrf.mxu0
        %v5574 = vadd.f32 %v5555, %v5573
        %5575 = vdwg.mxu0
        %5576 = vmatpush.bf16.msra.mxu0 %v4056
        %5577 = vmatpush.bf16.msra.mxu0 %v4044
        %5578 = vmatpush.bf16.msra.mxu0 %v4032
        %5579 = vmatpush.bf16.msra.mxu0 %v4020
        %5580 = vmatpush.bf16.msra.mxu0 %v4008
        %5581 = vmatpush.bf16.msra.mxu0 %v3996
        %5582 = vmatpush.bf16.msra.mxu0 %v3984
        %5583 = vmatpush.bf16.msra.mxu0 %v3972
        %5584 = vmatmul.bf16.gmra.mxu0 %v406
        %v5585 = vpop.f32.mrf.mxu0
        %v5586 = vadd.f32 %v5567, %v5585
        %v5587 = vpop.f32.mrf.mxu0
        %v5588 = vadd.f32 %v5569, %v5587
        %5589 = vmatmul.bf16.gmra.mxu0 %v414
        %v5590 = vpop.f32.mrf.mxu0
        %v5591 = vadd.f32 %v5572, %v5590
        %v5592 = vpop.f32.mrf.mxu0
        %v5593 = vadd.f32 %v5574, %v5592
        %5594 = vdwg.mxu0
        %5595 = vmatpush.bf16.msra.mxu0 %v4152
        %5596 = vmatpush.bf16.msra.mxu0 %v4140
        %5597 = vmatpush.bf16.msra.mxu0 %v4128
        %5598 = vmatpush.bf16.msra.mxu0 %v4116
        %5599 = vmatpush.bf16.msra.mxu0 %v4104
        %5600 = vmatpush.bf16.msra.mxu0 %v4092
        %5601 = vmatpush.bf16.msra.mxu0 %v4080
        %5602 = vmatpush.bf16.msra.mxu0 %v4068
        %5603 = vmatmul.bf16.gmra.mxu0 %v407
        %v5604 = vpop.f32.mrf.mxu0
        %v5605 = vadd.f32 %v5586, %v5604
        %v5606 = vpop.f32.mrf.mxu0
        %v5607 = vadd.f32 %v5588, %v5606
        %5608 = vmatmul.bf16.gmra.mxu0 %v415
        %v5609 = vpop.f32.mrf.mxu0
        %v5610 = vadd.f32 %v5591, %v5609
        %v5611 = vpop.f32.mrf.mxu0
        %v5612 = vadd.f32 %v5593, %v5611
        %5613 = vdwg.mxu0
        %5614 = vmatpush.bf16.msra.mxu0 %v4248
        %5615 = vmatpush.bf16.msra.mxu0 %v4236
        %5616 = vmatpush.bf16.msra.mxu0 %v4224
        %5617 = vmatpush.bf16.msra.mxu0 %v4212
        %5618 = vmatpush.bf16.msra.mxu0 %v4200
        %5619 = vmatpush.bf16.msra.mxu0 %v4188
        %5620 = vmatpush.bf16.msra.mxu0 %v4176
        %5621 = vmatpush.bf16.msra.mxu0 %v4164
        %5622 = vmatmul.bf16.gmra.mxu0 %v408
        %v5623 = vpop.f32.mrf.mxu0
        %v5624 = vadd.f32 %v5605, %v5623
        %v5625 = vpop.f32.mrf.mxu0
        %v5626 = vadd.f32 %v5607, %v5625
        %5627 = vmatmul.bf16.gmra.mxu0 %v416
        %v5628 = vpop.f32.mrf.mxu0
        %v5629 = vadd.f32 %v5610, %v5628
        %v5630 = vpop.f32.mrf.mxu0
        %v5631 = vadd.f32 %v5612, %v5630
        %5632 = vdwg.mxu0
        %5633 = vmatpush.bf16.msra.mxu0 %v3577
        %5634 = vmatpush.bf16.msra.mxu0 %v3565
        %5635 = vmatpush.bf16.msra.mxu0 %v3553
        %5636 = vmatpush.bf16.msra.mxu0 %v3541
        %5637 = vmatpush.bf16.msra.mxu0 %v3529
        %5638 = vmatpush.bf16.msra.mxu0 %v3517
        %5639 = vmatpush.bf16.msra.mxu0 %v3505
        %5640 = vmatpush.bf16.msra.mxu0 %v3493
        %5641 = vmatmul.bf16.gmra.mxu0 %v401
        %v5642 = vpop.f32.mrf.mxu0
        %v5643 = vadd.f32 0.0, %v5642
        %v5644 = vpop.f32.mrf.mxu0
        %v5645 = vadd.f32 0.0, %v5644
        %5646 = vmatmul.bf16.gmra.mxu0 %v409
        %v5647 = vpop.f32.mrf.mxu0
        %v5648 = vadd.f32 0.0, %v5647
        %v5649 = vpop.f32.mrf.mxu0
        %v5650 = vadd.f32 0.0, %v5649
        %5651 = vdwg.mxu0
        %5652 = vmatpush.bf16.msra.mxu0 %v3673
        %5653 = vmatpush.bf16.msra.mxu0 %v3661
        %5654 = vmatpush.bf16.msra.mxu0 %v3649
        %5655 = vmatpush.bf16.msra.mxu0 %v3637
        %5656 = vmatpush.bf16.msra.mxu0 %v3625
        %5657 = vmatpush.bf16.msra.mxu0 %v3613
        %5658 = vmatpush.bf16.msra.mxu0 %v3601
        %5659 = vmatpush.bf16.msra.mxu0 %v3589
        %5660 = vmatmul.bf16.gmra.mxu0 %v402
        %v5661 = vpop.f32.mrf.mxu0
        %v5662 = vadd.f32 %v5643, %v5661
        %v5663 = vpop.f32.mrf.mxu0
        %v5664 = vadd.f32 %v5645, %v5663
        %5665 = vmatmul.bf16.gmra.mxu0 %v410
        %v5666 = vpop.f32.mrf.mxu0
        %v5667 = vadd.f32 %v5648, %v5666
        %v5668 = vpop.f32.mrf.mxu0
        %v5669 = vadd.f32 %v5650, %v5668
        %5670 = vdwg.mxu0
        %5671 = vmatpush.bf16.msra.mxu0 %v3769
        %5672 = vmatpush.bf16.msra.mxu0 %v3757
        %5673 = vmatpush.bf16.msra.mxu0 %v3745
        %5674 = vmatpush.bf16.msra.mxu0 %v3733
        %5675 = vmatpush.bf16.msra.mxu0 %v3721
        %5676 = vmatpush.bf16.msra.mxu0 %v3709
        %5677 = vmatpush.bf16.msra.mxu0 %v3697
        %5678 = vmatpush.bf16.msra.mxu0 %v3685
        %5679 = vmatmul.bf16.gmra.mxu0 %v403
        %v5680 = vpop.f32.mrf.mxu0
        %v5681 = vadd.f32 %v5662, %v5680
        %v5682 = vpop.f32.mrf.mxu0
        %v5683 = vadd.f32 %v5664, %v5682
        %5684 = vmatmul.bf16.gmra.mxu0 %v411
        %v5685 = vpop.f32.mrf.mxu0
        %v5686 = vadd.f32 %v5667, %v5685
        %v5687 = vpop.f32.mrf.mxu0
        %v5688 = vadd.f32 %v5669, %v5687
        %5689 = vdwg.mxu0
        %5690 = vmatpush.bf16.msra.mxu0 %v3865
        %5691 = vmatpush.bf16.msra.mxu0 %v3853
        %5692 = vmatpush.bf16.msra.mxu0 %v3841
        %5693 = vmatpush.bf16.msra.mxu0 %v3829
        %5694 = vmatpush.bf16.msra.mxu0 %v3817
        %5695 = vmatpush.bf16.msra.mxu0 %v3805
        %5696 = vmatpush.bf16.msra.mxu0 %v3793
        %5697 = vmatpush.bf16.msra.mxu0 %v3781
        %5698 = vmatmul.bf16.gmra.mxu0 %v404
        %v5699 = vpop.f32.mrf.mxu0
        %v5700 = vadd.f32 %v5681, %v5699
        %v5701 = vpop.f32.mrf.mxu0
        %v5702 = vadd.f32 %v5683, %v5701
        %5703 = vmatmul.bf16.gmra.mxu0 %v412
        %v5704 = vpop.f32.mrf.mxu0
        %v5705 = vadd.f32 %v5686, %v5704
        %v5706 = vpop.f32.mrf.mxu0
        %v5707 = vadd.f32 %v5688, %v5706
        %5708 = vdwg.mxu0
        %5709 = vmatpush.bf16.msra.mxu0 %v3961
        %5710 = vmatpush.bf16.msra.mxu0 %v3949
        %5711 = vmatpush.bf16.msra.mxu0 %v3937
        %5712 = vmatpush.bf16.msra.mxu0 %v3925
        %5713 = vmatpush.bf16.msra.mxu0 %v3913
        %5714 = vmatpush.bf16.msra.mxu0 %v3901
        %5715 = vmatpush.bf16.msra.mxu0 %v3889
        %5716 = vmatpush.bf16.msra.mxu0 %v3877
        %5717 = vmatmul.bf16.gmra.mxu0 %v405
        %v5718 = vpop.f32.mrf.mxu0
        %v5719 = vadd.f32 %v5700, %v5718
        %v5720 = vpop.f32.mrf.mxu0
        %v5721 = vadd.f32 %v5702, %v5720
        %5722 = vmatmul.bf16.gmra.mxu0 %v413
        %v5723 = vpop.f32.mrf.mxu0
        %v5724 = vadd.f32 %v5705, %v5723
        %v5725 = vpop.f32.mrf.mxu0
        %v5726 = vadd.f32 %v5707, %v5725
        %5727 = vdwg.mxu0
        %5728 = vmatpush.bf16.msra.mxu0 %v4057
        %5729 = vmatpush.bf16.msra.mxu0 %v4045
        %5730 = vmatpush.bf16.msra.mxu0 %v4033
        %5731 = vmatpush.bf16.msra.mxu0 %v4021
        %5732 = vmatpush.bf16.msra.mxu0 %v4009
        %5733 = vmatpush.bf16.msra.mxu0 %v3997
        %5734 = vmatpush.bf16.msra.mxu0 %v3985
        %5735 = vmatpush.bf16.msra.mxu0 %v3973
        %5736 = vmatmul.bf16.gmra.mxu0 %v406
        %v5737 = vpop.f32.mrf.mxu0
        %v5738 = vadd.f32 %v5719, %v5737
        %v5739 = vpop.f32.mrf.mxu0
        %v5740 = vadd.f32 %v5721, %v5739
        %5741 = vmatmul.bf16.gmra.mxu0 %v414
        %v5742 = vpop.f32.mrf.mxu0
        %v5743 = vadd.f32 %v5724, %v5742
        %v5744 = vpop.f32.mrf.mxu0
        %v5745 = vadd.f32 %v5726, %v5744
        %5746 = vdwg.mxu0
        %5747 = vmatpush.bf16.msra.mxu0 %v4153
        %5748 = vmatpush.bf16.msra.mxu0 %v4141
        %5749 = vmatpush.bf16.msra.mxu0 %v4129
        %5750 = vmatpush.bf16.msra.mxu0 %v4117
        %5751 = vmatpush.bf16.msra.mxu0 %v4105
        %5752 = vmatpush.bf16.msra.mxu0 %v4093
        %5753 = vmatpush.bf16.msra.mxu0 %v4081
        %5754 = vmatpush.bf16.msra.mxu0 %v4069
        %5755 = vmatmul.bf16.gmra.mxu0 %v407
        %v5756 = vpop.f32.mrf.mxu0
        %v5757 = vadd.f32 %v5738, %v5756
        %v5758 = vpop.f32.mrf.mxu0
        %v5759 = vadd.f32 %v5740, %v5758
        %5760 = vmatmul.bf16.gmra.mxu0 %v415
        %v5761 = vpop.f32.mrf.mxu0
        %v5762 = vadd.f32 %v5743, %v5761
        %v5763 = vpop.f32.mrf.mxu0
        %v5764 = vadd.f32 %v5745, %v5763
        %5765 = vdwg.mxu0
        %5766 = vmatpush.bf16.msra.mxu0 %v4249
        %5767 = vmatpush.bf16.msra.mxu0 %v4237
        %5768 = vmatpush.bf16.msra.mxu0 %v4225
        %5769 = vmatpush.bf16.msra.mxu0 %v4213
        %5770 = vmatpush.bf16.msra.mxu0 %v4201
        %5771 = vmatpush.bf16.msra.mxu0 %v4189
        %5772 = vmatpush.bf16.msra.mxu0 %v4177
        %5773 = vmatpush.bf16.msra.mxu0 %v4165
        %5774 = vmatmul.bf16.gmra.mxu0 %v408
        %v5775 = vpop.f32.mrf.mxu0
        %v5776 = vadd.f32 %v5757, %v5775
        %v5777 = vpop.f32.mrf.mxu0
        %v5778 = vadd.f32 %v5759, %v5777
        %5779 = vmatmul.bf16.gmra.mxu0 %v416
        %v5780 = vpop.f32.mrf.mxu0
        %v5781 = vadd.f32 %v5762, %v5780
        %v5782 = vpop.f32.mrf.mxu0
        %v5783 = vadd.f32 %v5764, %v5782
        %5784 = vdwg.mxu0
        %5785 = vmatpush.bf16.msra.mxu0 %v3578
        %5786 = vmatpush.bf16.msra.mxu0 %v3566
        %5787 = vmatpush.bf16.msra.mxu0 %v3554
        %5788 = vmatpush.bf16.msra.mxu0 %v3542
        %5789 = vmatpush.bf16.msra.mxu0 %v3530
        %5790 = vmatpush.bf16.msra.mxu0 %v3518
        %5791 = vmatpush.bf16.msra.mxu0 %v3506
        %5792 = vmatpush.bf16.msra.mxu0 %v3494
        %5793 = vmatmul.bf16.gmra.mxu0 %v401
        %v5794 = vpop.f32.mrf.mxu0
        %v5795 = vadd.f32 0.0, %v5794
        %v5796 = vpop.f32.mrf.mxu0
        %v5797 = vadd.f32 0.0, %v5796
        %5798 = vmatmul.bf16.gmra.mxu0 %v409
        %v5799 = vpop.f32.mrf.mxu0
        %v5800 = vadd.f32 0.0, %v5799
        %v5801 = vpop.f32.mrf.mxu0
        %v5802 = vadd.f32 0.0, %v5801
        %5803 = vdwg.mxu0
        %5804 = vmatpush.bf16.msra.mxu0 %v3674
        %5805 = vmatpush.bf16.msra.mxu0 %v3662
        %5806 = vmatpush.bf16.msra.mxu0 %v3650
        %5807 = vmatpush.bf16.msra.mxu0 %v3638
        %5808 = vmatpush.bf16.msra.mxu0 %v3626
        %5809 = vmatpush.bf16.msra.mxu0 %v3614
        %5810 = vmatpush.bf16.msra.mxu0 %v3602
        %5811 = vmatpush.bf16.msra.mxu0 %v3590
        %5812 = vmatmul.bf16.gmra.mxu0 %v402
        %v5813 = vpop.f32.mrf.mxu0
        %v5814 = vadd.f32 %v5795, %v5813
        %v5815 = vpop.f32.mrf.mxu0
        %v5816 = vadd.f32 %v5797, %v5815
        %5817 = vmatmul.bf16.gmra.mxu0 %v410
        %v5818 = vpop.f32.mrf.mxu0
        %v5819 = vadd.f32 %v5800, %v5818
        %v5820 = vpop.f32.mrf.mxu0
        %v5821 = vadd.f32 %v5802, %v5820
        %5822 = vdwg.mxu0
        %5823 = vmatpush.bf16.msra.mxu0 %v3770
        %5824 = vmatpush.bf16.msra.mxu0 %v3758
        %5825 = vmatpush.bf16.msra.mxu0 %v3746
        %5826 = vmatpush.bf16.msra.mxu0 %v3734
        %5827 = vmatpush.bf16.msra.mxu0 %v3722
        %5828 = vmatpush.bf16.msra.mxu0 %v3710
        %5829 = vmatpush.bf16.msra.mxu0 %v3698
        %5830 = vmatpush.bf16.msra.mxu0 %v3686
        %5831 = vmatmul.bf16.gmra.mxu0 %v403
        %v5832 = vpop.f32.mrf.mxu0
        %v5833 = vadd.f32 %v5814, %v5832
        %v5834 = vpop.f32.mrf.mxu0
        %v5835 = vadd.f32 %v5816, %v5834
        %5836 = vmatmul.bf16.gmra.mxu0 %v411
        %v5837 = vpop.f32.mrf.mxu0
        %v5838 = vadd.f32 %v5819, %v5837
        %v5839 = vpop.f32.mrf.mxu0
        %v5840 = vadd.f32 %v5821, %v5839
        %5841 = vdwg.mxu0
        %5842 = vmatpush.bf16.msra.mxu0 %v3866
        %5843 = vmatpush.bf16.msra.mxu0 %v3854
        %5844 = vmatpush.bf16.msra.mxu0 %v3842
        %5845 = vmatpush.bf16.msra.mxu0 %v3830
        %5846 = vmatpush.bf16.msra.mxu0 %v3818
        %5847 = vmatpush.bf16.msra.mxu0 %v3806
        %5848 = vmatpush.bf16.msra.mxu0 %v3794
        %5849 = vmatpush.bf16.msra.mxu0 %v3782
        %5850 = vmatmul.bf16.gmra.mxu0 %v404
        %v5851 = vpop.f32.mrf.mxu0
        %v5852 = vadd.f32 %v5833, %v5851
        %v5853 = vpop.f32.mrf.mxu0
        %v5854 = vadd.f32 %v5835, %v5853
        %5855 = vmatmul.bf16.gmra.mxu0 %v412
        %v5856 = vpop.f32.mrf.mxu0
        %v5857 = vadd.f32 %v5838, %v5856
        %v5858 = vpop.f32.mrf.mxu0
        %v5859 = vadd.f32 %v5840, %v5858
        %5860 = vdwg.mxu0
        %5861 = vmatpush.bf16.msra.mxu0 %v3962
        %5862 = vmatpush.bf16.msra.mxu0 %v3950
        %5863 = vmatpush.bf16.msra.mxu0 %v3938
        %5864 = vmatpush.bf16.msra.mxu0 %v3926
        %5865 = vmatpush.bf16.msra.mxu0 %v3914
        %5866 = vmatpush.bf16.msra.mxu0 %v3902
        %5867 = vmatpush.bf16.msra.mxu0 %v3890
        %5868 = vmatpush.bf16.msra.mxu0 %v3878
        %5869 = vmatmul.bf16.gmra.mxu0 %v405
        %v5870 = vpop.f32.mrf.mxu0
        %v5871 = vadd.f32 %v5852, %v5870
        %v5872 = vpop.f32.mrf.mxu0
        %v5873 = vadd.f32 %v5854, %v5872
        %5874 = vmatmul.bf16.gmra.mxu0 %v413
        %v5875 = vpop.f32.mrf.mxu0
        %v5876 = vadd.f32 %v5857, %v5875
        %v5877 = vpop.f32.mrf.mxu0
        %v5878 = vadd.f32 %v5859, %v5877
        %5879 = vdwg.mxu0
        %5880 = vmatpush.bf16.msra.mxu0 %v4058
        %5881 = vmatpush.bf16.msra.mxu0 %v4046
        %5882 = vmatpush.bf16.msra.mxu0 %v4034
        %5883 = vmatpush.bf16.msra.mxu0 %v4022
        %5884 = vmatpush.bf16.msra.mxu0 %v4010
        %5885 = vmatpush.bf16.msra.mxu0 %v3998
        %5886 = vmatpush.bf16.msra.mxu0 %v3986
        %5887 = vmatpush.bf16.msra.mxu0 %v3974
        %5888 = vmatmul.bf16.gmra.mxu0 %v406
        %v5889 = vpop.f32.mrf.mxu0
        %v5890 = vadd.f32 %v5871, %v5889
        %v5891 = vpop.f32.mrf.mxu0
        %v5892 = vadd.f32 %v5873, %v5891
        %5893 = vmatmul.bf16.gmra.mxu0 %v414
        %v5894 = vpop.f32.mrf.mxu0
        %v5895 = vadd.f32 %v5876, %v5894
        %v5896 = vpop.f32.mrf.mxu0
        %v5897 = vadd.f32 %v5878, %v5896
        %5898 = vdwg.mxu0
        %5899 = vmatpush.bf16.msra.mxu0 %v4154
        %5900 = vmatpush.bf16.msra.mxu0 %v4142
        %5901 = vmatpush.bf16.msra.mxu0 %v4130
        %5902 = vmatpush.bf16.msra.mxu0 %v4118
        %5903 = vmatpush.bf16.msra.mxu0 %v4106
        %5904 = vmatpush.bf16.msra.mxu0 %v4094
        %5905 = vmatpush.bf16.msra.mxu0 %v4082
        %5906 = vmatpush.bf16.msra.mxu0 %v4070
        %5907 = vmatmul.bf16.gmra.mxu0 %v407
        %v5908 = vpop.f32.mrf.mxu0
        %v5909 = vadd.f32 %v5890, %v5908
        %v5910 = vpop.f32.mrf.mxu0
        %v5911 = vadd.f32 %v5892, %v5910
        %5912 = vmatmul.bf16.gmra.mxu0 %v415
        %v5913 = vpop.f32.mrf.mxu0
        %v5914 = vadd.f32 %v5895, %v5913
        %v5915 = vpop.f32.mrf.mxu0
        %v5916 = vadd.f32 %v5897, %v5915
        %5917 = vdwg.mxu0
        %5918 = vmatpush.bf16.msra.mxu0 %v4250
        %5919 = vmatpush.bf16.msra.mxu0 %v4238
        %5920 = vmatpush.bf16.msra.mxu0 %v4226
        %5921 = vmatpush.bf16.msra.mxu0 %v4214
        %5922 = vmatpush.bf16.msra.mxu0 %v4202
        %5923 = vmatpush.bf16.msra.mxu0 %v4190
        %5924 = vmatpush.bf16.msra.mxu0 %v4178
        %5925 = vmatpush.bf16.msra.mxu0 %v4166
        %5926 = vmatmul.bf16.gmra.mxu0 %v408
        %v5927 = vpop.f32.mrf.mxu0
        %v5928 = vadd.f32 %v5909, %v5927
        %v5929 = vpop.f32.mrf.mxu0
        %v5930 = vadd.f32 %v5911, %v5929
        %5931 = vmatmul.bf16.gmra.mxu0 %v416
        %v5932 = vpop.f32.mrf.mxu0
        %v5933 = vadd.f32 %v5914, %v5932
        %v5934 = vpop.f32.mrf.mxu0
        %v5935 = vadd.f32 %v5916, %v5934
        %5936 = vdwg.mxu0
        %5937 = vmatpush.bf16.msra.mxu0 %v3579
        %5938 = vmatpush.bf16.msra.mxu0 %v3567
        %5939 = vmatpush.bf16.msra.mxu0 %v3555
        %5940 = vmatpush.bf16.msra.mxu0 %v3543
        %5941 = vmatpush.bf16.msra.mxu0 %v3531
        %5942 = vmatpush.bf16.msra.mxu0 %v3519
        %5943 = vmatpush.bf16.msra.mxu0 %v3507
        %5944 = vmatpush.bf16.msra.mxu0 %v3495
        %5945 = vmatmul.bf16.gmra.mxu0 %v401
        %v5946 = vpop.f32.mrf.mxu0
        %v5947 = vadd.f32 0.0, %v5946
        %v5948 = vpop.f32.mrf.mxu0
        %v5949 = vadd.f32 0.0, %v5948
        %5950 = vmatmul.bf16.gmra.mxu0 %v409
        %v5951 = vpop.f32.mrf.mxu0
        %v5952 = vadd.f32 0.0, %v5951
        %v5953 = vpop.f32.mrf.mxu0
        %v5954 = vadd.f32 0.0, %v5953
        %5955 = vdwg.mxu0
        %5956 = vmatpush.bf16.msra.mxu0 %v3675
        %5957 = vmatpush.bf16.msra.mxu0 %v3663
        %5958 = vmatpush.bf16.msra.mxu0 %v3651
        %5959 = vmatpush.bf16.msra.mxu0 %v3639
        %5960 = vmatpush.bf16.msra.mxu0 %v3627
        %5961 = vmatpush.bf16.msra.mxu0 %v3615
        %5962 = vmatpush.bf16.msra.mxu0 %v3603
        %5963 = vmatpush.bf16.msra.mxu0 %v3591
        %5964 = vmatmul.bf16.gmra.mxu0 %v402
        %v5965 = vpop.f32.mrf.mxu0
        %v5966 = vadd.f32 %v5947, %v5965
        %v5967 = vpop.f32.mrf.mxu0
        %v5968 = vadd.f32 %v5949, %v5967
        %5969 = vmatmul.bf16.gmra.mxu0 %v410
        %v5970 = vpop.f32.mrf.mxu0
        %v5971 = vadd.f32 %v5952, %v5970
        %v5972 = vpop.f32.mrf.mxu0
        %v5973 = vadd.f32 %v5954, %v5972
        %5974 = vdwg.mxu0
        %5975 = vmatpush.bf16.msra.mxu0 %v3771
        %5976 = vmatpush.bf16.msra.mxu0 %v3759
        %5977 = vmatpush.bf16.msra.mxu0 %v3747
        %5978 = vmatpush.bf16.msra.mxu0 %v3735
        %5979 = vmatpush.bf16.msra.mxu0 %v3723
        %5980 = vmatpush.bf16.msra.mxu0 %v3711
        %5981 = vmatpush.bf16.msra.mxu0 %v3699
        %5982 = vmatpush.bf16.msra.mxu0 %v3687
        %5983 = vmatmul.bf16.gmra.mxu0 %v403
        %v5984 = vpop.f32.mrf.mxu0
        %v5985 = vadd.f32 %v5966, %v5984
        %v5986 = vpop.f32.mrf.mxu0
        %v5987 = vadd.f32 %v5968, %v5986
        %5988 = vmatmul.bf16.gmra.mxu0 %v411
        %v5989 = vpop.f32.mrf.mxu0
        %v5990 = vadd.f32 %v5971, %v5989
        %v5991 = vpop.f32.mrf.mxu0
        %v5992 = vadd.f32 %v5973, %v5991
        %5993 = vdwg.mxu0
        %5994 = vmatpush.bf16.msra.mxu0 %v3867
        %5995 = vmatpush.bf16.msra.mxu0 %v3855
        %5996 = vmatpush.bf16.msra.mxu0 %v3843
        %5997 = vmatpush.bf16.msra.mxu0 %v3831
        %5998 = vmatpush.bf16.msra.mxu0 %v3819
        %5999 = vmatpush.bf16.msra.mxu0 %v3807
        %6000 = vmatpush.bf16.msra.mxu0 %v3795
        %6001 = vmatpush.bf16.msra.mxu0 %v3783
        %6002 = vmatmul.bf16.gmra.mxu0 %v404
        %v6003 = vpop.f32.mrf.mxu0
        %v6004 = vadd.f32 %v5985, %v6003
        %v6005 = vpop.f32.mrf.mxu0
        %v6006 = vadd.f32 %v5987, %v6005
        %6007 = vmatmul.bf16.gmra.mxu0 %v412
        %v6008 = vpop.f32.mrf.mxu0
        %v6009 = vadd.f32 %v5990, %v6008
        %v6010 = vpop.f32.mrf.mxu0
        %v6011 = vadd.f32 %v5992, %v6010
        %6012 = vdwg.mxu0
        %6013 = vmatpush.bf16.msra.mxu0 %v3963
        %6014 = vmatpush.bf16.msra.mxu0 %v3951
        %6015 = vmatpush.bf16.msra.mxu0 %v3939
        %6016 = vmatpush.bf16.msra.mxu0 %v3927
        %6017 = vmatpush.bf16.msra.mxu0 %v3915
        %6018 = vmatpush.bf16.msra.mxu0 %v3903
        %6019 = vmatpush.bf16.msra.mxu0 %v3891
        %6020 = vmatpush.bf16.msra.mxu0 %v3879
        %6021 = vmatmul.bf16.gmra.mxu0 %v405
        %v6022 = vpop.f32.mrf.mxu0
        %v6023 = vadd.f32 %v6004, %v6022
        %v6024 = vpop.f32.mrf.mxu0
        %v6025 = vadd.f32 %v6006, %v6024
        %6026 = vmatmul.bf16.gmra.mxu0 %v413
        %v6027 = vpop.f32.mrf.mxu0
        %v6028 = vadd.f32 %v6009, %v6027
        %v6029 = vpop.f32.mrf.mxu0
        %v6030 = vadd.f32 %v6011, %v6029
        %6031 = vdwg.mxu0
        %6032 = vmatpush.bf16.msra.mxu0 %v4059
        %6033 = vmatpush.bf16.msra.mxu0 %v4047
        %6034 = vmatpush.bf16.msra.mxu0 %v4035
        %6035 = vmatpush.bf16.msra.mxu0 %v4023
        %6036 = vmatpush.bf16.msra.mxu0 %v4011
        %6037 = vmatpush.bf16.msra.mxu0 %v3999
        %6038 = vmatpush.bf16.msra.mxu0 %v3987
        %6039 = vmatpush.bf16.msra.mxu0 %v3975
        %6040 = vmatmul.bf16.gmra.mxu0 %v406
        %v6041 = vpop.f32.mrf.mxu0
        %v6042 = vadd.f32 %v6023, %v6041
        %v6043 = vpop.f32.mrf.mxu0
        %v6044 = vadd.f32 %v6025, %v6043
        %6045 = vmatmul.bf16.gmra.mxu0 %v414
        %v6046 = vpop.f32.mrf.mxu0
        %v6047 = vadd.f32 %v6028, %v6046
        %v6048 = vpop.f32.mrf.mxu0
        %v6049 = vadd.f32 %v6030, %v6048
        %6050 = vdwg.mxu0
        %6051 = vmatpush.bf16.msra.mxu0 %v4155
        %6052 = vmatpush.bf16.msra.mxu0 %v4143
        %6053 = vmatpush.bf16.msra.mxu0 %v4131
        %6054 = vmatpush.bf16.msra.mxu0 %v4119
        %6055 = vmatpush.bf16.msra.mxu0 %v4107
        %6056 = vmatpush.bf16.msra.mxu0 %v4095
        %6057 = vmatpush.bf16.msra.mxu0 %v4083
        %6058 = vmatpush.bf16.msra.mxu0 %v4071
        %6059 = vmatmul.bf16.gmra.mxu0 %v407
        %v6060 = vpop.f32.mrf.mxu0
        %v6061 = vadd.f32 %v6042, %v6060
        %v6062 = vpop.f32.mrf.mxu0
        %v6063 = vadd.f32 %v6044, %v6062
        %6064 = vmatmul.bf16.gmra.mxu0 %v415
        %v6065 = vpop.f32.mrf.mxu0
        %v6066 = vadd.f32 %v6047, %v6065
        %v6067 = vpop.f32.mrf.mxu0
        %v6068 = vadd.f32 %v6049, %v6067
        %6069 = vdwg.mxu0
        %6070 = vmatpush.bf16.msra.mxu0 %v4251
        %6071 = vmatpush.bf16.msra.mxu0 %v4239
        %6072 = vmatpush.bf16.msra.mxu0 %v4227
        %6073 = vmatpush.bf16.msra.mxu0 %v4215
        %6074 = vmatpush.bf16.msra.mxu0 %v4203
        %6075 = vmatpush.bf16.msra.mxu0 %v4191
        %6076 = vmatpush.bf16.msra.mxu0 %v4179
        %6077 = vmatpush.bf16.msra.mxu0 %v4167
        %6078 = vmatmul.bf16.gmra.mxu0 %v408
        %v6079 = vpop.f32.mrf.mxu0
        %v6080 = vadd.f32 %v6061, %v6079
        %v6081 = vpop.f32.mrf.mxu0
        %v6082 = vadd.f32 %v6063, %v6081
        %6083 = vmatmul.bf16.gmra.mxu0 %v416
        %v6084 = vpop.f32.mrf.mxu0
        %v6085 = vadd.f32 %v6066, %v6084
        %v6086 = vpop.f32.mrf.mxu0
        %v6087 = vadd.f32 %v6068, %v6086
        %6088 = vdwg.mxu0
        %6089 = vmatpush.bf16.msra.mxu0 %v3580
        %6090 = vmatpush.bf16.msra.mxu0 %v3568
        %6091 = vmatpush.bf16.msra.mxu0 %v3556
        %6092 = vmatpush.bf16.msra.mxu0 %v3544
        %6093 = vmatpush.bf16.msra.mxu0 %v3532
        %6094 = vmatpush.bf16.msra.mxu0 %v3520
        %6095 = vmatpush.bf16.msra.mxu0 %v3508
        %6096 = vmatpush.bf16.msra.mxu0 %v3496
        %6097 = vmatmul.bf16.gmra.mxu0 %v401
        %v6098 = vpop.f32.mrf.mxu0
        %v6099 = vadd.f32 0.0, %v6098
        %v6100 = vpop.f32.mrf.mxu0
        %v6101 = vadd.f32 0.0, %v6100
        %6102 = vmatmul.bf16.gmra.mxu0 %v409
        %v6103 = vpop.f32.mrf.mxu0
        %v6104 = vadd.f32 0.0, %v6103
        %v6105 = vpop.f32.mrf.mxu0
        %v6106 = vadd.f32 0.0, %v6105
        %6107 = vdwg.mxu0
        %6108 = vmatpush.bf16.msra.mxu0 %v3676
        %6109 = vmatpush.bf16.msra.mxu0 %v3664
        %6110 = vmatpush.bf16.msra.mxu0 %v3652
        %6111 = vmatpush.bf16.msra.mxu0 %v3640
        %6112 = vmatpush.bf16.msra.mxu0 %v3628
        %6113 = vmatpush.bf16.msra.mxu0 %v3616
        %6114 = vmatpush.bf16.msra.mxu0 %v3604
        %6115 = vmatpush.bf16.msra.mxu0 %v3592
        %6116 = vmatmul.bf16.gmra.mxu0 %v402
        %v6117 = vpop.f32.mrf.mxu0
        %v6118 = vadd.f32 %v6099, %v6117
        %v6119 = vpop.f32.mrf.mxu0
        %v6120 = vadd.f32 %v6101, %v6119
        %6121 = vmatmul.bf16.gmra.mxu0 %v410
        %v6122 = vpop.f32.mrf.mxu0
        %v6123 = vadd.f32 %v6104, %v6122
        %v6124 = vpop.f32.mrf.mxu0
        %v6125 = vadd.f32 %v6106, %v6124
        %6126 = vdwg.mxu0
        %6127 = vmatpush.bf16.msra.mxu0 %v3772
        %6128 = vmatpush.bf16.msra.mxu0 %v3760
        %6129 = vmatpush.bf16.msra.mxu0 %v3748
        %6130 = vmatpush.bf16.msra.mxu0 %v3736
        %6131 = vmatpush.bf16.msra.mxu0 %v3724
        %6132 = vmatpush.bf16.msra.mxu0 %v3712
        %6133 = vmatpush.bf16.msra.mxu0 %v3700
        %6134 = vmatpush.bf16.msra.mxu0 %v3688
        %6135 = vmatmul.bf16.gmra.mxu0 %v403
        %v6136 = vpop.f32.mrf.mxu0
        %v6137 = vadd.f32 %v6118, %v6136
        %v6138 = vpop.f32.mrf.mxu0
        %v6139 = vadd.f32 %v6120, %v6138
        %6140 = vmatmul.bf16.gmra.mxu0 %v411
        %v6141 = vpop.f32.mrf.mxu0
        %v6142 = vadd.f32 %v6123, %v6141
        %v6143 = vpop.f32.mrf.mxu0
        %v6144 = vadd.f32 %v6125, %v6143
        %6145 = vdwg.mxu0
        %6146 = vmatpush.bf16.msra.mxu0 %v3868
        %6147 = vmatpush.bf16.msra.mxu0 %v3856
        %6148 = vmatpush.bf16.msra.mxu0 %v3844
        %6149 = vmatpush.bf16.msra.mxu0 %v3832
        %6150 = vmatpush.bf16.msra.mxu0 %v3820
        %6151 = vmatpush.bf16.msra.mxu0 %v3808
        %6152 = vmatpush.bf16.msra.mxu0 %v3796
        %6153 = vmatpush.bf16.msra.mxu0 %v3784
        %6154 = vmatmul.bf16.gmra.mxu0 %v404
        %v6155 = vpop.f32.mrf.mxu0
        %v6156 = vadd.f32 %v6137, %v6155
        %v6157 = vpop.f32.mrf.mxu0
        %v6158 = vadd.f32 %v6139, %v6157
        %6159 = vmatmul.bf16.gmra.mxu0 %v412
        %v6160 = vpop.f32.mrf.mxu0
        %v6161 = vadd.f32 %v6142, %v6160
        %v6162 = vpop.f32.mrf.mxu0
        %v6163 = vadd.f32 %v6144, %v6162
        %6164 = vdwg.mxu0
        %6165 = vmatpush.bf16.msra.mxu0 %v3964
        %6166 = vmatpush.bf16.msra.mxu0 %v3952
        %6167 = vmatpush.bf16.msra.mxu0 %v3940
        %6168 = vmatpush.bf16.msra.mxu0 %v3928
        %6169 = vmatpush.bf16.msra.mxu0 %v3916
        %6170 = vmatpush.bf16.msra.mxu0 %v3904
        %6171 = vmatpush.bf16.msra.mxu0 %v3892
        %6172 = vmatpush.bf16.msra.mxu0 %v3880
        %6173 = vmatmul.bf16.gmra.mxu0 %v405
        %v6174 = vpop.f32.mrf.mxu0
        %v6175 = vadd.f32 %v6156, %v6174
        %v6176 = vpop.f32.mrf.mxu0
        %v6177 = vadd.f32 %v6158, %v6176
        %6178 = vmatmul.bf16.gmra.mxu0 %v413
        %v6179 = vpop.f32.mrf.mxu0
        %v6180 = vadd.f32 %v6161, %v6179
        %v6181 = vpop.f32.mrf.mxu0
        %v6182 = vadd.f32 %v6163, %v6181
        %6183 = vdwg.mxu0
        %6184 = vmatpush.bf16.msra.mxu0 %v4060
        %6185 = vmatpush.bf16.msra.mxu0 %v4048
        %6186 = vmatpush.bf16.msra.mxu0 %v4036
        %6187 = vmatpush.bf16.msra.mxu0 %v4024
        %6188 = vmatpush.bf16.msra.mxu0 %v4012
        %6189 = vmatpush.bf16.msra.mxu0 %v4000
        %6190 = vmatpush.bf16.msra.mxu0 %v3988
        %6191 = vmatpush.bf16.msra.mxu0 %v3976
        %6192 = vmatmul.bf16.gmra.mxu0 %v406
        %v6193 = vpop.f32.mrf.mxu0
        %v6194 = vadd.f32 %v6175, %v6193
        %v6195 = vpop.f32.mrf.mxu0
        %v6196 = vadd.f32 %v6177, %v6195
        %6197 = vmatmul.bf16.gmra.mxu0 %v414
        %v6198 = vpop.f32.mrf.mxu0
        %v6199 = vadd.f32 %v6180, %v6198
        %v6200 = vpop.f32.mrf.mxu0
        %v6201 = vadd.f32 %v6182, %v6200
        %6202 = vdwg.mxu0
        %6203 = vmatpush.bf16.msra.mxu0 %v4156
        %6204 = vmatpush.bf16.msra.mxu0 %v4144
        %6205 = vmatpush.bf16.msra.mxu0 %v4132
        %6206 = vmatpush.bf16.msra.mxu0 %v4120
        %6207 = vmatpush.bf16.msra.mxu0 %v4108
        %6208 = vmatpush.bf16.msra.mxu0 %v4096
        %6209 = vmatpush.bf16.msra.mxu0 %v4084
        %6210 = vmatpush.bf16.msra.mxu0 %v4072
        %6211 = vmatmul.bf16.gmra.mxu0 %v407
        %v6212 = vpop.f32.mrf.mxu0
        %v6213 = vadd.f32 %v6194, %v6212
        %v6214 = vpop.f32.mrf.mxu0
        %v6215 = vadd.f32 %v6196, %v6214
        %6216 = vmatmul.bf16.gmra.mxu0 %v415
        %v6217 = vpop.f32.mrf.mxu0
        %v6218 = vadd.f32 %v6199, %v6217
        %v6219 = vpop.f32.mrf.mxu0
        %v6220 = vadd.f32 %v6201, %v6219
        %6221 = vdwg.mxu0
        %6222 = vmatpush.bf16.msra.mxu0 %v4252
        %6223 = vmatpush.bf16.msra.mxu0 %v4240
        %6224 = vmatpush.bf16.msra.mxu0 %v4228
        %6225 = vmatpush.bf16.msra.mxu0 %v4216
        %6226 = vmatpush.bf16.msra.mxu0 %v4204
        %6227 = vmatpush.bf16.msra.mxu0 %v4192
        %6228 = vmatpush.bf16.msra.mxu0 %v4180
        %6229 = vmatpush.bf16.msra.mxu0 %v4168
        %6230 = vmatmul.bf16.gmra.mxu0 %v408
        %v6231 = vpop.f32.mrf.mxu0
        %v6232 = vadd.f32 %v6213, %v6231
        %v6233 = vpop.f32.mrf.mxu0
        %v6234 = vadd.f32 %v6215, %v6233
        %6235 = vmatmul.bf16.gmra.mxu0 %v416
        %v6236 = vpop.f32.mrf.mxu0
        %v6237 = vadd.f32 %v6218, %v6236
        %v6238 = vpop.f32.mrf.mxu0
        %v6239 = vadd.f32 %v6220, %v6238
        %6240 = vdwg.mxu0
        %6241 = vmatpush.bf16.msra.mxu0 %v3581
        %6242 = vmatpush.bf16.msra.mxu0 %v3569
        %6243 = vmatpush.bf16.msra.mxu0 %v3557
        %6244 = vmatpush.bf16.msra.mxu0 %v3545
        %6245 = vmatpush.bf16.msra.mxu0 %v3533
        %6246 = vmatpush.bf16.msra.mxu0 %v3521
        %6247 = vmatpush.bf16.msra.mxu0 %v3509
        %6248 = vmatpush.bf16.msra.mxu0 %v3497
        %6249 = vmatmul.bf16.gmra.mxu0 %v401
        %v6250 = vpop.f32.mrf.mxu0
        %v6251 = vadd.f32 0.0, %v6250
        %v6252 = vpop.f32.mrf.mxu0
        %v6253 = vadd.f32 0.0, %v6252
        %6254 = vmatmul.bf16.gmra.mxu0 %v409
        %v6255 = vpop.f32.mrf.mxu0
        %v6256 = vadd.f32 0.0, %v6255
        %v6257 = vpop.f32.mrf.mxu0
        %v6258 = vadd.f32 0.0, %v6257
        %6259 = vdwg.mxu0
        %6260 = vmatpush.bf16.msra.mxu0 %v3677
        %6261 = vmatpush.bf16.msra.mxu0 %v3665
        %6262 = vmatpush.bf16.msra.mxu0 %v3653
        %6263 = vmatpush.bf16.msra.mxu0 %v3641
        %6264 = vmatpush.bf16.msra.mxu0 %v3629
        %6265 = vmatpush.bf16.msra.mxu0 %v3617
        %6266 = vmatpush.bf16.msra.mxu0 %v3605
        %6267 = vmatpush.bf16.msra.mxu0 %v3593
        %6268 = vmatmul.bf16.gmra.mxu0 %v402
        %v6269 = vpop.f32.mrf.mxu0
        %v6270 = vadd.f32 %v6251, %v6269
        %v6271 = vpop.f32.mrf.mxu0
        %v6272 = vadd.f32 %v6253, %v6271
        %6273 = vmatmul.bf16.gmra.mxu0 %v410
        %v6274 = vpop.f32.mrf.mxu0
        %v6275 = vadd.f32 %v6256, %v6274
        %v6276 = vpop.f32.mrf.mxu0
        %v6277 = vadd.f32 %v6258, %v6276
        %6278 = vdwg.mxu0
        %6279 = vmatpush.bf16.msra.mxu0 %v3773
        %6280 = vmatpush.bf16.msra.mxu0 %v3761
        %6281 = vmatpush.bf16.msra.mxu0 %v3749
        %6282 = vmatpush.bf16.msra.mxu0 %v3737
        %6283 = vmatpush.bf16.msra.mxu0 %v3725
        %6284 = vmatpush.bf16.msra.mxu0 %v3713
        %6285 = vmatpush.bf16.msra.mxu0 %v3701
        %6286 = vmatpush.bf16.msra.mxu0 %v3689
        %6287 = vmatmul.bf16.gmra.mxu0 %v403
        %v6288 = vpop.f32.mrf.mxu0
        %v6289 = vadd.f32 %v6270, %v6288
        %v6290 = vpop.f32.mrf.mxu0
        %v6291 = vadd.f32 %v6272, %v6290
        %6292 = vmatmul.bf16.gmra.mxu0 %v411
        %v6293 = vpop.f32.mrf.mxu0
        %v6294 = vadd.f32 %v6275, %v6293
        %v6295 = vpop.f32.mrf.mxu0
        %v6296 = vadd.f32 %v6277, %v6295
        %6297 = vdwg.mxu0
        %6298 = vmatpush.bf16.msra.mxu0 %v3869
        %6299 = vmatpush.bf16.msra.mxu0 %v3857
        %6300 = vmatpush.bf16.msra.mxu0 %v3845
        %6301 = vmatpush.bf16.msra.mxu0 %v3833
        %6302 = vmatpush.bf16.msra.mxu0 %v3821
        %6303 = vmatpush.bf16.msra.mxu0 %v3809
        %6304 = vmatpush.bf16.msra.mxu0 %v3797
        %6305 = vmatpush.bf16.msra.mxu0 %v3785
        %6306 = vmatmul.bf16.gmra.mxu0 %v404
        %v6307 = vpop.f32.mrf.mxu0
        %v6308 = vadd.f32 %v6289, %v6307
        %v6309 = vpop.f32.mrf.mxu0
        %v6310 = vadd.f32 %v6291, %v6309
        %6311 = vmatmul.bf16.gmra.mxu0 %v412
        %v6312 = vpop.f32.mrf.mxu0
        %v6313 = vadd.f32 %v6294, %v6312
        %v6314 = vpop.f32.mrf.mxu0
        %v6315 = vadd.f32 %v6296, %v6314
        %6316 = vdwg.mxu0
        %6317 = vmatpush.bf16.msra.mxu0 %v3965
        %6318 = vmatpush.bf16.msra.mxu0 %v3953
        %6319 = vmatpush.bf16.msra.mxu0 %v3941
        %6320 = vmatpush.bf16.msra.mxu0 %v3929
        %6321 = vmatpush.bf16.msra.mxu0 %v3917
        %6322 = vmatpush.bf16.msra.mxu0 %v3905
        %6323 = vmatpush.bf16.msra.mxu0 %v3893
        %6324 = vmatpush.bf16.msra.mxu0 %v3881
        %6325 = vmatmul.bf16.gmra.mxu0 %v405
        %v6326 = vpop.f32.mrf.mxu0
        %v6327 = vadd.f32 %v6308, %v6326
        %v6328 = vpop.f32.mrf.mxu0
        %v6329 = vadd.f32 %v6310, %v6328
        %6330 = vmatmul.bf16.gmra.mxu0 %v413
        %v6331 = vpop.f32.mrf.mxu0
        %v6332 = vadd.f32 %v6313, %v6331
        %v6333 = vpop.f32.mrf.mxu0
        %v6334 = vadd.f32 %v6315, %v6333
        %6335 = vdwg.mxu0
        %6336 = vmatpush.bf16.msra.mxu0 %v4061
        %6337 = vmatpush.bf16.msra.mxu0 %v4049
        %6338 = vmatpush.bf16.msra.mxu0 %v4037
        %6339 = vmatpush.bf16.msra.mxu0 %v4025
        %6340 = vmatpush.bf16.msra.mxu0 %v4013
        %6341 = vmatpush.bf16.msra.mxu0 %v4001
        %6342 = vmatpush.bf16.msra.mxu0 %v3989
        %6343 = vmatpush.bf16.msra.mxu0 %v3977
        %6344 = vmatmul.bf16.gmra.mxu0 %v406
        %v6345 = vpop.f32.mrf.mxu0
        %v6346 = vadd.f32 %v6327, %v6345
        %v6347 = vpop.f32.mrf.mxu0
        %v6348 = vadd.f32 %v6329, %v6347
        %6349 = vmatmul.bf16.gmra.mxu0 %v414
        %v6350 = vpop.f32.mrf.mxu0
        %v6351 = vadd.f32 %v6332, %v6350
        %v6352 = vpop.f32.mrf.mxu0
        %v6353 = vadd.f32 %v6334, %v6352
        %6354 = vdwg.mxu0
        %6355 = vmatpush.bf16.msra.mxu0 %v4157
        %6356 = vmatpush.bf16.msra.mxu0 %v4145
        %6357 = vmatpush.bf16.msra.mxu0 %v4133
        %6358 = vmatpush.bf16.msra.mxu0 %v4121
        %6359 = vmatpush.bf16.msra.mxu0 %v4109
        %6360 = vmatpush.bf16.msra.mxu0 %v4097
        %6361 = vmatpush.bf16.msra.mxu0 %v4085
        %6362 = vmatpush.bf16.msra.mxu0 %v4073
        %6363 = vmatmul.bf16.gmra.mxu0 %v407
        %v6364 = vpop.f32.mrf.mxu0
        %v6365 = vadd.f32 %v6346, %v6364
        %v6366 = vpop.f32.mrf.mxu0
        %v6367 = vadd.f32 %v6348, %v6366
        %6368 = vmatmul.bf16.gmra.mxu0 %v415
        %v6369 = vpop.f32.mrf.mxu0
        %v6370 = vadd.f32 %v6351, %v6369
        %v6371 = vpop.f32.mrf.mxu0
        %v6372 = vadd.f32 %v6353, %v6371
        %6373 = vdwg.mxu0
        %6374 = vmatpush.bf16.msra.mxu0 %v4253
        %6375 = vmatpush.bf16.msra.mxu0 %v4241
        %6376 = vmatpush.bf16.msra.mxu0 %v4229
        %6377 = vmatpush.bf16.msra.mxu0 %v4217
        %6378 = vmatpush.bf16.msra.mxu0 %v4205
        %6379 = vmatpush.bf16.msra.mxu0 %v4193
        %6380 = vmatpush.bf16.msra.mxu0 %v4181
        %6381 = vmatpush.bf16.msra.mxu0 %v4169
        %6382 = vmatmul.bf16.gmra.mxu0 %v408
        %v6383 = vpop.f32.mrf.mxu0
        %v6384 = vadd.f32 %v6365, %v6383
        %v6385 = vpop.f32.mrf.mxu0
        %v6386 = vadd.f32 %v6367, %v6385
        %6387 = vmatmul.bf16.gmra.mxu0 %v416
        %v6388 = vpop.f32.mrf.mxu0
        %v6389 = vadd.f32 %v6370, %v6388
        %v6390 = vpop.f32.mrf.mxu0
        %v6391 = vadd.f32 %v6372, %v6390
        %6392 = vdwg.mxu0
        %6393 = vmatpush.bf16.msra.mxu0 %v3582
        %6394 = vmatpush.bf16.msra.mxu0 %v3570
        %6395 = vmatpush.bf16.msra.mxu0 %v3558
        %6396 = vmatpush.bf16.msra.mxu0 %v3546
        %6397 = vmatpush.bf16.msra.mxu0 %v3534
        %6398 = vmatpush.bf16.msra.mxu0 %v3522
        %6399 = vmatpush.bf16.msra.mxu0 %v3510
        %6400 = vmatpush.bf16.msra.mxu0 %v3498
        %6401 = vmatmul.bf16.gmra.mxu0 %v401
        %v6402 = vpop.f32.mrf.mxu0
        %v6403 = vadd.f32 0.0, %v6402
        %v6404 = vpop.f32.mrf.mxu0
        %v6405 = vadd.f32 0.0, %v6404
        %6406 = vmatmul.bf16.gmra.mxu0 %v409
        %v6407 = vpop.f32.mrf.mxu0
        %v6408 = vadd.f32 0.0, %v6407
        %v6409 = vpop.f32.mrf.mxu0
        %v6410 = vadd.f32 0.0, %v6409
        %6411 = vdwg.mxu0
        %6412 = vmatpush.bf16.msra.mxu0 %v3678
        %6413 = vmatpush.bf16.msra.mxu0 %v3666
        %6414 = vmatpush.bf16.msra.mxu0 %v3654
        %6415 = vmatpush.bf16.msra.mxu0 %v3642
        %6416 = vmatpush.bf16.msra.mxu0 %v3630
        %6417 = vmatpush.bf16.msra.mxu0 %v3618
        %6418 = vmatpush.bf16.msra.mxu0 %v3606
        %6419 = vmatpush.bf16.msra.mxu0 %v3594
        %6420 = vmatmul.bf16.gmra.mxu0 %v402
        %v6421 = vpop.f32.mrf.mxu0
        %v6422 = vadd.f32 %v6403, %v6421
        %v6423 = vpop.f32.mrf.mxu0
        %v6424 = vadd.f32 %v6405, %v6423
        %6425 = vmatmul.bf16.gmra.mxu0 %v410
        %v6426 = vpop.f32.mrf.mxu0
        %v6427 = vadd.f32 %v6408, %v6426
        %v6428 = vpop.f32.mrf.mxu0
        %v6429 = vadd.f32 %v6410, %v6428
        %6430 = vdwg.mxu0
        %6431 = vmatpush.bf16.msra.mxu0 %v3774
        %6432 = vmatpush.bf16.msra.mxu0 %v3762
        %6433 = vmatpush.bf16.msra.mxu0 %v3750
        %6434 = vmatpush.bf16.msra.mxu0 %v3738
        %6435 = vmatpush.bf16.msra.mxu0 %v3726
        %6436 = vmatpush.bf16.msra.mxu0 %v3714
        %6437 = vmatpush.bf16.msra.mxu0 %v3702
        %6438 = vmatpush.bf16.msra.mxu0 %v3690
        %6439 = vmatmul.bf16.gmra.mxu0 %v403
        %v6440 = vpop.f32.mrf.mxu0
        %v6441 = vadd.f32 %v6422, %v6440
        %v6442 = vpop.f32.mrf.mxu0
        %v6443 = vadd.f32 %v6424, %v6442
        %6444 = vmatmul.bf16.gmra.mxu0 %v411
        %v6445 = vpop.f32.mrf.mxu0
        %v6446 = vadd.f32 %v6427, %v6445
        %v6447 = vpop.f32.mrf.mxu0
        %v6448 = vadd.f32 %v6429, %v6447
        %6449 = vdwg.mxu0
        %6450 = vmatpush.bf16.msra.mxu0 %v3870
        %6451 = vmatpush.bf16.msra.mxu0 %v3858
        %6452 = vmatpush.bf16.msra.mxu0 %v3846
        %6453 = vmatpush.bf16.msra.mxu0 %v3834
        %6454 = vmatpush.bf16.msra.mxu0 %v3822
        %6455 = vmatpush.bf16.msra.mxu0 %v3810
        %6456 = vmatpush.bf16.msra.mxu0 %v3798
        %6457 = vmatpush.bf16.msra.mxu0 %v3786
        %6458 = vmatmul.bf16.gmra.mxu0 %v404
        %v6459 = vpop.f32.mrf.mxu0
        %v6460 = vadd.f32 %v6441, %v6459
        %v6461 = vpop.f32.mrf.mxu0
        %v6462 = vadd.f32 %v6443, %v6461
        %6463 = vmatmul.bf16.gmra.mxu0 %v412
        %v6464 = vpop.f32.mrf.mxu0
        %v6465 = vadd.f32 %v6446, %v6464
        %v6466 = vpop.f32.mrf.mxu0
        %v6467 = vadd.f32 %v6448, %v6466
        %6468 = vdwg.mxu0
        %6469 = vmatpush.bf16.msra.mxu0 %v3966
        %6470 = vmatpush.bf16.msra.mxu0 %v3954
        %6471 = vmatpush.bf16.msra.mxu0 %v3942
        %6472 = vmatpush.bf16.msra.mxu0 %v3930
        %6473 = vmatpush.bf16.msra.mxu0 %v3918
        %6474 = vmatpush.bf16.msra.mxu0 %v3906
        %6475 = vmatpush.bf16.msra.mxu0 %v3894
        %6476 = vmatpush.bf16.msra.mxu0 %v3882
        %6477 = vmatmul.bf16.gmra.mxu0 %v405
        %v6478 = vpop.f32.mrf.mxu0
        %v6479 = vadd.f32 %v6460, %v6478
        %v6480 = vpop.f32.mrf.mxu0
        %v6481 = vadd.f32 %v6462, %v6480
        %6482 = vmatmul.bf16.gmra.mxu0 %v413
        %v6483 = vpop.f32.mrf.mxu0
        %v6484 = vadd.f32 %v6465, %v6483
        %v6485 = vpop.f32.mrf.mxu0
        %v6486 = vadd.f32 %v6467, %v6485
        %6487 = vdwg.mxu0
        %6488 = vmatpush.bf16.msra.mxu0 %v4062
        %6489 = vmatpush.bf16.msra.mxu0 %v4050
        %6490 = vmatpush.bf16.msra.mxu0 %v4038
        %6491 = vmatpush.bf16.msra.mxu0 %v4026
        %6492 = vmatpush.bf16.msra.mxu0 %v4014
        %6493 = vmatpush.bf16.msra.mxu0 %v4002
        %6494 = vmatpush.bf16.msra.mxu0 %v3990
        %6495 = vmatpush.bf16.msra.mxu0 %v3978
        %6496 = vmatmul.bf16.gmra.mxu0 %v406
        %v6497 = vpop.f32.mrf.mxu0
        %v6498 = vadd.f32 %v6479, %v6497
        %v6499 = vpop.f32.mrf.mxu0
        %v6500 = vadd.f32 %v6481, %v6499
        %6501 = vmatmul.bf16.gmra.mxu0 %v414
        %v6502 = vpop.f32.mrf.mxu0
        %v6503 = vadd.f32 %v6484, %v6502
        %v6504 = vpop.f32.mrf.mxu0
        %v6505 = vadd.f32 %v6486, %v6504
        %6506 = vdwg.mxu0
        %6507 = vmatpush.bf16.msra.mxu0 %v4158
        %6508 = vmatpush.bf16.msra.mxu0 %v4146
        %6509 = vmatpush.bf16.msra.mxu0 %v4134
        %6510 = vmatpush.bf16.msra.mxu0 %v4122
        %6511 = vmatpush.bf16.msra.mxu0 %v4110
        %6512 = vmatpush.bf16.msra.mxu0 %v4098
        %6513 = vmatpush.bf16.msra.mxu0 %v4086
        %6514 = vmatpush.bf16.msra.mxu0 %v4074
        %6515 = vmatmul.bf16.gmra.mxu0 %v407
        %v6516 = vpop.f32.mrf.mxu0
        %v6517 = vadd.f32 %v6498, %v6516
        %v6518 = vpop.f32.mrf.mxu0
        %v6519 = vadd.f32 %v6500, %v6518
        %6520 = vmatmul.bf16.gmra.mxu0 %v415
        %v6521 = vpop.f32.mrf.mxu0
        %v6522 = vadd.f32 %v6503, %v6521
        %v6523 = vpop.f32.mrf.mxu0
        %v6524 = vadd.f32 %v6505, %v6523
        %6525 = vdwg.mxu0
        %6526 = vmatpush.bf16.msra.mxu0 %v4254
        %6527 = vmatpush.bf16.msra.mxu0 %v4242
        %6528 = vmatpush.bf16.msra.mxu0 %v4230
        %6529 = vmatpush.bf16.msra.mxu0 %v4218
        %6530 = vmatpush.bf16.msra.mxu0 %v4206
        %6531 = vmatpush.bf16.msra.mxu0 %v4194
        %6532 = vmatpush.bf16.msra.mxu0 %v4182
        %6533 = vmatpush.bf16.msra.mxu0 %v4170
        %6534 = vmatmul.bf16.gmra.mxu0 %v408
        %v6535 = vpop.f32.mrf.mxu0
        %v6536 = vadd.f32 %v6517, %v6535
        %v6537 = vpop.f32.mrf.mxu0
        %v6538 = vadd.f32 %v6519, %v6537
        %6539 = vmatmul.bf16.gmra.mxu0 %v416
        %v6540 = vpop.f32.mrf.mxu0
        %v6541 = vadd.f32 %v6522, %v6540
        %v6542 = vpop.f32.mrf.mxu0
        %v6543 = vadd.f32 %v6524, %v6542
        %6544 = vdwg.mxu0
        %6545 = vmatpush.bf16.msra.mxu0 %v3583
        %6546 = vmatpush.bf16.msra.mxu0 %v3571
        %6547 = vmatpush.bf16.msra.mxu0 %v3559
        %6548 = vmatpush.bf16.msra.mxu0 %v3547
        %6549 = vmatpush.bf16.msra.mxu0 %v3535
        %6550 = vmatpush.bf16.msra.mxu0 %v3523
        %6551 = vmatpush.bf16.msra.mxu0 %v3511
        %6552 = vmatpush.bf16.msra.mxu0 %v3499
        %6553 = vmatmul.bf16.gmra.mxu0 %v401
        %v6554 = vpop.f32.mrf.mxu0
        %v6555 = vadd.f32 0.0, %v6554
        %v6556 = vpop.f32.mrf.mxu0
        %v6557 = vadd.f32 0.0, %v6556
        %6558 = vmatmul.bf16.gmra.mxu0 %v409
        %v6559 = vpop.f32.mrf.mxu0
        %v6560 = vadd.f32 0.0, %v6559
        %v6561 = vpop.f32.mrf.mxu0
        %v6562 = vadd.f32 0.0, %v6561
        %6563 = vdwg.mxu0
        %6564 = vmatpush.bf16.msra.mxu0 %v3679
        %6565 = vmatpush.bf16.msra.mxu0 %v3667
        %6566 = vmatpush.bf16.msra.mxu0 %v3655
        %6567 = vmatpush.bf16.msra.mxu0 %v3643
        %6568 = vmatpush.bf16.msra.mxu0 %v3631
        %6569 = vmatpush.bf16.msra.mxu0 %v3619
        %6570 = vmatpush.bf16.msra.mxu0 %v3607
        %6571 = vmatpush.bf16.msra.mxu0 %v3595
        %6572 = vmatmul.bf16.gmra.mxu0 %v402
        %v6573 = vpop.f32.mrf.mxu0
        %v6574 = vadd.f32 %v6555, %v6573
        %v6575 = vpop.f32.mrf.mxu0
        %v6576 = vadd.f32 %v6557, %v6575
        %6577 = vmatmul.bf16.gmra.mxu0 %v410
        %v6578 = vpop.f32.mrf.mxu0
        %v6579 = vadd.f32 %v6560, %v6578
        %v6580 = vpop.f32.mrf.mxu0
        %v6581 = vadd.f32 %v6562, %v6580
        %6582 = vdwg.mxu0
        %6583 = vmatpush.bf16.msra.mxu0 %v3775
        %6584 = vmatpush.bf16.msra.mxu0 %v3763
        %6585 = vmatpush.bf16.msra.mxu0 %v3751
        %6586 = vmatpush.bf16.msra.mxu0 %v3739
        %6587 = vmatpush.bf16.msra.mxu0 %v3727
        %6588 = vmatpush.bf16.msra.mxu0 %v3715
        %6589 = vmatpush.bf16.msra.mxu0 %v3703
        %6590 = vmatpush.bf16.msra.mxu0 %v3691
        %6591 = vmatmul.bf16.gmra.mxu0 %v403
        %v6592 = vpop.f32.mrf.mxu0
        %v6593 = vadd.f32 %v6574, %v6592
        %v6594 = vpop.f32.mrf.mxu0
        %v6595 = vadd.f32 %v6576, %v6594
        %6596 = vmatmul.bf16.gmra.mxu0 %v411
        %v6597 = vpop.f32.mrf.mxu0
        %v6598 = vadd.f32 %v6579, %v6597
        %v6599 = vpop.f32.mrf.mxu0
        %v6600 = vadd.f32 %v6581, %v6599
        %6601 = vdwg.mxu0
        %6602 = vmatpush.bf16.msra.mxu0 %v3871
        %6603 = vmatpush.bf16.msra.mxu0 %v3859
        %6604 = vmatpush.bf16.msra.mxu0 %v3847
        %6605 = vmatpush.bf16.msra.mxu0 %v3835
        %6606 = vmatpush.bf16.msra.mxu0 %v3823
        %6607 = vmatpush.bf16.msra.mxu0 %v3811
        %6608 = vmatpush.bf16.msra.mxu0 %v3799
        %6609 = vmatpush.bf16.msra.mxu0 %v3787
        %6610 = vmatmul.bf16.gmra.mxu0 %v404
        %v6611 = vpop.f32.mrf.mxu0
        %v6612 = vadd.f32 %v6593, %v6611
        %v6613 = vpop.f32.mrf.mxu0
        %v6614 = vadd.f32 %v6595, %v6613
        %6615 = vmatmul.bf16.gmra.mxu0 %v412
        %v6616 = vpop.f32.mrf.mxu0
        %v6617 = vadd.f32 %v6598, %v6616
        %v6618 = vpop.f32.mrf.mxu0
        %v6619 = vadd.f32 %v6600, %v6618
        %6620 = vdwg.mxu0
        %6621 = vmatpush.bf16.msra.mxu0 %v3967
        %6622 = vmatpush.bf16.msra.mxu0 %v3955
        %6623 = vmatpush.bf16.msra.mxu0 %v3943
        %6624 = vmatpush.bf16.msra.mxu0 %v3931
        %6625 = vmatpush.bf16.msra.mxu0 %v3919
        %6626 = vmatpush.bf16.msra.mxu0 %v3907
        %6627 = vmatpush.bf16.msra.mxu0 %v3895
        %6628 = vmatpush.bf16.msra.mxu0 %v3883
        %6629 = vmatmul.bf16.gmra.mxu0 %v405
        %v6630 = vpop.f32.mrf.mxu0
        %v6631 = vadd.f32 %v6612, %v6630
        %v6632 = vpop.f32.mrf.mxu0
        %v6633 = vadd.f32 %v6614, %v6632
        %6634 = vmatmul.bf16.gmra.mxu0 %v413
        %v6635 = vpop.f32.mrf.mxu0
        %v6636 = vadd.f32 %v6617, %v6635
        %v6637 = vpop.f32.mrf.mxu0
        %v6638 = vadd.f32 %v6619, %v6637
        %6639 = vdwg.mxu0
        %6640 = vmatpush.bf16.msra.mxu0 %v4063
        %6641 = vmatpush.bf16.msra.mxu0 %v4051
        %6642 = vmatpush.bf16.msra.mxu0 %v4039
        %6643 = vmatpush.bf16.msra.mxu0 %v4027
        %6644 = vmatpush.bf16.msra.mxu0 %v4015
        %6645 = vmatpush.bf16.msra.mxu0 %v4003
        %6646 = vmatpush.bf16.msra.mxu0 %v3991
        %6647 = vmatpush.bf16.msra.mxu0 %v3979
        %6648 = vmatmul.bf16.gmra.mxu0 %v406
        %v6649 = vpop.f32.mrf.mxu0
        %v6650 = vadd.f32 %v6631, %v6649
        %v6651 = vpop.f32.mrf.mxu0
        %v6652 = vadd.f32 %v6633, %v6651
        %6653 = vmatmul.bf16.gmra.mxu0 %v414
        %v6654 = vpop.f32.mrf.mxu0
        %v6655 = vadd.f32 %v6636, %v6654
        %v6656 = vpop.f32.mrf.mxu0
        %v6657 = vadd.f32 %v6638, %v6656
        %6658 = vdwg.mxu0
        %6659 = vmatpush.bf16.msra.mxu0 %v4159
        %6660 = vmatpush.bf16.msra.mxu0 %v4147
        %6661 = vmatpush.bf16.msra.mxu0 %v4135
        %6662 = vmatpush.bf16.msra.mxu0 %v4123
        %6663 = vmatpush.bf16.msra.mxu0 %v4111
        %6664 = vmatpush.bf16.msra.mxu0 %v4099
        %6665 = vmatpush.bf16.msra.mxu0 %v4087
        %6666 = vmatpush.bf16.msra.mxu0 %v4075
        %6667 = vmatmul.bf16.gmra.mxu0 %v407
        %v6668 = vpop.f32.mrf.mxu0
        %v6669 = vadd.f32 %v6650, %v6668
        %v6670 = vpop.f32.mrf.mxu0
        %v6671 = vadd.f32 %v6652, %v6670
        %6672 = vmatmul.bf16.gmra.mxu0 %v415
        %v6673 = vpop.f32.mrf.mxu0
        %v6674 = vadd.f32 %v6655, %v6673
        %v6675 = vpop.f32.mrf.mxu0
        %v6676 = vadd.f32 %v6657, %v6675
        %6677 = vdwg.mxu0
        %6678 = vmatpush.bf16.msra.mxu0 %v4255
        %6679 = vmatpush.bf16.msra.mxu0 %v4243
        %6680 = vmatpush.bf16.msra.mxu0 %v4231
        %6681 = vmatpush.bf16.msra.mxu0 %v4219
        %6682 = vmatpush.bf16.msra.mxu0 %v4207
        %6683 = vmatpush.bf16.msra.mxu0 %v4195
        %6684 = vmatpush.bf16.msra.mxu0 %v4183
        %6685 = vmatpush.bf16.msra.mxu0 %v4171
        %6686 = vmatmul.bf16.gmra.mxu0 %v408
        %v6687 = vpop.f32.mrf.mxu0
        %v6688 = vadd.f32 %v6669, %v6687
        %v6689 = vpop.f32.mrf.mxu0
        %v6690 = vadd.f32 %v6671, %v6689
        %6691 = vmatmul.bf16.gmra.mxu0 %v416
        %v6692 = vpop.f32.mrf.mxu0
        %v6693 = vadd.f32 %v6674, %v6692
        %v6694 = vpop.f32.mrf.mxu0
        %v6695 = vadd.f32 %v6676, %v6694
        %6696 = vdwg.mxu0
        %6697 = vmatpush.bf16.msra.mxu0 %v3584
        %6698 = vmatpush.bf16.msra.mxu0 %v3572
        %6699 = vmatpush.bf16.msra.mxu0 %v3560
        %6700 = vmatpush.bf16.msra.mxu0 %v3548
        %6701 = vmatpush.bf16.msra.mxu0 %v3536
        %6702 = vmatpush.bf16.msra.mxu0 %v3524
        %6703 = vmatpush.bf16.msra.mxu0 %v3512
        %6704 = vmatpush.bf16.msra.mxu0 %v3500
        %6705 = vmatmul.bf16.gmra.mxu0 %v401
        %v6706 = vpop.f32.mrf.mxu0
        %v6707 = vadd.f32 0.0, %v6706
        %v6708 = vpop.f32.mrf.mxu0
        %v6709 = vadd.f32 0.0, %v6708
        %6710 = vmatmul.bf16.gmra.mxu0 %v409
        %v6711 = vpop.f32.mrf.mxu0
        %v6712 = vadd.f32 0.0, %v6711
        %v6713 = vpop.f32.mrf.mxu0
        %v6714 = vadd.f32 0.0, %v6713
        %6715 = vdwg.mxu0
        %6716 = vmatpush.bf16.msra.mxu0 %v3680
        %6717 = vmatpush.bf16.msra.mxu0 %v3668
        %6718 = vmatpush.bf16.msra.mxu0 %v3656
        %6719 = vmatpush.bf16.msra.mxu0 %v3644
        %6720 = vmatpush.bf16.msra.mxu0 %v3632
        %6721 = vmatpush.bf16.msra.mxu0 %v3620
        %6722 = vmatpush.bf16.msra.mxu0 %v3608
        %6723 = vmatpush.bf16.msra.mxu0 %v3596
        %6724 = vmatmul.bf16.gmra.mxu0 %v402
        %v6725 = vpop.f32.mrf.mxu0
        %v6726 = vadd.f32 %v6707, %v6725
        %v6727 = vpop.f32.mrf.mxu0
        %v6728 = vadd.f32 %v6709, %v6727
        %6729 = vmatmul.bf16.gmra.mxu0 %v410
        %v6730 = vpop.f32.mrf.mxu0
        %v6731 = vadd.f32 %v6712, %v6730
        %v6732 = vpop.f32.mrf.mxu0
        %v6733 = vadd.f32 %v6714, %v6732
        %6734 = vdwg.mxu0
        %6735 = vmatpush.bf16.msra.mxu0 %v3776
        %6736 = vmatpush.bf16.msra.mxu0 %v3764
        %6737 = vmatpush.bf16.msra.mxu0 %v3752
        %6738 = vmatpush.bf16.msra.mxu0 %v3740
        %6739 = vmatpush.bf16.msra.mxu0 %v3728
        %6740 = vmatpush.bf16.msra.mxu0 %v3716
        %6741 = vmatpush.bf16.msra.mxu0 %v3704
        %6742 = vmatpush.bf16.msra.mxu0 %v3692
        %6743 = vmatmul.bf16.gmra.mxu0 %v403
        %v6744 = vpop.f32.mrf.mxu0
        %v6745 = vadd.f32 %v6726, %v6744
        %v6746 = vpop.f32.mrf.mxu0
        %v6747 = vadd.f32 %v6728, %v6746
        %6748 = vmatmul.bf16.gmra.mxu0 %v411
        %v6749 = vpop.f32.mrf.mxu0
        %v6750 = vadd.f32 %v6731, %v6749
        %v6751 = vpop.f32.mrf.mxu0
        %v6752 = vadd.f32 %v6733, %v6751
        %6753 = vdwg.mxu0
        %6754 = vmatpush.bf16.msra.mxu0 %v3872
        %6755 = vmatpush.bf16.msra.mxu0 %v3860
        %6756 = vmatpush.bf16.msra.mxu0 %v3848
        %6757 = vmatpush.bf16.msra.mxu0 %v3836
        %6758 = vmatpush.bf16.msra.mxu0 %v3824
        %6759 = vmatpush.bf16.msra.mxu0 %v3812
        %6760 = vmatpush.bf16.msra.mxu0 %v3800
        %6761 = vmatpush.bf16.msra.mxu0 %v3788
        %6762 = vmatmul.bf16.gmra.mxu0 %v404
        %v6763 = vpop.f32.mrf.mxu0
        %v6764 = vadd.f32 %v6745, %v6763
        %v6765 = vpop.f32.mrf.mxu0
        %v6766 = vadd.f32 %v6747, %v6765
        %6767 = vmatmul.bf16.gmra.mxu0 %v412
        %v6768 = vpop.f32.mrf.mxu0
        %v6769 = vadd.f32 %v6750, %v6768
        %v6770 = vpop.f32.mrf.mxu0
        %v6771 = vadd.f32 %v6752, %v6770
        %6772 = vdwg.mxu0
        %6773 = vmatpush.bf16.msra.mxu0 %v3968
        %6774 = vmatpush.bf16.msra.mxu0 %v3956
        %6775 = vmatpush.bf16.msra.mxu0 %v3944
        %6776 = vmatpush.bf16.msra.mxu0 %v3932
        %6777 = vmatpush.bf16.msra.mxu0 %v3920
        %6778 = vmatpush.bf16.msra.mxu0 %v3908
        %6779 = vmatpush.bf16.msra.mxu0 %v3896
        %6780 = vmatpush.bf16.msra.mxu0 %v3884
        %6781 = vmatmul.bf16.gmra.mxu0 %v405
        %v6782 = vpop.f32.mrf.mxu0
        %v6783 = vadd.f32 %v6764, %v6782
        %v6784 = vpop.f32.mrf.mxu0
        %v6785 = vadd.f32 %v6766, %v6784
        %6786 = vmatmul.bf16.gmra.mxu0 %v413
        %v6787 = vpop.f32.mrf.mxu0
        %v6788 = vadd.f32 %v6769, %v6787
        %v6789 = vpop.f32.mrf.mxu0
        %v6790 = vadd.f32 %v6771, %v6789
        %6791 = vdwg.mxu0
        %6792 = vmatpush.bf16.msra.mxu0 %v4064
        %6793 = vmatpush.bf16.msra.mxu0 %v4052
        %6794 = vmatpush.bf16.msra.mxu0 %v4040
        %6795 = vmatpush.bf16.msra.mxu0 %v4028
        %6796 = vmatpush.bf16.msra.mxu0 %v4016
        %6797 = vmatpush.bf16.msra.mxu0 %v4004
        %6798 = vmatpush.bf16.msra.mxu0 %v3992
        %6799 = vmatpush.bf16.msra.mxu0 %v3980
        %6800 = vmatmul.bf16.gmra.mxu0 %v406
        %v6801 = vpop.f32.mrf.mxu0
        %v6802 = vadd.f32 %v6783, %v6801
        %v6803 = vpop.f32.mrf.mxu0
        %v6804 = vadd.f32 %v6785, %v6803
        %6805 = vmatmul.bf16.gmra.mxu0 %v414
        %v6806 = vpop.f32.mrf.mxu0
        %v6807 = vadd.f32 %v6788, %v6806
        %v6808 = vpop.f32.mrf.mxu0
        %v6809 = vadd.f32 %v6790, %v6808
        %6810 = vdwg.mxu0
        %6811 = vmatpush.bf16.msra.mxu0 %v4160
        %6812 = vmatpush.bf16.msra.mxu0 %v4148
        %6813 = vmatpush.bf16.msra.mxu0 %v4136
        %6814 = vmatpush.bf16.msra.mxu0 %v4124
        %6815 = vmatpush.bf16.msra.mxu0 %v4112
        %6816 = vmatpush.bf16.msra.mxu0 %v4100
        %6817 = vmatpush.bf16.msra.mxu0 %v4088
        %6818 = vmatpush.bf16.msra.mxu0 %v4076
        %6819 = vmatmul.bf16.gmra.mxu0 %v407
        %v6820 = vpop.f32.mrf.mxu0
        %v6821 = vadd.f32 %v6802, %v6820
        %v6822 = vpop.f32.mrf.mxu0
        %v6823 = vadd.f32 %v6804, %v6822
        %6824 = vmatmul.bf16.gmra.mxu0 %v415
        %v6825 = vpop.f32.mrf.mxu0
        %v6826 = vadd.f32 %v6807, %v6825
        %v6827 = vpop.f32.mrf.mxu0
        %v6828 = vadd.f32 %v6809, %v6827
        %6829 = vdwg.mxu0
        %6830 = vmatpush.bf16.msra.mxu0 %v4256
        %6831 = vmatpush.bf16.msra.mxu0 %v4244
        %6832 = vmatpush.bf16.msra.mxu0 %v4232
        %6833 = vmatpush.bf16.msra.mxu0 %v4220
        %6834 = vmatpush.bf16.msra.mxu0 %v4208
        %6835 = vmatpush.bf16.msra.mxu0 %v4196
        %6836 = vmatpush.bf16.msra.mxu0 %v4184
        %6837 = vmatpush.bf16.msra.mxu0 %v4172
        %6838 = vmatmul.bf16.gmra.mxu0 %v408
        %v6839 = vpop.f32.mrf.mxu0
        %v6840 = vadd.f32 %v6821, %v6839
        %v6841 = vpop.f32.mrf.mxu0
        %v6842 = vadd.f32 %v6823, %v6841
        %6843 = vmatmul.bf16.gmra.mxu0 %v416
        %v6844 = vpop.f32.mrf.mxu0
        %v6845 = vadd.f32 %v6826, %v6844
        %v6846 = vpop.f32.mrf.mxu0
        %v6847 = vadd.f32 %v6828, %v6846
        %6848 = vdwg.mxu0
        %v6849 = vadd.f32 %v321, %v5168
        %v6850 = vadd.f32 %v322, %v5320
        %v6851 = vadd.f32 %v323, %v5472
        %v6852 = vadd.f32 %v324, %v5624
        %v6853 = vadd.f32 %v325, %v5776
        %v6854 = vadd.f32 %v326, %v5928
        %v6855 = vadd.f32 %v327, %v6080
        %v6856 = vadd.f32 %v328, %v6232
        %v6857 = vadd.f32 %v329, %v6384
        %v6858 = vadd.f32 %v330, %v6536
        %v6859 = vadd.f32 %v331, %v6688
        %v6860 = vadd.f32 %v332, %v6840
        %v6861 = vadd.f32 %v333, %v5170
        %v6862 = vadd.f32 %v334, %v5322
        %v6863 = vadd.f32 %v335, %v5474
        %v6864 = vadd.f32 %v336, %v5626
        %v6865 = vadd.f32 %v337, %v5778
        %v6866 = vadd.f32 %v338, %v5930
        %v6867 = vadd.f32 %v339, %v6082
        %v6868 = vadd.f32 %v340, %v6234
        %v6869 = vadd.f32 %v341, %v6386
        %v6870 = vadd.f32 %v342, %v6538
        %v6871 = vadd.f32 %v343, %v6690
        %v6872 = vadd.f32 %v344, %v6842
        %v6873 = vadd.f32 %v345, %v5173
        %v6874 = vadd.f32 %v346, %v5325
        %v6875 = vadd.f32 %v347, %v5477
        %v6876 = vadd.f32 %v348, %v5629
        %v6877 = vadd.f32 %v349, %v5781
        %v6878 = vadd.f32 %v350, %v5933
        %v6879 = vadd.f32 %v351, %v6085
        %v6880 = vadd.f32 %v352, %v6237
        %v6881 = vadd.f32 %v353, %v6389
        %v6882 = vadd.f32 %v354, %v6541
        %v6883 = vadd.f32 %v355, %v6693
        %v6884 = vadd.f32 %v356, %v6845
        %v6885 = vadd.f32 %v357, %v5175
        %v6886 = vadd.f32 %v358, %v5327
        %v6887 = vadd.f32 %v359, %v5479
        %v6888 = vadd.f32 %v360, %v5631
        %v6889 = vadd.f32 %v361, %v5783
        %v6890 = vadd.f32 %v362, %v5935
        %v6891 = vadd.f32 %v363, %v6087
        %v6892 = vadd.f32 %v364, %v6239
        %v6893 = vadd.f32 %v365, %v6391
        %v6894 = vadd.f32 %v366, %v6543
        %v6895 = vadd.f32 %v367, %v6695
        %v6896 = vadd.f32 %v368, %v6847
        %6897 = vst [vmem:[#allocation8] sm:$0xff] %v6849
        %6898 = vst [vmem:[#allocation8 + $0x8] sm:$0xff] %v6850
        %6899 = vst [vmem:[#allocation8 + $0x10] sm:$0xff] %v6851
        %6900 = vst [vmem:[#allocation8 + $0x18] sm:$0xff] %v6852
        %6901 = vst [vmem:[#allocation8 + $0x20] sm:$0xff] %v6853
        %6902 = vst [vmem:[#allocation8 + $0x28] sm:$0xff] %v6854
        %6903 = vst [vmem:[#allocation8 + $0x30] sm:$0xff] %v6855
        %6904 = vst [vmem:[#allocation8 + $0x38] sm:$0xff] %v6856
        %6905 = vst [vmem:[#allocation8 + $0x40] sm:$0xff] %v6857
        %6906 = vst [vmem:[#allocation8 + $0x48] sm:$0xff] %v6858
        %6907 = vst [vmem:[#allocation8 + $0x50] sm:$0xff] %v6859
        %6908 = vst [vmem:[#allocation8 + $0x58] sm:$0xff] %v6860
        %6909 = vst [vmem:[#allocation8 + $0x60] sm:$0xff] %v6861
        %6910 = vst [vmem:[#allocation8 + $0x68] sm:$0xff] %v6862
        %6911 = vst [vmem:[#allocation8 + $0x70] sm:$0xff] %v6863
        %6912 = vst [vmem:[#allocation8 + $0x78] sm:$0xff] %v6864
        %6913 = vst [vmem:[#allocation8 + $0x80] sm:$0xff] %v6865
        %6914 = vst [vmem:[#allocation8 + $0x88] sm:$0xff] %v6866
        %6915 = vst [vmem:[#allocation8 + $0x90] sm:$0xff] %v6867
        %6916 = vst [vmem:[#allocation8 + $0x98] sm:$0xff] %v6868
        %6917 = vst [vmem:[#allocation8 + $0xa0] sm:$0xff] %v6869
        %6918 = vst [vmem:[#allocation8 + $0xa8] sm:$0xff] %v6870
        %6919 = vst [vmem:[#allocation8 + $0xb0] sm:$0xff] %v6871
        %6920 = vst [vmem:[#allocation8 + $0xb8] sm:$0xff] %v6872
        %6921 = vst [vmem:[#allocation8 + $0xc0] sm:$0xff] %v6873
        %6922 = vst [vmem:[#allocation8 + $0xc8] sm:$0xff] %v6874
        %6923 = vst [vmem:[#allocation8 + $0xd0] sm:$0xff] %v6875
        %6924 = vst [vmem:[#allocation8 + $0xd8] sm:$0xff] %v6876
        %6925 = vst [vmem:[#allocation8 + $0xe0] sm:$0xff] %v6877
        %6926 = vst [vmem:[#allocation8 + $0xe8] sm:$0xff] %v6878
        %6927 = vst [vmem:[#allocation8 + $0xf0] sm:$0xff] %v6879
        %6928 = vst [vmem:[#allocation8 + $0xf8] sm:$0xff] %v6880
        %6929 = vst [vmem:[#allocation8 + $0x100] sm:$0xff] %v6881
        %6930 = vst [vmem:[#allocation8 + $0x108] sm:$0xff] %v6882
        %6931 = vst [vmem:[#allocation8 + $0x110] sm:$0xff] %v6883
        %6932 = vst [vmem:[#allocation8 + $0x118] sm:$0xff] %v6884
        %6933 = vst [vmem:[#allocation8 + $0x120] sm:$0xff] %v6885
        %6934 = vst [vmem:[#allocation8 + $0x128] sm:$0xff] %v6886
        %6935 = vst [vmem:[#allocation8 + $0x130] sm:$0xff] %v6887
        %6936 = vst [vmem:[#allocation8 + $0x138] sm:$0xff] %v6888
        %6937 = vst [vmem:[#allocation8 + $0x140] sm:$0xff] %v6889
        %6938 = vst [vmem:[#allocation8 + $0x148] sm:$0xff] %v6890
        %6939 = vst [vmem:[#allocation8 + $0x150] sm:$0xff] %v6891
        %6940 = vst [vmem:[#allocation8 + $0x158] sm:$0xff] %v6892
        %6941 = vst [vmem:[#allocation8 + $0x160] sm:$0xff] %v6893
        %6942 = vst [vmem:[#allocation8 + $0x168] sm:$0xff] %v6894
        %6943 = vst [vmem:[#allocation8 + $0x170] sm:$0xff] %v6895
        %6944 = vst [vmem:[#allocation8 + $0x178] sm:$0xff] %v6896
        %p6945 = scmp.eq.s32.totalorder %s26, 2
        // Predicated region
        $region49: #{tpu_custom_call.1} parent=31 // pred_check
          %p6946 = pneg %p6945
        $region50: #{tpu_custom_call.1} parent=31 // pred_check_branch
          %6948 = sbr.rel (%p6946) target = $region52
        $region51: #{tpu_custom_call.1} parent=31 // pred_region
          %v6949 = vld [vmem:[#allocation8] sm:$0xff]
          %v6950 = vld [vmem:[#allocation8 + $0x8] sm:$0xff]
          %v6951 = vld [vmem:[#allocation8 + $0x10] sm:$0xff]
          %v6952 = vld [vmem:[#allocation8 + $0x18] sm:$0xff]
          %v6953 = vld [vmem:[#allocation8 + $0x20] sm:$0xff]
          %v6954 = vld [vmem:[#allocation8 + $0x28] sm:$0xff]
          %v6955 = vld [vmem:[#allocation8 + $0x30] sm:$0xff]
          %v6956 = vld [vmem:[#allocation8 + $0x38] sm:$0xff]
          %v6957 = vld [vmem:[#allocation8 + $0x40] sm:$0xff]
          %v6958 = vld [vmem:[#allocation8 + $0x48] sm:$0xff]
          %v6959 = vld [vmem:[#allocation8 + $0x50] sm:$0xff]
          %v6960 = vld [vmem:[#allocation8 + $0x58] sm:$0xff]
          %v6961 = vld [vmem:[#allocation8 + $0x60] sm:$0xff]
          %v6962 = vld [vmem:[#allocation8 + $0x68] sm:$0xff]
          %v6963 = vld [vmem:[#allocation8 + $0x70] sm:$0xff]
          %v6964 = vld [vmem:[#allocation8 + $0x78] sm:$0xff]
          %v6965 = vld [vmem:[#allocation8 + $0x80] sm:$0xff]
          %v6966 = vld [vmem:[#allocation8 + $0x88] sm:$0xff]
          %v6967 = vld [vmem:[#allocation8 + $0x90] sm:$0xff]
          %v6968 = vld [vmem:[#allocation8 + $0x98] sm:$0xff]
          %v6969 = vld [vmem:[#allocation8 + $0xa0] sm:$0xff]
          %v6970 = vld [vmem:[#allocation8 + $0xa8] sm:$0xff]
          %v6971 = vld [vmem:[#allocation8 + $0xb0] sm:$0xff]
          %v6972 = vld [vmem:[#allocation8 + $0xb8] sm:$0xff]
          %v6973 = vld [vmem:[#allocation8 + $0xc0] sm:$0xff]
          %v6974 = vld [vmem:[#allocation8 + $0xc8] sm:$0xff]
          %v6975 = vld [vmem:[#allocation8 + $0xd0] sm:$0xff]
          %v6976 = vld [vmem:[#allocation8 + $0xd8] sm:$0xff]
          %v6977 = vld [vmem:[#allocation8 + $0xe0] sm:$0xff]
          %v6978 = vld [vmem:[#allocation8 + $0xe8] sm:$0xff]
          %v6979 = vld [vmem:[#allocation8 + $0xf0] sm:$0xff]
          %v6980 = vld [vmem:[#allocation8 + $0xf8] sm:$0xff]
          %v6981 = vld [vmem:[#allocation8 + $0x100] sm:$0xff]
          %v6982 = vld [vmem:[#allocation8 + $0x108] sm:$0xff]
          %v6983 = vld [vmem:[#allocation8 + $0x110] sm:$0xff]
          %v6984 = vld [vmem:[#allocation8 + $0x118] sm:$0xff]
          %v6985 = vld [vmem:[#allocation8 + $0x120] sm:$0xff]
          %v6986 = vld [vmem:[#allocation8 + $0x128] sm:$0xff]
          %v6987 = vld [vmem:[#allocation8 + $0x130] sm:$0xff]
          %v6988 = vld [vmem:[#allocation8 + $0x138] sm:$0xff]
          %v6989 = vld [vmem:[#allocation8 + $0x140] sm:$0xff]
          %v6990 = vld [vmem:[#allocation8 + $0x148] sm:$0xff]
          %v6991 = vld [vmem:[#allocation8 + $0x150] sm:$0xff]
          %v6992 = vld [vmem:[#allocation8 + $0x158] sm:$0xff]
          %v6993 = vld [vmem:[#allocation8 + $0x160] sm:$0xff]
          %v6994 = vld [vmem:[#allocation8 + $0x168] sm:$0xff]
          %v6995 = vld [vmem:[#allocation8 + $0x170] sm:$0xff]
          %v6996 = vld [vmem:[#allocation8 + $0x178] sm:$0xff]
          %v6997 = vld [vmem:[#allocation7] sm:$0xff]
          %v6998 = vld [vmem:[#allocation7 + $0x8] sm:$0xf]
          %v7001 = vperm.slane %v6997, 0
          %v7002 = vperm.slane %v6997, 1
          %v7003 = vperm.slane %v6997, 2
          %v7004 = vperm.slane %v6997, 3
          %v7005 = vperm.slane %v6997, 4
          %v7006 = vperm.slane %v6997, 5
          %v7007 = vperm.slane %v6997, 6
          %v7008 = vperm.slane %v6997, 7
          %v7009 = vperm.slane %v6998, 0
          %v7010 = vperm.slane %v6998, 1
          %v7011 = vperm.slane %v6998, 2
          %v7012 = vperm.slane %v6998, 3
          %v7025 = vadd.f32 %v6949, %v7001
          %v7026 = vadd.f32 %v6950, %v7002
          %v7027 = vadd.f32 %v6951, %v7003
          %v7028 = vadd.f32 %v6952, %v7004
          %v7029 = vadd.f32 %v6953, %v7005
          %v7030 = vadd.f32 %v6954, %v7006
          %v7031 = vadd.f32 %v6955, %v7007
          %v7032 = vadd.f32 %v6956, %v7008
          %v7033 = vadd.f32 %v6957, %v7009
          %v7034 = vadd.f32 %v6958, %v7010
          %v7035 = vadd.f32 %v6959, %v7011
          %v7036 = vadd.f32 %v6960, %v7012
          %v7037 = vadd.f32 %v6961, %v7001
          %v7038 = vadd.f32 %v6962, %v7002
          %v7039 = vadd.f32 %v6963, %v7003
          %v7040 = vadd.f32 %v6964, %v7004
          %v7041 = vadd.f32 %v6965, %v7005
          %v7042 = vadd.f32 %v6966, %v7006
          %v7043 = vadd.f32 %v6967, %v7007
          %v7044 = vadd.f32 %v6968, %v7008
          %v7045 = vadd.f32 %v6969, %v7009
          %v7046 = vadd.f32 %v6970, %v7010
          %v7047 = vadd.f32 %v6971, %v7011
          %v7048 = vadd.f32 %v6972, %v7012
          %v7049 = vadd.f32 %v6973, %v7001
          %v7050 = vadd.f32 %v6974, %v7002
          %v7051 = vadd.f32 %v6975, %v7003
          %v7052 = vadd.f32 %v6976, %v7004
          %v7053 = vadd.f32 %v6977, %v7005
          %v7054 = vadd.f32 %v6978, %v7006
          %v7055 = vadd.f32 %v6979, %v7007
          %v7056 = vadd.f32 %v6980, %v7008
          %v7057 = vadd.f32 %v6981, %v7009
          %v7058 = vadd.f32 %v6982, %v7010
          %v7059 = vadd.f32 %v6983, %v7011
          %v7060 = vadd.f32 %v6984, %v7012
          %v7061 = vadd.f32 %v6985, %v7001
          %v7062 = vadd.f32 %v6986, %v7002
          %v7063 = vadd.f32 %v6987, %v7003
          %v7064 = vadd.f32 %v6988, %v7004
          %v7065 = vadd.f32 %v6989, %v7005
          %v7066 = vadd.f32 %v6990, %v7006
          %v7067 = vadd.f32 %v6991, %v7007
          %v7068 = vadd.f32 %v6992, %v7008
          %v7069 = vadd.f32 %v6993, %v7009
          %v7070 = vadd.f32 %v6994, %v7010
          %v7071 = vadd.f32 %v6995, %v7011
          %v7072 = vadd.f32 %v6996, %v7012
          %7073 = vst [vmem:[#allocation8] sm:$0xff] %v7025
          %7074 = vst [vmem:[#allocation8 + $0x8] sm:$0xff] %v7026
          %7075 = vst [vmem:[#allocation8 + $0x10] sm:$0xff] %v7027
          %7076 = vst [vmem:[#allocation8 + $0x18] sm:$0xff] %v7028
          %7077 = vst [vmem:[#allocation8 + $0x20] sm:$0xff] %v7029
          %7078 = vst [vmem:[#allocation8 + $0x28] sm:$0xff] %v7030
          %7079 = vst [vmem:[#allocation8 + $0x30] sm:$0xff] %v7031
          %7080 = vst [vmem:[#allocation8 + $0x38] sm:$0xff] %v7032
          %7081 = vst [vmem:[#allocation8 + $0x40] sm:$0xff] %v7033
          %7082 = vst [vmem:[#allocation8 + $0x48] sm:$0xff] %v7034
          %7083 = vst [vmem:[#allocation8 + $0x50] sm:$0xff] %v7035
          %7084 = vst [vmem:[#allocation8 + $0x58] sm:$0xff] %v7036
          %7085 = vst [vmem:[#allocation8 + $0x60] sm:$0xff] %v7037
          %7086 = vst [vmem:[#allocation8 + $0x68] sm:$0xff] %v7038
          %7087 = vst [vmem:[#allocation8 + $0x70] sm:$0xff] %v7039
          %7088 = vst [vmem:[#allocation8 + $0x78] sm:$0xff] %v7040
          %7089 = vst [vmem:[#allocation8 + $0x80] sm:$0xff] %v7041
          %7090 = vst [vmem:[#allocation8 + $0x88] sm:$0xff] %v7042
          %7091 = vst [vmem:[#allocation8 + $0x90] sm:$0xff] %v7043
          %7092 = vst [vmem:[#allocation8 + $0x98] sm:$0xff] %v7044
          %7093 = vst [vmem:[#allocation8 + $0xa0] sm:$0xff] %v7045
          %7094 = vst [vmem:[#allocation8 + $0xa8] sm:$0xff] %v7046
          %7095 = vst [vmem:[#allocation8 + $0xb0] sm:$0xff] %v7047
          %7096 = vst [vmem:[#allocation8 + $0xb8] sm:$0xff] %v7048
          %7097 = vst [vmem:[#allocation8 + $0xc0] sm:$0xff] %v7049
          %7098 = vst [vmem:[#allocation8 + $0xc8] sm:$0xff] %v7050
          %7099 = vst [vmem:[#allocation8 + $0xd0] sm:$0xff] %v7051
          %7100 = vst [vmem:[#allocation8 + $0xd8] sm:$0xff] %v7052
          %7101 = vst [vmem:[#allocation8 + $0xe0] sm:$0xff] %v7053
          %7102 = vst [vmem:[#allocation8 + $0xe8] sm:$0xff] %v7054
          %7103 = vst [vmem:[#allocation8 + $0xf0] sm:$0xff] %v7055
          %7104 = vst [vmem:[#allocation8 + $0xf8] sm:$0xff] %v7056
          %7105 = vst [vmem:[#allocation8 + $0x100] sm:$0xff] %v7057
          %7106 = vst [vmem:[#allocation8 + $0x108] sm:$0xff] %v7058
          %7107 = vst [vmem:[#allocation8 + $0x110] sm:$0xff] %v7059
          %7108 = vst [vmem:[#allocation8 + $0x118] sm:$0xff] %v7060
          %7109 = vst [vmem:[#allocation8 + $0x120] sm:$0xff] %v7061
          %7110 = vst [vmem:[#allocation8 + $0x128] sm:$0xff] %v7062
          %7111 = vst [vmem:[#allocation8 + $0x130] sm:$0xff] %v7063
          %7112 = vst [vmem:[#allocation8 + $0x138] sm:$0xff] %v7064
          %7113 = vst [vmem:[#allocation8 + $0x140] sm:$0xff] %v7065
          %7114 = vst [vmem:[#allocation8 + $0x148] sm:$0xff] %v7066
          %7115 = vst [vmem:[#allocation8 + $0x150] sm:$0xff] %v7067
          %7116 = vst [vmem:[#allocation8 + $0x158] sm:$0xff] %v7068
          %7117 = vst [vmem:[#allocation8 + $0x160] sm:$0xff] %v7069
          %7118 = vst [vmem:[#allocation8 + $0x168] sm:$0xff] %v7070
          %7119 = vst [vmem:[#allocation8 + $0x170] sm:$0xff] %v7071
          %7120 = vst [vmem:[#allocation8 + $0x178] sm:$0xff] %v7072
        $region52: #{tpu_custom_call.1} parent=31 // pred_fallthru
          _
        // Predicated region
        $region53: #{tpu_custom_call.1} parent=31 // pred_check
          %p7121 = pneg %p131
        $region54: #{tpu_custom_call.1} parent=31 // pred_check_branch
          %7123 = sbr.rel (%p7121) target = $region56
        $region55: #{tpu_custom_call.1} parent=31 // pred_region
          %s7124 = smul.u32 12, %s25
          %7126 = vsyncadd [#allocation4], 0
          %s7127 = smul.addr %s7124, 8
          %s7128 = scalar_lea.hbm %s3, %s7127
          %s7129 = sshll.u32 [#allocation8], 4
          %s7130 = int_to_ptr.vmem [resolvable:$true] %s7129
          %s7131 = sshll.u32 %s7128, 4
          %s7132 = int_to_ptr.hbm [resolvable:$true] %s7131
          %7137 = dma.vmem_to_hbm [thread:$0]  %s7130, 6144, %s7132, [#allocation4], 1536, 1536, 96
        $region56: #{tpu_custom_call.1} parent=31 // pred_fallthru
          _
        // Predicated region
        $region57: #{tpu_custom_call.1} parent=31 // pred_check
          %p7138 = pneg %p131
        $region58: #{tpu_custom_call.1} parent=31 // pred_check_branch
          %7140 = sbr.rel (%p7138) target = $region60
        $region59: #{tpu_custom_call.1} parent=31 // pred_region
          %7142 = dma.done [#allocation4], 6144
        $region60: #{tpu_custom_call.1} parent=31 // pred_fallthru
          _
      $region32: #{tpu_custom_call.1} parent=5 // pred_fallthru
        _
      %p7143 = scmp.le.s32.totalorder 2, %s16
      // Predicated region
      $region61: #{tpu_custom_call.1} parent=5 // pred_check
        %p7144 = pneg %p7143
      $region62: #{tpu_custom_call.1} parent=5 // pred_check_branch
        %7146 = sbr.rel (%p7144) target = $region64
      $region63: #{tpu_custom_call.1} parent=5 // pred_region
        %s7147 = ssub.s32 %s16, 2
      $region64: #{tpu_custom_call.1} parent=5 // pred_fallthru
        _
    $region6: #{tpu_custom_call.1} parent=1 // loop_footer
      %s20 = sadd.s32 1, %s16
    $region7: #{tpu_custom_call.1} parent=1 // loop_footer_branch
      %15 = sbr.rel target = $region3
    $region8: #{tpu_custom_call.1} parent=1 // loop_exit
      _
    %7148 = vsyncpa [#allocation3], 1
    %s7149 = scalar_lea.sflag [#allocation3], 1
    %7150 = vsyncpa %s7149, 1
    %7151 = vsyncpa [#allocation6], 1
    %s7152 = scalar_lea.sflag [#allocation6], 1
    %7153 = vsyncpa %s7152, 1
    %7154 = vsyncpa [#allocation4], 1
    %s7155 = scalar_lea.sflag [#allocation4], 1
    %7156 = vsyncpa %s7155, 1

</llo_original>
